<compile_context>
chip_gen: v5e
topology: v5e:2x2
jax: 0.10.0
libtpu: 0.0.40
codegen_flags: <defaults>
</compile_context>

<pallas_src>
import math

import jax
import jax.numpy as jnp
from jax import lax
from jax.experimental import pallas as pl
from jax.experimental.pallas import tpu as pltpu

# ---- raymarcher configuration (module defaults used by the renderer) --------
SURFACE_THICKNESS = 1
BG_COLOR = 0.0                      # bg_color = (0.0,)
BACKGROUND_OPACITY = 1.0e10
BACKGROUND_DENSITY_BIAS = 0.0       # must stay 0.0 for the ||dir|| folding below
DENSITY_RELU = True
BLEND_OUTPUT = False                # MultipassEmissionAbsorpsionRenderer default
# capping_function='exponential', weight_function='product', hard_background=False


def _round_up(x, m):
    return (x + m - 1) // m * m


# ---- lane-axis shift helpers -------------------------------------------------
def _shift_right(x, s, fill, lane, use_roll):
    """out[..., i] = fill for i < s else x[..., i - s]."""
    if use_roll:
        return jnp.where(lane < s, jnp.float32(fill), pltpu.roll(x, s, x.ndim - 1))
    pad = jnp.full(x.shape[:-1] + (s,), fill, x.dtype)
    return jnp.concatenate([pad, x[..., : x.shape[-1] - s]], axis=-1)


def _shift_left1(x, use_roll):
    """out[..., i] = x[..., i + 1]; last lane is don't-care (masked by caller)."""
    P = x.shape[-1]
    if use_roll:
        return pltpu.roll(x, P - 1, x.ndim - 1)
    return jnp.concatenate([x[..., 1:], x[..., -1:]], axis=-1)


# ---- Pallas kernel: EmissionAbsorption raymarcher ---------------------------
def _ea_raymarcher_kernel(dens_ref, feat_ref, lens_ref, tri_ref,
                          misc_ref, w_out_ref):
    dens = dens_ref[...]        # (TR, P)  rays_densities[..., 0] * ||ray_dir||
    lens = lens_ref[...]        # (TR, P)  ray_lengths
    tri = tri_ref[...]          # (P, P)   upper-triangular ones (prefix-sum matrix)
    TR, P = dens.shape
    F = feat_ref.shape[0]
    use_roll = (P % 128 == 0)   # roll fast path for lane-dense P; concat fallback

    # (1, P) lane index (single vreg); jnp.where broadcasts it over rows.
    lane = lax.broadcasted_iota(jnp.int32, (1, P), 1)

    # deltas = cat(lengths[1:] - lengths[:-1], background_opacity)
    # (||ray_directions|| is folded into the densities by the wrapper).
    lens_next = _shift_left1(lens, use_roll)
    deltas = jnp.where(lane == P - 1, jnp.float32(BACKGROUND_OPACITY),
                       lens_next - lens)                                     # (TR, P)

    d = dens
    if DENSITY_RELU:
        # relu(d) * ||dir|| == relu(d * ||dir||) since ||dir|| >= 0 and
        # BACKGROUND_DENSITY_BIAS == 0 (a nonzero bias must be added post-scale).
        d = jnp.maximum(d, 0.0)
    weighted = deltas * d                                                    # (TR, P)

    # Inclusive lane prefix sum on the (otherwise idle) MXU:
    #   cum[r, j] = sum_{i <= j} weighted[r, i]
    # Must stay f32 (HIGHEST precision): `weighted` spans tiny deltas up to ~1e10.
    cum = jnp.dot(weighted, tri,
                  precision=lax.Precision.HIGHEST,
                  preferred_element_type=jnp.float32)                        # (TR, P)

    trans = jnp.exp(-cum)            # single EUP pass; trans == 1 - rays_opacities
    opac = 1.0 - trans[:, P - 1:P]                                           # (TR, 1)

    # absorption_shifted = roll(1 - rays_opacities, S); first S lanes := 1.0
    trans_prev = _shift_right(trans, SURFACE_THICKNESS, 1.0, lane, use_roll)
    if SURFACE_THICKNESS == 1:
        # (1 - exp(-w_i)) * exp(-cum_{i-1}) == exp(-cum_{i-1}) - exp(-cum_i):
        # exact for capping='exponential', weight='product', thickness=1,
        # and drops one full (TR, P) exp.
        weights = trans_prev - trans
    else:
        weights = (1.0 - jnp.exp(-weighted)) * trans_prev

    depth = jnp.sum(weights * lens, axis=-1, keepdims=True)                  # (TR, 1)

    # Weighted feature reduce over lane-dense (TR, P) planes (no sublane padding).
    sums = [jnp.sum(weights * feat_ref[f], axis=-1, keepdims=True)
            for f in range(F)]
    feat = jnp.concatenate(sums, axis=-1)                                    # (TR, F)

    # hard_background = False branch
    alpha = opac if BLEND_OUTPUT else 1.0
    feat = alpha * feat + (1.0 - opac) * BG_COLOR

    w_out_ref[...] = weights
    # single combined small-output store: [features | depth | opacity]
    misc_ref[...] = jnp.concatenate([feat, depth, opac], axis=-1)


def ea_raymarch_pallas(dens_scaled, feats_fm, ray_lengths, *, tile_rays=1024):
    """dens_scaled: (R, P)  densities pre-scaled by ||ray_dir||;
       feats_fm:    (F, R, P) feature-major features (P on lanes);
       ray_lengths: (R, P).  All float32."""
    R, P = dens_scaled.shape
    F = feats_fm.shape[0]

    tr = max(8, _round_up(min(tile_rays, R), 8))
    # keep >= 2 grid steps so ("parallel",) can shard across v7x's two TensorCores
    if _round_up(R, tr) // tr < 2 and R > 8:
        tr = max(8, _round_up((R + 1) // 2, 8))
    R_pad = _round_up(R, tr)
    if R_pad != R:
        pad = R_pad - R
        dens_scaled = jnp.pad(dens_scaled, ((0, pad), (0, 0)))
        feats_fm = jnp.pad(feats_fm, ((0, 0), (0, pad), (0, 0)))
        ray_lengths = jnp.pad(ray_lengths, ((0, pad), (0, 0)))

    # Constant (P, P) upper-triangular ones matrix: inclusive lane prefix sum
    # becomes one MXU matmul.  Same block for every grid step -> DMA'd once.
    idx = jnp.arange(P, dtype=jnp.int32)
    tri = (idx[:, None] <= idx[None, :]).astype(jnp.float32)

    grid = (R_pad // tr,)
    out_shape = (
        jax.ShapeDtypeStruct((R_pad, F + 2), jnp.float32),   # [feat | depth | opac]
        jax.ShapeDtypeStruct((R_pad, P), jnp.float32),       # weights
    )
    in_specs = [
        pl.BlockSpec((tr, P), lambda i: (i, 0)),             # densities * ||dir||
        pl.BlockSpec((F, tr, P), lambda i: (0, i, 0)),        # feature-major planes
        pl.BlockSpec((tr, P), lambda i: (i, 0)),              # ray lengths
        pl.BlockSpec((P, P), lambda i: (0, 0)),               # prefix-sum matrix
    ]
    out_specs = (
        pl.BlockSpec((tr, F + 2), lambda i: (i, 0)),
        pl.BlockSpec((tr, P), lambda i: (i, 0)),
    )
    # Per-buffer bytes ~ tr*P*4*(3 + F); at tr=1024, F=4 double-buffered usage is
    # well under 32 MiB on every generation (v7x scoped default is already 32 MiB).
    misc, weights = pl.pallas_call(
        _ea_raymarcher_kernel,
        out_shape=out_shape,
        grid=grid,
        in_specs=in_specs,
        out_specs=out_specs,
        compiler_params=pltpu.CompilerParams(
            dimension_semantics=("parallel",),
            vmem_limit_bytes=32 * 1024 * 1024),
    )(dens_scaled, feats_fm, ray_lengths, tri)

    feats = misc[:R, 0:F]
    depth = misc[:R, F:F + 1]
    opac = misc[:R, F + 1:F + 2]
    return feats, depth, opac, weights[:R]


# ---- renderer wrapper (mirrors MultipassEmissionAbsorpsionRenderer.forward) -
def multipass_ea_renderer_forward(origins, directions, lengths, xys, bg_color,
                                  *, implicit_functions,
                                  evaluation_mode="evaluation"):
    if not implicit_functions:
        raise ValueError("EA renderer expects implicit functions")
    # density_noise_std is 0.0 in evaluation mode (density_noise_std_train
    # defaults to 0.0 anyway), so no noise is added.
    impl_out = implicit_functions[0](origins, directions, lengths)
    rays_densities = impl_out["rays_densities"]     # (..., P, 1)
    aux = dict(impl_out.get("aux", {}))

    lead = lengths.shape[:-1]
    P = lengths.shape[-1]
    R = math.prod(lead)

    # Fold ||ray_directions|| into the densities: valid because density_relu is
    # applied to a non-negatively scaled value and BACKGROUND_DENSITY_BIAS == 0.
    # This fuses into the implicit-function epilogue and removes a strided
    # (tr, 3) kernel input plus the in-kernel sqrt.
    dir_norm = jnp.linalg.norm(directions.reshape(R, 3).astype(jnp.float32),
                               axis=-1, keepdims=True)                 # (R, 1)
    dens = rays_densities.reshape(R, P).astype(jnp.float32) * dir_norm

    if "rays_features_fm" in impl_out:
        # Fast path: implicit function emits feature-major (F, ..., P) directly,
        # so no standalone HBM transpose pass is needed before the kernel.
        rf_fm = impl_out["rays_features_fm"]
        F = rf_fm.shape[0]
        feats_fm = rf_fm.reshape(F, R, P).astype(jnp.float32)
    else:
        # TODO(synk): this standalone transpose is a full extra HBM read+write of
        # the features array; prefer implicit functions emitting (F, ..., P).
        rf = impl_out["rays_features"]                                 # (..., P, F)
        F = rf.shape[-1]
        feats_fm = jnp.transpose(rf.reshape(R, P, F), (2, 0, 1)).astype(jnp.float32)

    # TODO(synk): an externally supplied bg_color tensor override is not wired
    # through; the registered-buffer default bg_color=(0.0,) path is used.
    feats, depths, opac, weights = ea_raymarch_pallas(
        dens, feats_fm, lengths.reshape(R, P).astype(jnp.float32))

    features = feats.reshape(*lead, F)
    depths = depths.reshape(*lead, 1)
    alpha_masks = opac.reshape(*lead, 1)
    weights = weights.reshape(*lead, P)
    aux["weights"] = weights

    # TODO(synk): RayPointRefiner (importance re-sampling when more than one
    # implicit function is given) is not part of the provided reference code;
    # only the single-pass path is implemented here.
    return {
        "features": features,
        "depths": depths,
        "alpha_masks": alpha_masks,
        "aux": aux,
        "prev_stage": None,
    }


# ---- deterministic synthetic implicit function (plain-JAX glue) -------------
def make_synthetic_implicit_function(feature_dim, key):
    k1, k2 = jax.random.split(key)
    w_d = jax.random.normal(k1, (3, 1), jnp.float32) * 0.5
    w_f = jax.random.normal(k2, (3, feature_dim), jnp.float32) * 0.5

    def fn(origins, directions, lengths):
        pts = origins[..., None, :] + directions[..., None, :] * lengths[..., :, None]
        rays_densities = jax.nn.softplus(pts @ w_d)            # (..., P, 1)
        # Feature-major (F, ..., P): the contraction writes this layout directly,
        # avoiding a standalone transpose pass over the features array.
        rays_features_fm = jax.nn.sigmoid(
            jnp.tensordot(w_f, pts, axes=((0,), (pts.ndim - 1,))))   # (F, ..., P)
        return {"rays_densities": rays_densities,
                "rays_features_fm": rays_features_fm,
                "aux": {}}

    return fn


# ---- pure-JAX reference (literal port of the torch raymarcher) --------------
def ea_raymarch_ref(rays_densities, rays_features, ray_lengths, ray_directions):
    deltas = jnp.concatenate(
        [ray_lengths[..., 1:] - ray_lengths[..., :-1],
         BACKGROUND_OPACITY * jnp.ones_like(ray_lengths[..., :1])], axis=-1)
    deltas = deltas * jnp.linalg.norm(ray_directions, axis=-1)[..., None]
    d = rays_densities[..., 0]
    if DENSITY_RELU:
        d = jax.nn.relu(d) + BACKGROUND_DENSITY_BIAS
    weighted = deltas * d
    capped = 1.0 - jnp.exp(-weighted)
    rays_opac = 1.0 - jnp.exp(-jnp.cumsum(weighted, axis=-1))
    opac = rays_opac[..., -1:]
    absorption = jnp.roll(1.0 - rays_opac, SURFACE_THICKNESS, axis=-1)
    absorption = absorption.at[..., :SURFACE_THICKNESS].set(1.0)
    weights = capped * absorption
    depths = jnp.sum(weights * ray_lengths, axis=-1, keepdims=True)
    feats = jnp.sum(weights[..., None] * rays_features, axis=-2)
    alpha = opac if BLEND_OUTPUT else 1.0
    feats = alpha * feats + (1.0 - opac) * BG_COLOR
    return feats, depths, opac, weights


if __name__ == "__main__":
    key = jax.random.PRNGKey(0)
    # P = 128 keeps the points-per-ray (lane) axis fully dense/unmasked.
    B, H, W, P, F = 2, 16, 16, 128, 4
    k_o, k_d, k_l, k_w = jax.random.split(key, 4)

    origins = jax.random.normal(k_o, (B, H, W, 3), dtype=jnp.float32)
    directions = jax.random.normal(k_d, (B, H, W, 3), dtype=jnp.float32)
    base = jnp.linspace(0.5, 4.0, P, dtype=jnp.float32)
    jitter = 0.01 * jax.random.uniform(k_l, (B, H, W, P), dtype=jnp.float32)
    lengths = base + jitter                                   # (B, H, W, P), increasing
    xys = jnp.zeros((B, H, W, 2), jnp.float32)

    impl_fn = make_synthetic_implicit_function(F, k_w)

    out = multipass_ea_renderer_forward(
        origins, directions, lengths, xys, None,
        implicit_functions=[impl_fn], evaluation_mode="evaluation")
    jax.block_until_ready(out["features"])

    # correctness check against the literal reference
    impl_out = impl_fn(origins, directions, lengths)
    rays_features_ref = jnp.moveaxis(impl_out["rays_features_fm"], 0, -1)  # (..., P, F)
    ref_feat, ref_depth, ref_opac, ref_w = ea_raymarch_ref(
        impl_out["rays_densities"], rays_features_ref, lengths, directions)

    assert out["features"].shape == (B, H, W, F)
    assert out["depths"].shape == (B, H, W, 1)
    assert out["alpha_masks"].shape == (B, H, W, 1)
    assert out["aux"]["weights"].shape == (B, H, W, P)
    assert jnp.allclose(out["features"], ref_feat, atol=1e-4, rtol=1e-4)
    assert jnp.allclose(out["depths"], ref_depth, atol=1e-4, rtol=1e-4)
    assert jnp.allclose(out["alpha_masks"], ref_opac, atol=1e-4, rtol=1e-4)
    assert jnp.allclose(out["aux"]["weights"], ref_w, atol=1e-4, rtol=1e-4)

    print("KERNEL_OK")
</pallas_src>

<mosaic_0001>
module attributes {stable_mosaic.version = 11 : i64} {
  func.func @_ea_raymarcher_kernel(%arg0: i32, %arg1: memref<256x128xf32, #tpu.memory_space<vmem>>, %arg2: memref<4x256x128xf32, #tpu.memory_space<vmem>>, %arg3: memref<256x128xf32, #tpu.memory_space<vmem>>, %arg4: memref<128x128xf32, #tpu.memory_space<vmem>>, %arg5: memref<256x6xf32, #tpu.memory_space<vmem>>, %arg6: memref<256x128xf32, #tpu.memory_space<vmem>>) attributes {dimension_semantics = [#tpu.dimension_semantics<parallel>], iteration_bounds = array<i64: 2>, scalar_prefetch = 0 : i64, scratch_operands = 0 : i64, tpu.core_type = #tpu.core_type<tc>, window_params = [{transform_indices = @transform_0, window_bounds = array<i64: 256, 128>}, {transform_indices = @transform_1, window_bounds = array<i64: 4, 256, 128>}, {transform_indices = @transform_2, window_bounds = array<i64: 256, 128>}, {pipeline_mode = #tpu.pipeline_mode<synchronous>, transform_indices = @transform_3, window_bounds = array<i64: 128, 128>}, {transform_indices = @transform_4, window_bounds = array<i64: 256, 6>}, {transform_indices = @transform_5, window_bounds = array<i64: 256, 128>}]} {
    %c0 = arith.constant 0 : index
    %c0_0 = arith.constant 0 : index
    %0 = vector.load %arg1[%c0, %c0_0] : memref<256x128xf32, #tpu.memory_space<vmem>>, vector<256x128xf32>
    %c0_1 = arith.constant 0 : index
    %c0_2 = arith.constant 0 : index
    %1 = vector.load %arg3[%c0_1, %c0_2] : memref<256x128xf32, #tpu.memory_space<vmem>>, vector<256x128xf32>
    %c0_3 = arith.constant 0 : index
    %c0_4 = arith.constant 0 : index
    %2 = vector.load %arg4[%c0_3, %c0_4] : memref<128x128xf32, #tpu.memory_space<vmem>>, vector<128x128xf32>
    %3 = tpu.iota {dimensions = array<i32: 1>} : vector<1x128xi32>
    %c127_i32 = arith.constant 127 : i32
    %4 = tpu.dynamic_rotate %1 by %c127_i32 dim 1 : vector<256x128xf32>, i32 -> vector<256x128xf32>
    %c127_i32_5 = arith.constant 127 : i32
    %5 = vector.broadcast %c127_i32_5 : i32 to vector<1x128xi32>
    %6 = arith.cmpi eq, %3, %5 : vector<1x128xi32>
    %7 = arith.subf %4, %1 : vector<256x128xf32>
    %cst = arith.constant 1.000000e+10 : f32
    %8 = vector.shape_cast %6 : vector<1x128xi1> to vector<1x128xi1>
    %9 = vector.broadcast %8 : vector<1x128xi1> to vector<256x128xi1>
    %10 = vector.broadcast %cst : f32 to vector<256x128xf32>
    %11 = arith.select %9, %10, %7 : vector<256x128xi1>, vector<256x128xf32>
    %cst_6 = arith.constant 0.000000e+00 : f32
    %12 = vector.broadcast %cst_6 : f32 to vector<256x128xf32>
    %13 = arith.maximumf %0, %12 : vector<256x128xf32>
    %14 = arith.mulf %11, %13 : vector<256x128xf32>
    %cst_7 = arith.constant dense<0.000000e+00> : vector<256x128xf32>
    %15 = tpu.matmul %14, %2, %cst_7 {dimension_numbers = #tpu.dot_dimension_numbers<[1], [0], [0], [1], [0, 0, 1, 1], [], []>, precision = #tpu.contract_precision<fp32>} : vector<256x128xf32>, vector<128x128xf32>, vector<256x128xf32> -> vector<256x128xf32>
    %cst_8 = arith.constant 0.000000e+00 : f32
    %16 = vector.broadcast %cst_8 : f32 to vector<256x128xf32>
    %17 = arith.subf %16, %15 : vector<256x128xf32>
    %18 = math.exp %17 : vector<256x128xf32>
    %19 = vector.extract_strided_slice %18 {offsets = [0, 127], sizes = [256, 1], strides = [1, 1]} : vector<256x128xf32> to vector<256x1xf32>
    %cst_9 = arith.constant 1.000000e+00 : f32
    %20 = vector.broadcast %cst_9 : f32 to vector<256x1xf32>
    %21 = arith.subf %20, %19 : vector<256x1xf32>
    %c1_i32 = arith.constant 1 : i32
    %22 = vector.broadcast %c1_i32 : i32 to vector<1x128xi32>
    %23 = arith.cmpi slt, %3, %22 : vector<1x128xi32>
    %c1_i32_10 = arith.constant 1 : i32
    %24 = tpu.dynamic_rotate %18 by %c1_i32_10 dim 1 : vector<256x128xf32>, i32 -> vector<256x128xf32>
    %cst_11 = arith.constant 1.000000e+00 : f32
    %25 = vector.shape_cast %23 : vector<1x128xi1> to vector<1x128xi1>
    %26 = vector.broadcast %25 : vector<1x128xi1> to vector<256x128xi1>
    %27 = vector.broadcast %cst_11 : f32 to vector<256x128xf32>
    %28 = arith.select %26, %27, %24 : vector<256x128xi1>, vector<256x128xf32>
    %29 = arith.subf %28, %18 : vector<256x128xf32>
    %30 = arith.mulf %29, %1 : vector<256x128xf32>
    %cst_12 = arith.constant dense<0.000000e+00> : vector<256xf32>
    %31 = vector.multi_reduction <add>, %30, %cst_12 [1] : vector<256x128xf32> to vector<256xf32>
    %32 = vector.shape_cast %31 : vector<256xf32> to vector<256x1xf32>
    %c0_13 = arith.constant 0 : index
    %c0_14 = arith.constant 0 : index
    %c0_15 = arith.constant 0 : index
    %33 = vector.load %arg2[%c0_13, %c0_14, %c0_15] : memref<4x256x128xf32, #tpu.memory_space<vmem>>, vector<1x256x128xf32>
    %34 = vector.shape_cast %33 : vector<1x256x128xf32> to vector<256x128xf32>
    %35 = arith.mulf %29, %34 : vector<256x128xf32>
    %cst_16 = arith.constant dense<0.000000e+00> : vector<256xf32>
    %36 = vector.multi_reduction <add>, %35, %cst_16 [1] : vector<256x128xf32> to vector<256xf32>
    %37 = vector.shape_cast %36 : vector<256xf32> to vector<256x1xf32>
    %c1 = arith.constant 1 : index
    %c0_17 = arith.constant 0 : index
    %c0_18 = arith.constant 0 : index
    %38 = vector.load %arg2[%c1, %c0_17, %c0_18] : memref<4x256x128xf32, #tpu.memory_space<vmem>>, vector<1x256x128xf32>
    %39 = vector.shape_cast %38 : vector<1x256x128xf32> to vector<256x128xf32>
    %40 = arith.mulf %29, %39 : vector<256x128xf32>
    %cst_19 = arith.constant dense<0.000000e+00> : vector<256xf32>
    %41 = vector.multi_reduction <add>, %40, %cst_19 [1] : vector<256x128xf32> to vector<256xf32>
    %42 = vector.shape_cast %41 : vector<256xf32> to vector<256x1xf32>
    %c2 = arith.constant 2 : index
    %c0_20 = arith.constant 0 : index
    %c0_21 = arith.constant 0 : index
    %43 = vector.load %arg2[%c2, %c0_20, %c0_21] : memref<4x256x128xf32, #tpu.memory_space<vmem>>, vector<1x256x128xf32>
    %44 = vector.shape_cast %43 : vector<1x256x128xf32> to vector<256x128xf32>
    %45 = arith.mulf %29, %44 : vector<256x128xf32>
    %cst_22 = arith.constant dense<0.000000e+00> : vector<256xf32>
    %46 = vector.multi_reduction <add>, %45, %cst_22 [1] : vector<256x128xf32> to vector<256xf32>
    %47 = vector.shape_cast %46 : vector<256xf32> to vector<256x1xf32>
    %c3 = arith.constant 3 : index
    %c0_23 = arith.constant 0 : index
    %c0_24 = arith.constant 0 : index
    %48 = vector.load %arg2[%c3, %c0_23, %c0_24] : memref<4x256x128xf32, #tpu.memory_space<vmem>>, vector<1x256x128xf32>
    %49 = vector.shape_cast %48 : vector<1x256x128xf32> to vector<256x128xf32>
    %50 = arith.mulf %29, %49 : vector<256x128xf32>
    %cst_25 = arith.constant dense<0.000000e+00> : vector<256xf32>
    %51 = vector.multi_reduction <add>, %50, %cst_25 [1] : vector<256x128xf32> to vector<256xf32>
    %52 = vector.shape_cast %51 : vector<256xf32> to vector<256x1xf32>
    %53 = tpu.concatenate %37, %42, %47, %52 in 1 : vector<256x1xf32>, vector<256x1xf32>, vector<256x1xf32>, vector<256x1xf32> -> vector<256x4xf32>
    %cst_26 = arith.constant 1.000000e+00 : f32
    %54 = vector.broadcast %cst_26 : f32 to vector<256x4xf32>
    %55 = arith.mulf %54, %53 : vector<256x4xf32>
    %cst_27 = arith.constant 1.000000e+00 : f32
    %56 = vector.broadcast %cst_27 : f32 to vector<256x1xf32>
    %57 = arith.subf %56, %21 : vector<256x1xf32>
    %cst_28 = arith.constant 0.000000e+00 : f32
    %58 = vector.broadcast %cst_28 : f32 to vector<256x1xf32>
    %59 = arith.mulf %57, %58 : vector<256x1xf32>
    %60 = vector.broadcast %59 : vector<256x1xf32> to vector<256x4xf32>
    %61 = arith.addf %55, %60 : vector<256x4xf32>
    %c0_29 = arith.constant 0 : index
    %c0_30 = arith.constant 0 : index
    %62 = vector.load %arg6[%c0_29, %c0_30] : memref<256x128xf32, #tpu.memory_space<vmem>>, vector<256x128xf32>
    tpu.vector_store %arg6[%c0_29, %c0_30], %29 {strides = array<i32>} : memref<256x128xf32, #tpu.memory_space<vmem>>, vector<256x128xf32>,
    %63 = tpu.concatenate %61, %32, %21 in 1 : vector<256x4xf32>, vector<256x1xf32>, vector<256x1xf32> -> vector<256x6xf32>
    %c0_31 = arith.constant 0 : index
    %c0_32 = arith.constant 0 : index
    %64 = vector.load %arg5[%c0_31, %c0_32] : memref<256x6xf32, #tpu.memory_space<vmem>>, vector<256x6xf32>
    tpu.vector_store %arg5[%c0_31, %c0_32], %63 {strides = array<i32>} : memref<256x6xf32, #tpu.memory_space<vmem>>, vector<256x6xf32>,
    return
  }
  func.func @transform_0(%arg0: i32) -> (i32, i32) {
    %c0_i32 = arith.constant 0 : i32
    %c0_i32_0 = arith.constant 0 : i32
    return %arg0, %c0_i32 : i32, i32
  }
  func.func @transform_1(%arg0: i32) -> (i32, i32, i32) {
    %c0_i32 = arith.constant 0 : i32
    %c0_i32_0 = arith.constant 0 : i32
    %c0_i32_1 = arith.constant 0 : i32
    return %c0_i32, %arg0, %c0_i32_0 : i32, i32, i32
  }
  func.func @transform_2(%arg0: i32) -> (i32, i32) {
    %c0_i32 = arith.constant 0 : i32
    %c0_i32_0 = arith.constant 0 : i32
    return %arg0, %c0_i32 : i32, i32
  }
  func.func @transform_3(%arg0: i32) -> (i32, i32) {
    %c0_i32 = arith.constant 0 : i32
    %c0_i32_0 = arith.constant 0 : i32
    %c0_i32_1 = arith.constant 0 : i32
    return %c0_i32, %c0_i32_0 : i32, i32
  }
  func.func @transform_4(%arg0: i32) -> (i32, i32) {
    %c0_i32 = arith.constant 0 : i32
    %c0_i32_0 = arith.constant 0 : i32
    return %arg0, %c0_i32 : i32, i32
  }
  func.func @transform_5(%arg0: i32) -> (i32, i32) {
    %c0_i32 = arith.constant 0 : i32
    %c0_i32_0 = arith.constant 0 : i32
    return %arg0, %c0_i32 : i32, i32
  }
}

</mosaic_0001>

<llo_original>
// kernel: tpu_custom_call.1
$region0: #{tpu_custom_call.1}
  #allocation0 [shape = 'u32[]', space=smem, size = 0x4, offset = 0x4, fixed_abs, tag = 'smem constant byte address 0x4 - core index']
  #allocation1 [shape = 'u32[72,128]{1,0:T(1,128)}', space=vmem, size = 0x9000, scoped, tag = 'internal scratch']
  #allocation11 [shape = 's32[]', space=sflag, size = 0x4, offset = 0, fixed_abs, tag = 'sflag constant byte address 0x0 - dummy sync flag']
  %s0 = inlined_call_operand.hbm [shape: f32[512,128], index: 0, kind: input, shape index: {}]
  %s1 = inlined_call_operand.hbm [shape: f32[4,512,128], index: 1, kind: input, shape index: {}]
  %s2 = inlined_call_operand.hbm [shape: f32[512,128], index: 2, kind: input, shape index: {}]
  %s3 = inlined_call_operand.hbm [shape: f32[128,128], index: 3, kind: input, shape index: {}]
  %s4 = inlined_call_operand.vmem [shape: f32[512,6], index: 4, kind: output, shape index: {0}]
  %s5 = inlined_call_operand.hbm [shape: f32[512,128], index: 5, kind: output, shape index: {1}]
  %6 = xla_tuple %s4, %s5
  %s7 = sld [smem:[#allocation0]]
  $region73: #{tpu_custom_call.1} parent=0
    _
  %s9 = ssub.s32 1, %s7
  %s10 = scalar_select 0, %s9, %s7
  $region1: #{tpu_custom_call.1} parent=0
    #allocation2 [shape = 'u8[262144]{0}', space=vmem, size = 0x40000, scoped, tag = 'input window, operand 0']
    #allocation3 [shape = 's32[2]{0}', space=sflag, size = 0x8, scoped, tag = 'scoped memory for tpu_custom_call.1']
    #allocation4 [shape = 's32[2]{0}', space=sflag, size = 0x8, scoped, tag = 'scoped memory for tpu_custom_call.1']
    #allocation5 [shape = 'u8[1048576]{0}', space=vmem, size = 0x100000, scoped, tag = 'input window, operand 1']
    #allocation6 [shape = 's32[2]{0}', space=sflag, size = 0x8, scoped, tag = 'scoped memory for tpu_custom_call.1']
    #allocation7 [shape = 'u8[262144]{0}', space=vmem, size = 0x40000, scoped, tag = 'input window, operand 2']
    #allocation8 [shape = 'u8[65536]{0}', space=vmem, size = 0x10000, scoped, tag = 'input window, operand 3, single buffered']
    #allocation9 [shape = 's32[1]{0}', space=sflag, size = 0x4, scoped, tag = 'scoped memory for tpu_custom_call.1']
    #allocation10 [shape = 'u8[262144]{0}', space=vmem, size = 0x40000, scoped, tag = 'output window, operand 1']
    %11 = vsyncpa [#allocation3], 0
    %s12 = scalar_lea.sflag [#allocation3], 1
    %13 = vsyncpa %s12, 0
    %14 = vsyncpa [#allocation6], 0
    %s15 = scalar_lea.sflag [#allocation6], 1
    %16 = vsyncpa %s15, 0
    %17 = vsyncpa [#allocation9], 0
    %18 = vsyncpa [#allocation4], 0
    %s19 = scalar_lea.sflag [#allocation4], 1
    %20 = vsyncpa %s19, 0
    loop: start=0, step=1, limit=4
    $region2: #{tpu_custom_call.1} parent=1 // loop_pre_header
      _
    $region3: #{tpu_custom_call.1} parent=1 // loop_header
      %s22 = sphi 0, %s26
      %p23 = scmp.ge.s32.totalorder %s22, 4
      %s32 = sphi 0, %s34
      %s35 = sphi 0, %s32
      %s36 = sphi 0, %s35
      %s52 = sphi 0, %s36
      %s58 = sphi 0, %s60
      %s61 = sphi 0, %s58
      %s62 = sphi 0, %s61
      %s78 = sphi 0, %s62
      %s84 = sphi 0, %s86
      %s87 = sphi 0, %s84
      %s88 = sphi 0, %s87
      %s104 = sphi 0, %s88
      %s108 = sphi 0, %s108
      %s110 = sphi 0, %s108
      %s111 = sphi 0, %s110
      %s125 = sphi 0, %s111
      %s131 = sphi 0, %s133
      %s134 = sphi 0, %s131
      %s135 = sphi 0, %s134
      %s151 = sphi 0, %s135
      %s157 = sphi 0, %s159
      %s160 = sphi 0, %s157
      %s161 = sphi 0, %s160
      %s177 = sphi 0, %s161
    $region4: #{tpu_custom_call.1} parent=1 // loop_header_branch
      %25 = sbr.rel (%p23) target = $region8
    $region5: #{tpu_custom_call.1} parent=1 // loop_body
      %s27 = ssub.s32 %s22, 1
      %s28 = ssub.s32 %s22, 2
      %s29 = sadd.s32 %s22, 1
      %s30 = ssub.s32 %s22, %s29
      %p31 = scmp.eq.s32.totalorder %s30, 0
      %s33 = sadd.s32 %s32, 1
      %s34 = scalar_select %p31, %s32, %s33
      %p37 = pneg %p31
      %p38 = scmp.eq.s32.totalorder %s22, 1
      %p39 = por %p37, %p38
      %p40 = scmp.ne.s32.totalorder %s32, %s35
      %p41 = scmp.eq.s32.totalorder %s22, 0
      %p42 = por %p40, %p41
      %p43 = scmp.ne.s32.totalorder %s32, %s35
      %p44 = scmp.eq.s32.totalorder %s27, 1
      %p45 = por %p43, %p44
      %p46 = scmp.ne.s32.totalorder %s35, %s36
      %p47 = scmp.eq.s32.totalorder %s27, 0
      %p48 = por %p46, %p47
      %p49 = scmp.ne.s32.totalorder %s35, %s36
      %p50 = scmp.eq.s32.totalorder %s28, 1
      %p51 = por %p49, %p50
      %p53 = scmp.ne.s32.totalorder %s36, %s52
      %p54 = scmp.eq.s32.totalorder %s28, 0
      %p55 = por %p53, %p54
      %s56 = ssub.s32 %s22, %s29
      %p57 = scmp.eq.s32.totalorder %s56, 0
      %s59 = sadd.s32 %s58, 1
      %s60 = scalar_select %p57, %s58, %s59
      %p63 = pneg %p57
      %p64 = scmp.eq.s32.totalorder %s22, 1
      %p65 = por %p63, %p64
      %p66 = scmp.ne.s32.totalorder %s58, %s61
      %p67 = scmp.eq.s32.totalorder %s22, 0
      %p68 = por %p66, %p67
      %p69 = scmp.ne.s32.totalorder %s58, %s61
      %p70 = scmp.eq.s32.totalorder %s27, 1
      %p71 = por %p69, %p70
      %p72 = scmp.ne.s32.totalorder %s61, %s62
      %p73 = scmp.eq.s32.totalorder %s27, 0
      %p74 = por %p72, %p73
      %p75 = scmp.ne.s32.totalorder %s61, %s62
      %p76 = scmp.eq.s32.totalorder %s28, 1
      %p77 = por %p75, %p76
      %p79 = scmp.ne.s32.totalorder %s62, %s78
      %p80 = scmp.eq.s32.totalorder %s28, 0
      %p81 = por %p79, %p80
      %s82 = ssub.s32 %s22, %s29
      %p83 = scmp.eq.s32.totalorder %s82, 0
      %s85 = sadd.s32 %s84, 1
      %s86 = scalar_select %p83, %s84, %s85
      %p89 = pneg %p83
      %p90 = scmp.eq.s32.totalorder %s22, 1
      %p91 = por %p89, %p90
      %p92 = scmp.ne.s32.totalorder %s84, %s87
      %p93 = scmp.eq.s32.totalorder %s22, 0
      %p94 = por %p92, %p93
      %p95 = scmp.ne.s32.totalorder %s84, %s87
      %p96 = scmp.eq.s32.totalorder %s27, 1
      %p97 = por %p95, %p96
      %p98 = scmp.ne.s32.totalorder %s87, %s88
      %p99 = scmp.eq.s32.totalorder %s27, 0
      %p100 = por %p98, %p99
      %p101 = scmp.ne.s32.totalorder %s87, %s88
      %p102 = scmp.eq.s32.totalorder %s28, 1
      %p103 = por %p101, %p102
      %p105 = scmp.ne.s32.totalorder %s88, %s104
      %p106 = scmp.eq.s32.totalorder %s28, 0
      %p107 = por %p105, %p106
      %s109 = sadd.s32 %s108, 1
      %p112 = scmp.eq.s32.totalorder %s22, 1
      %p113 = scmp.ne.s32.totalorder %s108, %s110
      %p114 = scmp.eq.s32.totalorder %s22, 0
      %p115 = por %p113, %p114
      %p116 = scmp.ne.s32.totalorder %s108, %s110
      %p117 = scmp.eq.s32.totalorder %s27, 1
      %p118 = por %p116, %p117
      %p119 = scmp.ne.s32.totalorder %s110, %s111
      %p120 = scmp.eq.s32.totalorder %s27, 0
      %p121 = por %p119, %p120
      %p122 = scmp.ne.s32.totalorder %s110, %s111
      %p123 = scmp.eq.s32.totalorder %s28, 1
      %p124 = por %p122, %p123
      %p126 = scmp.ne.s32.totalorder %s111, %s125
      %p127 = scmp.eq.s32.totalorder %s28, 0
      %p128 = por %p126, %p127
      %s129 = ssub.s32 %s22, %s29
      %p130 = scmp.eq.s32.totalorder %s129, 0
      %s132 = sadd.s32 %s131, 1
      %s133 = scalar_select %p130, %s131, %s132
      %p136 = pneg %p130
      %p137 = scmp.eq.s32.totalorder %s22, 1
      %p138 = por %p136, %p137
      %p139 = scmp.ne.s32.totalorder %s131, %s134
      %p140 = scmp.eq.s32.totalorder %s22, 0
      %p141 = por %p139, %p140
      %p142 = scmp.ne.s32.totalorder %s131, %s134
      %p143 = scmp.eq.s32.totalorder %s27, 1
      %p144 = por %p142, %p143
      %p145 = scmp.ne.s32.totalorder %s134, %s135
      %p146 = scmp.eq.s32.totalorder %s27, 0
      %p147 = por %p145, %p146
      %p148 = scmp.ne.s32.totalorder %s134, %s135
      %p149 = scmp.eq.s32.totalorder %s28, 1
      %p150 = por %p148, %p149
      %p152 = scmp.ne.s32.totalorder %s135, %s151
      %p153 = scmp.eq.s32.totalorder %s28, 0
      %p154 = por %p152, %p153
      %s155 = ssub.s32 %s22, %s29
      %p156 = scmp.eq.s32.totalorder %s155, 0
      %s158 = sadd.s32 %s157, 1
      %s159 = scalar_select %p156, %s157, %s158
      %p162 = pneg %p156
      %p163 = scmp.eq.s32.totalorder %s22, 1
      %p164 = por %p162, %p163
      %p165 = scmp.ne.s32.totalorder %s157, %s160
      %p166 = scmp.eq.s32.totalorder %s22, 0
      %p167 = por %p165, %p166
      %p168 = scmp.ne.s32.totalorder %s157, %s160
      %p169 = scmp.eq.s32.totalorder %s27, 1
      %p170 = por %p168, %p169
      %p171 = scmp.ne.s32.totalorder %s160, %s161
      %p172 = scmp.eq.s32.totalorder %s27, 0
      %p173 = por %p171, %p172
      %p174 = scmp.ne.s32.totalorder %s160, %s161
      %p175 = scmp.eq.s32.totalorder %s28, 1
      %p176 = por %p174, %p175
      %p178 = scmp.ne.s32.totalorder %s161, %s177
      %p179 = scmp.eq.s32.totalorder %s28, 0
      %p180 = por %p178, %p179
      %p181 = scmp.le.s32.totalorder 1, %s22
      %p182 = scmp.lt.s32.totalorder %s22, 3
      %p183 = pnand %p181, %p182
      %p184 = pneg %p183
      // Predicated region
      $region9: #{tpu_custom_call.1} parent=5 // pred_check
        _
      $region10: #{tpu_custom_call.1} parent=5 // pred_check_branch
        %186 = sbr.rel (%p183) target = $region12
      $region11: #{tpu_custom_call.1} parent=5 // pred_region
        %s187 = ssub.s32 %s22, 1
        // Predicated region
        $region13: #{tpu_custom_call.1} parent=11 // pred_check
          %p188 = pneg %p121
        $region14: #{tpu_custom_call.1} parent=11 // pred_check_branch
          %190 = sbr.rel (%p188) target = $region16
        $region15: #{tpu_custom_call.1} parent=11 // pred_region
          %192 = vsyncadd [#allocation9], 0
          %s193 = sshll.u32 %s3, 4
          %s194 = int_to_ptr.hbm [resolvable:$true] %s193
          %s195 = sshll.u32 [#allocation8], 4
          %s196 = int_to_ptr.vmem [resolvable:$true] %s195
          %201 = dma.hbm_to_vmem [thread:$0]  %s194, 2048, %s196, [#allocation9], 128, 128, 8
        $region16: #{tpu_custom_call.1} parent=11 // pred_fallthru
          _
      $region12: #{tpu_custom_call.1} parent=5 // pred_fallthru
        _
      %p202 = scmp.lt.s32.totalorder %s22, 2
      // Predicated region
      $region17: #{tpu_custom_call.1} parent=5 // pred_check
        %p203 = pneg %p202
      $region18: #{tpu_custom_call.1} parent=5 // pred_check_branch
        %205 = sbr.rel (%p203) target = $region20
      $region19: #{tpu_custom_call.1} parent=5 // pred_region
        // Predicated region
        $region21: #{tpu_custom_call.1} parent=19 // pred_check
          %p206 = pneg %p42
        $region22: #{tpu_custom_call.1} parent=19 // pred_check_branch
          %208 = sbr.rel (%p206) target = $region24
        $region23: #{tpu_custom_call.1} parent=19 // pred_region
          %s209 = sand.u32 %s32, 1
          %s210 = scalar_lea.sflag [#allocation3], %s209
          %s211 = sand.u32 %s32, 1
          %s212 = smul.addr %s211, 256
          %s213 = scalar_lea.vmem [#allocation2], %s212
          %s214 = smul.u32 32, %s22
          %216 = vsyncadd %s210, 0
          %s217 = smul.addr %s214, 8
          %s218 = scalar_lea.hbm %s0, %s217
          %s219 = sshll.u32 %s218, 4
          %s220 = int_to_ptr.hbm [resolvable:$true] %s219
          %s221 = sshll.u32 %s213, 4
          %s222 = int_to_ptr.vmem [resolvable:$true] %s221
          %227 = dma.hbm_to_vmem [thread:$0]  %s220, 4096, %s222, %s210, 128, 128, 8
        $region24: #{tpu_custom_call.1} parent=19 // pred_fallthru
          _
        // Predicated region
        $region25: #{tpu_custom_call.1} parent=19 // pred_check
          %p228 = pneg %p68
        $region26: #{tpu_custom_call.1} parent=19 // pred_check_branch
          %230 = sbr.rel (%p228) target = $region28
        $region27: #{tpu_custom_call.1} parent=19 // pred_region
          #allocation12 [shape = 'u32[6]{0}', space=smem, size = 0x18, scoped, tag = 'DMA stride descriptor']
          %s231 = sand.u32 %s22, 1
          %s232 = scalar_lea.sflag [#allocation6], %s231
          %s233 = sand.u32 %s58, 1
          %s234 = smul.addr %s233, 1024
          %s235 = scalar_lea.vmem [#allocation5], %s234
          %s236 = smul.u32 32, %s22
          %238 = vsyncadd %s232, 0
          %s239 = smul.addr %s236, 8
          %s240 = scalar_lea.hbm %s1, %s239
          %s242 = sshll.u32 1, 14
          %s243 = sxor.u32 4294967295, %s242
          %s245 = sld [smem:[#allocation0]]
          %s246 = sadd.s32 2, %s245
          %s248 = sshll.u32 7, 26
          %s249 = sxor.u32 4294967295, %s248
          %s250 = sand.u32 0, %s249
          %s251 = sshll.u32 %s246, 26
          %s252 = sor.u32 %s250, %s251
          %s253 = sshll.u32 %s240, 4
          %s254 = int_to_ptr.hbm [resolvable:$true] %s253
          %s255 = sshll.u32 %s235, 4
          %s256 = int_to_ptr.vmem [resolvable:$true] %s255
          %262 = sst [smem:[#allocation12]] 8192
          %s263 = scalar_lea.smem [#allocation12], 1
          %264 = sst [smem:[%s263]] 4096
          %s265 = scalar_lea.smem [#allocation12], 2
          %266 = sst [smem:[%s265]] 32
          %s267 = scalar_lea.smem [#allocation12], 3
          %268 = sst [smem:[%s267]] 128
          %s269 = scalar_lea.smem [#allocation12], 4
          %270 = sst [smem:[%s269]] 128
          %s271 = scalar_lea.smem [#allocation12], 5
          %272 = sst [smem:[%s271]] 8
          %274 = dma.general %s254, 16384, %s256, %s232, [#allocation11], [#allocation12], %s252, 0
        $region28: #{tpu_custom_call.1} parent=19 // pred_fallthru
          _
        // Predicated region
        $region29: #{tpu_custom_call.1} parent=19 // pred_check
          %p275 = pneg %p94
        $region30: #{tpu_custom_call.1} parent=19 // pred_check_branch
          %277 = sbr.rel (%p275) target = $region32
        $region31: #{tpu_custom_call.1} parent=19 // pred_region
          %s278 = sand.u32 %s22, 1
          %s279 = scalar_lea.sflag [#allocation6], %s278
          %s280 = sand.u32 %s84, 1
          %s281 = smul.addr %s280, 256
          %s282 = scalar_lea.vmem [#allocation7], %s281
          %s283 = smul.u32 32, %s22
          %285 = vsyncadd %s279, 0
          %s286 = smul.addr %s283, 8
          %s287 = scalar_lea.hbm %s2, %s286
          %s288 = sshll.u32 %s287, 4
          %s289 = int_to_ptr.hbm [resolvable:$true] %s288
          %s290 = sshll.u32 %s282, 4
          %s291 = int_to_ptr.vmem [resolvable:$true] %s290
          %296 = dma.hbm_to_vmem [thread:$0]  %s289, 4096, %s291, %s279, 128, 128, 8
        $region32: #{tpu_custom_call.1} parent=19 // pred_fallthru
          _
      $region20: #{tpu_custom_call.1} parent=5 // pred_fallthru
        _
      %p297 = scmp.le.s32.totalorder 1, %s22
      %p298 = scmp.lt.s32.totalorder %s22, 3
      %p299 = pnand %p297, %p298
      %p300 = pneg %p299
      // Predicated region
      $region33: #{tpu_custom_call.1} parent=5 // pred_check
        _
      $region34: #{tpu_custom_call.1} parent=5 // pred_check_branch
        %302 = sbr.rel (%p299) target = $region36
      $region35: #{tpu_custom_call.1} parent=5 // pred_region
        %s303 = ssub.s32 %s22, 1
        %s304 = sand.u32 %s35, 1
        %s305 = scalar_lea.sflag [#allocation3], %s304
        %s306 = sand.u32 %s35, 1
        %s307 = smul.addr %s306, 256
        %s308 = scalar_lea.vmem [#allocation2], %s307
        // Predicated region
        $region37: #{tpu_custom_call.1} parent=35 // pred_check
          %p309 = pneg %p48
        $region38: #{tpu_custom_call.1} parent=35 // pred_check_branch
          %311 = sbr.rel (%p309) target = $region40
        $region39: #{tpu_custom_call.1} parent=35 // pred_region
          %313 = dma.done %s305, 4096
        $region40: #{tpu_custom_call.1} parent=35 // pred_fallthru
          _
        %s314 = sand.u32 %s27, 1
        %s315 = scalar_lea.sflag [#allocation6], %s314
        %s316 = sand.u32 %s61, 1
        %s317 = smul.addr %s316, 1024
        %s318 = scalar_lea.vmem [#allocation5], %s317
        // Predicated region
        $region41: #{tpu_custom_call.1} parent=35 // pred_check
          %p319 = pneg %p74
        $region42: #{tpu_custom_call.1} parent=35 // pred_check_branch
          %321 = sbr.rel (%p319) target = $region44
        $region43: #{tpu_custom_call.1} parent=35 // pred_region
          %323 = dma.done %s315, 16384
        $region44: #{tpu_custom_call.1} parent=35 // pred_fallthru
          _
        %s324 = sand.u32 %s27, 1
        %s325 = scalar_lea.sflag [#allocation6], %s324
        %s326 = sand.u32 %s87, 1
        %s327 = smul.addr %s326, 256
        %s328 = scalar_lea.vmem [#allocation7], %s327
        // Predicated region
        $region45: #{tpu_custom_call.1} parent=35 // pred_check
          %p329 = pneg %p100
        $region46: #{tpu_custom_call.1} parent=35 // pred_check_branch
          %331 = sbr.rel (%p329) target = $region48
        $region47: #{tpu_custom_call.1} parent=35 // pred_region
          %333 = dma.done %s325, 4096
        $region48: #{tpu_custom_call.1} parent=35 // pred_fallthru
          _
        // Predicated region
        $region49: #{tpu_custom_call.1} parent=35 // pred_check
          %p334 = pneg %p121
        $region50: #{tpu_custom_call.1} parent=35 // pred_check_branch
          %336 = sbr.rel (%p334) target = $region52
        $region51: #{tpu_custom_call.1} parent=35 // pred_region
          %338 = dma.done [#allocation9], 2048
        $region52: #{tpu_custom_call.1} parent=35 // pred_fallthru
          _
        %s339 = sand.u32 %s35, 1
        %s340 = scalar_lea.sflag [#allocation3], %s339
        %s341 = sand.u32 %s35, 1
        %s342 = smul.addr %s341, 256
        %s343 = scalar_lea.vmem [#allocation2], %s342
        %p344 = pneg %p48
        %p345 = pneg %p45
        %s346 = sand.u32 %s27, 1
        %s347 = scalar_lea.sflag [#allocation6], %s346
        %s348 = sand.u32 %s61, 1
        %s349 = smul.addr %s348, 1024
        %s350 = scalar_lea.vmem [#allocation5], %s349
        %p351 = pneg %p74
        %p352 = pneg %p71
        %s353 = sand.u32 %s27, 1
        %s354 = scalar_lea.sflag [#allocation6], %s353
        %s355 = sand.u32 %s87, 1
        %s356 = smul.addr %s355, 256
        %s357 = scalar_lea.vmem [#allocation7], %s356
        %p358 = pneg %p100
        %p359 = pneg %p97
        %p360 = pneg %p121
        %p361 = pneg %p118
        %p362 = pneg %p147
        %p363 = pneg %p144
        %s364 = smul.u32 32, %s27
        %p365 = scmp.lt.s32.totalorder %s364, 63
        %s366 = scalar_select %p365, %s364, 63
        %s367 = smul.addr %s366, 8
        %s368 = scalar_lea.vmem %s4, %s367
        %p369 = pneg %p173
        %p370 = pneg %p170
        %s371 = sand.u32 %s160, 1
        %s372 = scalar_lea.sflag [#allocation4], %s371
        %s373 = sand.u32 %s160, 1
        %s374 = smul.addr %s373, 256
        %s375 = scalar_lea.vmem [#allocation10], %s374
        %s376 = smul.u32 32, %s27
        %s377 = smul.u32 32, %s27
        %s378 = smul.u32 32, %s27
        %s379 = smul.u32 32, %s27
        %p380 = scmp.lt.s32.totalorder %s379, 63
        %s381 = scalar_select %p380, %s379, 63
        %s382 = smul.addr %s381, 8
        %s383 = scalar_lea.vmem %s4, %s382
        %s384 = smul.u32 32, %s27
        %s385 = smul.u32 32, %s27
        %v386 = vld [vmem:[%s308] sm:$0xff]
        %v387 = vld [vmem:[%s308 + $0x8] sm:$0xff]
        %v388 = vld [vmem:[%s308 + $0x10] sm:$0xff]
        %v389 = vld [vmem:[%s308 + $0x18] sm:$0xff]
        %v390 = vld [vmem:[%s308 + $0x20] sm:$0xff]
        %v391 = vld [vmem:[%s308 + $0x28] sm:$0xff]
        %v392 = vld [vmem:[%s308 + $0x30] sm:$0xff]
        %v393 = vld [vmem:[%s308 + $0x38] sm:$0xff]
        %v394 = vld [vmem:[%s308 + $0x40] sm:$0xff]
        %v395 = vld [vmem:[%s308 + $0x48] sm:$0xff]
        %v396 = vld [vmem:[%s308 + $0x50] sm:$0xff]
        %v397 = vld [vmem:[%s308 + $0x58] sm:$0xff]
        %v398 = vld [vmem:[%s308 + $0x60] sm:$0xff]
        %v399 = vld [vmem:[%s308 + $0x68] sm:$0xff]
        %v400 = vld [vmem:[%s308 + $0x70] sm:$0xff]
        %v401 = vld [vmem:[%s308 + $0x78] sm:$0xff]
        %v402 = vld [vmem:[%s308 + $0x80] sm:$0xff]
        %v403 = vld [vmem:[%s308 + $0x88] sm:$0xff]
        %v404 = vld [vmem:[%s308 + $0x90] sm:$0xff]
        %v405 = vld [vmem:[%s308 + $0x98] sm:$0xff]
        %v406 = vld [vmem:[%s308 + $0xa0] sm:$0xff]
        %v407 = vld [vmem:[%s308 + $0xa8] sm:$0xff]
        %v408 = vld [vmem:[%s308 + $0xb0] sm:$0xff]
        %v409 = vld [vmem:[%s308 + $0xb8] sm:$0xff]
        %v410 = vld [vmem:[%s308 + $0xc0] sm:$0xff]
        %v411 = vld [vmem:[%s308 + $0xc8] sm:$0xff]
        %v412 = vld [vmem:[%s308 + $0xd0] sm:$0xff]
        %v413 = vld [vmem:[%s308 + $0xd8] sm:$0xff]
        %v414 = vld [vmem:[%s308 + $0xe0] sm:$0xff]
        %v415 = vld [vmem:[%s308 + $0xe8] sm:$0xff]
        %v416 = vld [vmem:[%s308 + $0xf0] sm:$0xff]
        %v417 = vld [vmem:[%s308 + $0xf8] sm:$0xff]
        %v418 = vld [vmem:[%s328] sm:$0xff]
        %v419 = vld [vmem:[%s328 + $0x8] sm:$0xff]
        %v420 = vld [vmem:[%s328 + $0x10] sm:$0xff]
        %v421 = vld [vmem:[%s328 + $0x18] sm:$0xff]
        %v422 = vld [vmem:[%s328 + $0x20] sm:$0xff]
        %v423 = vld [vmem:[%s328 + $0x28] sm:$0xff]
        %v424 = vld [vmem:[%s328 + $0x30] sm:$0xff]
        %v425 = vld [vmem:[%s328 + $0x38] sm:$0xff]
        %v426 = vld [vmem:[%s328 + $0x40] sm:$0xff]
        %v427 = vld [vmem:[%s328 + $0x48] sm:$0xff]
        %v428 = vld [vmem:[%s328 + $0x50] sm:$0xff]
        %v429 = vld [vmem:[%s328 + $0x58] sm:$0xff]
        %v430 = vld [vmem:[%s328 + $0x60] sm:$0xff]
        %v431 = vld [vmem:[%s328 + $0x68] sm:$0xff]
        %v432 = vld [vmem:[%s328 + $0x70] sm:$0xff]
        %v433 = vld [vmem:[%s328 + $0x78] sm:$0xff]
        %v434 = vld [vmem:[%s328 + $0x80] sm:$0xff]
        %v435 = vld [vmem:[%s328 + $0x88] sm:$0xff]
        %v436 = vld [vmem:[%s328 + $0x90] sm:$0xff]
        %v437 = vld [vmem:[%s328 + $0x98] sm:$0xff]
        %v438 = vld [vmem:[%s328 + $0xa0] sm:$0xff]
        %v439 = vld [vmem:[%s328 + $0xa8] sm:$0xff]
        %v440 = vld [vmem:[%s328 + $0xb0] sm:$0xff]
        %v441 = vld [vmem:[%s328 + $0xb8] sm:$0xff]
        %v442 = vld [vmem:[%s328 + $0xc0] sm:$0xff]
        %v443 = vld [vmem:[%s328 + $0xc8] sm:$0xff]
        %v444 = vld [vmem:[%s328 + $0xd0] sm:$0xff]
        %v445 = vld [vmem:[%s328 + $0xd8] sm:$0xff]
        %v446 = vld [vmem:[%s328 + $0xe0] sm:$0xff]
        %v447 = vld [vmem:[%s328 + $0xe8] sm:$0xff]
        %v448 = vld [vmem:[%s328 + $0xf0] sm:$0xff]
        %v449 = vld [vmem:[%s328 + $0xf8] sm:$0xff]
        %v450 = vld [vmem:[#allocation8] sm:$0xff]
        %v451 = vld [vmem:[#allocation8 + $0x8] sm:$0xff]
        %v452 = vld [vmem:[#allocation8 + $0x10] sm:$0xff]
        %v453 = vld [vmem:[#allocation8 + $0x18] sm:$0xff]
        %v454 = vld [vmem:[#allocation8 + $0x20] sm:$0xff]
        %v455 = vld [vmem:[#allocation8 + $0x28] sm:$0xff]
        %v456 = vld [vmem:[#allocation8 + $0x30] sm:$0xff]
        %v457 = vld [vmem:[#allocation8 + $0x38] sm:$0xff]
        %v458 = vld [vmem:[#allocation8 + $0x40] sm:$0xff]
        %v459 = vld [vmem:[#allocation8 + $0x48] sm:$0xff]
        %v460 = vld [vmem:[#allocation8 + $0x50] sm:$0xff]
        %v461 = vld [vmem:[#allocation8 + $0x58] sm:$0xff]
        %v462 = vld [vmem:[#allocation8 + $0x60] sm:$0xff]
        %v463 = vld [vmem:[#allocation8 + $0x68] sm:$0xff]
        %v464 = vld [vmem:[#allocation8 + $0x70] sm:$0xff]
        %v465 = vld [vmem:[#allocation8 + $0x78] sm:$0xff]
        %v466 = vlaneseq
        %v467 = vand.u32 %v466, 127
        %468 = vrot.lane.b32.xlu0 %v418, 127
        %v469 = vpop.permute.xlu0 %468
        %470 = vrot.lane.b32.xlu0 %v419, 127
        %v471 = vpop.permute.xlu0 %470
        %472 = vrot.lane.b32.xlu0 %v420, 127
        %v473 = vpop.permute.xlu0 %472
        %474 = vrot.lane.b32.xlu0 %v421, 127
        %v475 = vpop.permute.xlu0 %474
        %476 = vrot.lane.b32.xlu0 %v422, 127
        %v477 = vpop.permute.xlu0 %476
        %478 = vrot.lane.b32.xlu0 %v423, 127
        %v479 = vpop.permute.xlu0 %478
        %480 = vrot.lane.b32.xlu0 %v424, 127
        %v481 = vpop.permute.xlu0 %480
        %482 = vrot.lane.b32.xlu0 %v425, 127
        %v483 = vpop.permute.xlu0 %482
        %484 = vrot.lane.b32.xlu0 %v426, 127
        %v485 = vpop.permute.xlu0 %484
        %486 = vrot.lane.b32.xlu0 %v427, 127
        %v487 = vpop.permute.xlu0 %486
        %488 = vrot.lane.b32.xlu0 %v428, 127
        %v489 = vpop.permute.xlu0 %488
        %490 = vrot.lane.b32.xlu0 %v429, 127
        %v491 = vpop.permute.xlu0 %490
        %492 = vrot.lane.b32.xlu0 %v430, 127
        %v493 = vpop.permute.xlu0 %492
        %494 = vrot.lane.b32.xlu0 %v431, 127
        %v495 = vpop.permute.xlu0 %494
        %496 = vrot.lane.b32.xlu0 %v432, 127
        %v497 = vpop.permute.xlu0 %496
        %498 = vrot.lane.b32.xlu0 %v433, 127
        %v499 = vpop.permute.xlu0 %498
        %500 = vrot.lane.b32.xlu0 %v434, 127
        %v501 = vpop.permute.xlu0 %500
        %502 = vrot.lane.b32.xlu0 %v435, 127
        %v503 = vpop.permute.xlu0 %502
        %504 = vrot.lane.b32.xlu0 %v436, 127
        %v505 = vpop.permute.xlu0 %504
        %506 = vrot.lane.b32.xlu0 %v437, 127
        %v507 = vpop.permute.xlu0 %506
        %508 = vrot.lane.b32.xlu0 %v438, 127
        %v509 = vpop.permute.xlu0 %508
        %510 = vrot.lane.b32.xlu0 %v439, 127
        %v511 = vpop.permute.xlu0 %510
        %512 = vrot.lane.b32.xlu0 %v440, 127
        %v513 = vpop.permute.xlu0 %512
        %514 = vrot.lane.b32.xlu0 %v441, 127
        %v515 = vpop.permute.xlu0 %514
        %516 = vrot.lane.b32.xlu0 %v442, 127
        %v517 = vpop.permute.xlu0 %516
        %518 = vrot.lane.b32.xlu0 %v443, 127
        %v519 = vpop.permute.xlu0 %518
        %520 = vrot.lane.b32.xlu0 %v444, 127
        %v521 = vpop.permute.xlu0 %520
        %522 = vrot.lane.b32.xlu0 %v445, 127
        %v523 = vpop.permute.xlu0 %522
        %524 = vrot.lane.b32.xlu0 %v446, 127
        %v525 = vpop.permute.xlu0 %524
        %526 = vrot.lane.b32.xlu0 %v447, 127
        %v527 = vpop.permute.xlu0 %526
        %528 = vrot.lane.b32.xlu0 %v448, 127
        %v529 = vpop.permute.xlu0 %528
        %530 = vrot.lane.b32.xlu0 %v449, 127
        %v531 = vpop.permute.xlu0 %530
        %vm532 = vcmp.eq.s32.totalorder %v467, 127
        %v533 = vsub.f32 %v469, %v418
        %v534 = vsub.f32 %v471, %v419
        %v535 = vsub.f32 %v473, %v420
        %v536 = vsub.f32 %v475, %v421
        %v537 = vsub.f32 %v477, %v422
        %v538 = vsub.f32 %v479, %v423
        %v539 = vsub.f32 %v481, %v424
        %v540 = vsub.f32 %v483, %v425
        %v541 = vsub.f32 %v485, %v426
        %v542 = vsub.f32 %v487, %v427
        %v543 = vsub.f32 %v489, %v428
        %v544 = vsub.f32 %v491, %v429
        %v545 = vsub.f32 %v493, %v430
        %v546 = vsub.f32 %v495, %v431
        %v547 = vsub.f32 %v497, %v432
        %v548 = vsub.f32 %v499, %v433
        %v549 = vsub.f32 %v501, %v434
        %v550 = vsub.f32 %v503, %v435
        %v551 = vsub.f32 %v505, %v436
        %v552 = vsub.f32 %v507, %v437
        %v553 = vsub.f32 %v509, %v438
        %v554 = vsub.f32 %v511, %v439
        %v555 = vsub.f32 %v513, %v440
        %v556 = vsub.f32 %v515, %v441
        %v557 = vsub.f32 %v517, %v442
        %v558 = vsub.f32 %v519, %v443
        %v559 = vsub.f32 %v521, %v444
        %v560 = vsub.f32 %v523, %v445
        %v561 = vsub.f32 %v525, %v446
        %v562 = vsub.f32 %v527, %v447
        %v563 = vsub.f32 %v529, %v448
        %v564 = vsub.f32 %v531, %v449
        %v565 = vsel %vm532, 1, 0
        %vm566 = vcmp.eq.s32.totalorder %v565, 1
        %v567 = vsel %vm566, 1e+10, %v533
        %v568 = vsel %vm566, 1e+10, %v534
        %v569 = vsel %vm566, 1e+10, %v535
        %v570 = vsel %vm566, 1e+10, %v536
        %v571 = vsel %vm566, 1e+10, %v537
        %v572 = vsel %vm566, 1e+10, %v538
        %v573 = vsel %vm566, 1e+10, %v539
        %v574 = vsel %vm566, 1e+10, %v540
        %v575 = vsel %vm566, 1e+10, %v541
        %v576 = vsel %vm566, 1e+10, %v542
        %v577 = vsel %vm566, 1e+10, %v543
        %v578 = vsel %vm566, 1e+10, %v544
        %v579 = vsel %vm566, 1e+10, %v545
        %v580 = vsel %vm566, 1e+10, %v546
        %v581 = vsel %vm566, 1e+10, %v547
        %v582 = vsel %vm566, 1e+10, %v548
        %v583 = vsel %vm566, 1e+10, %v549
        %v584 = vsel %vm566, 1e+10, %v550
        %v585 = vsel %vm566, 1e+10, %v551
        %v586 = vsel %vm566, 1e+10, %v552
        %v587 = vsel %vm566, 1e+10, %v553
        %v588 = vsel %vm566, 1e+10, %v554
        %v589 = vsel %vm566, 1e+10, %v555
        %v590 = vsel %vm566, 1e+10, %v556
        %v591 = vsel %vm566, 1e+10, %v557
        %v592 = vsel %vm566, 1e+10, %v558
        %v593 = vsel %vm566, 1e+10, %v559
        %v594 = vsel %vm566, 1e+10, %v560
        %v595 = vsel %vm566, 1e+10, %v561
        %v596 = vsel %vm566, 1e+10, %v562
        %v597 = vsel %vm566, 1e+10, %v563
        %v598 = vsel %vm566, 1e+10, %v564
        %v599 = vmax.f32 %v386, 0.0
        %v600 = vmax.f32 %v387, 0.0
        %v601 = vmax.f32 %v388, 0.0
        %v602 = vmax.f32 %v389, 0.0
        %v603 = vmax.f32 %v390, 0.0
        %v604 = vmax.f32 %v391, 0.0
        %v605 = vmax.f32 %v392, 0.0
        %v606 = vmax.f32 %v393, 0.0
        %v607 = vmax.f32 %v394, 0.0
        %v608 = vmax.f32 %v395, 0.0
        %v609 = vmax.f32 %v396, 0.0
        %v610 = vmax.f32 %v397, 0.0
        %v611 = vmax.f32 %v398, 0.0
        %v612 = vmax.f32 %v399, 0.0
        %v613 = vmax.f32 %v400, 0.0
        %v614 = vmax.f32 %v401, 0.0
        %v615 = vmax.f32 %v402, 0.0
        %v616 = vmax.f32 %v403, 0.0
        %v617 = vmax.f32 %v404, 0.0
        %v618 = vmax.f32 %v405, 0.0
        %v619 = vmax.f32 %v406, 0.0
        %v620 = vmax.f32 %v407, 0.0
        %v621 = vmax.f32 %v408, 0.0
        %v622 = vmax.f32 %v409, 0.0
        %v623 = vmax.f32 %v410, 0.0
        %v624 = vmax.f32 %v411, 0.0
        %v625 = vmax.f32 %v412, 0.0
        %v626 = vmax.f32 %v413, 0.0
        %v627 = vmax.f32 %v414, 0.0
        %v628 = vmax.f32 %v415, 0.0
        %v629 = vmax.f32 %v416, 0.0
        %v630 = vmax.f32 %v417, 0.0
        %v631 = vmul.f32 %v567, %v599
        %v632 = vmul.f32 %v568, %v600
        %v633 = vmul.f32 %v569, %v601
        %v634 = vmul.f32 %v570, %v602
        %v635 = vmul.f32 %v571, %v603
        %v636 = vmul.f32 %v572, %v604
        %v637 = vmul.f32 %v573, %v605
        %v638 = vmul.f32 %v574, %v606
        %v639 = vmul.f32 %v575, %v607
        %v640 = vmul.f32 %v576, %v608
        %v641 = vmul.f32 %v577, %v609
        %v642 = vmul.f32 %v578, %v610
        %v643 = vmul.f32 %v579, %v611
        %v644 = vmul.f32 %v580, %v612
        %v645 = vmul.f32 %v581, %v613
        %v646 = vmul.f32 %v582, %v614
        %v647 = vmul.f32 %v583, %v615
        %v648 = vmul.f32 %v584, %v616
        %v649 = vmul.f32 %v585, %v617
        %v650 = vmul.f32 %v586, %v618
        %v651 = vmul.f32 %v587, %v619
        %v652 = vmul.f32 %v588, %v620
        %v653 = vmul.f32 %v589, %v621
        %v654 = vmul.f32 %v590, %v622
        %v655 = vmul.f32 %v591, %v623
        %v656 = vmul.f32 %v592, %v624
        %v657 = vmul.f32 %v593, %v625
        %v658 = vmul.f32 %v594, %v626
        %v659 = vmul.f32 %v595, %v627
        %v660 = vmul.f32 %v596, %v628
        %v661 = vmul.f32 %v597, %v629
        %v662 = vmul.f32 %v598, %v630
        %v663 = vand.u32 %v465, 4294901760
        %664 = vmatpush.msra.mxu0 %v663
        %v665 = vand.u32 %v464, 4294901760
        %666 = vmatpush.msra.mxu0 %v665
        %v667 = vand.u32 %v463, 4294901760
        %668 = vmatpush.msra.mxu0 %v667
        %v669 = vand.u32 %v462, 4294901760
        %670 = vmatpush.msra.mxu0 %v669
        %v671 = vand.u32 %v461, 4294901760
        %672 = vmatpush.msra.mxu0 %v671
        %v673 = vand.u32 %v460, 4294901760
        %674 = vmatpush.msra.mxu0 %v673
        %v675 = vand.u32 %v459, 4294901760
        %676 = vmatpush.msra.mxu0 %v675
        %v677 = vand.u32 %v458, 4294901760
        %678 = vmatpush.msra.mxu0 %v677
        %v679 = vand.u32 %v457, 4294901760
        %680 = vmatpush.msra.mxu0 %v679
        %v681 = vand.u32 %v456, 4294901760
        %682 = vmatpush.msra.mxu0 %v681
        %v683 = vand.u32 %v455, 4294901760
        %684 = vmatpush.msra.mxu0 %v683
        %v685 = vand.u32 %v454, 4294901760
        %686 = vmatpush.msra.mxu0 %v685
        %v687 = vand.u32 %v453, 4294901760
        %688 = vmatpush.msra.mxu0 %v687
        %v689 = vand.u32 %v452, 4294901760
        %690 = vmatpush.msra.mxu0 %v689
        %v691 = vand.u32 %v451, 4294901760
        %692 = vmatpush.msra.mxu0 %v691
        %v693 = vand.u32 %v450, 4294901760
        %694 = vmatpush.msra.mxu0 %v693
        %v695 = vand.u32 %v631, 4294901760
        %v696 = vsub.f32 %v631, %v695
        %v697 = vand.u32 %v696, 4294901760
        %v698 = vsub.f32 %v696, %v697
        %v699 = vand.u32 %v698, 4294901760
        %700 = vmatmul.f32.gmra.mxu0 %v699
        %v701 = vpop.f32.mrf.mxu0
        %v702 = vadd.f32 0.0, %v701
        %v703 = vand.u32 %v632, 4294901760
        %v704 = vsub.f32 %v632, %v703
        %v705 = vand.u32 %v704, 4294901760
        %v706 = vsub.f32 %v704, %v705
        %v707 = vand.u32 %v706, 4294901760
        %708 = vmatmul.f32.gmra.mxu0 %v707
        %v709 = vpop.f32.mrf.mxu0
        %v710 = vadd.f32 0.0, %v709
        %v711 = vand.u32 %v633, 4294901760
        %v712 = vsub.f32 %v633, %v711
        %v713 = vand.u32 %v712, 4294901760
        %v714 = vsub.f32 %v712, %v713
        %v715 = vand.u32 %v714, 4294901760
        %716 = vmatmul.f32.gmra.mxu0 %v715
        %v717 = vpop.f32.mrf.mxu0
        %v718 = vadd.f32 0.0, %v717
        %v719 = vand.u32 %v634, 4294901760
        %v720 = vsub.f32 %v634, %v719
        %v721 = vand.u32 %v720, 4294901760
        %v722 = vsub.f32 %v720, %v721
        %v723 = vand.u32 %v722, 4294901760
        %724 = vmatmul.f32.gmra.mxu0 %v723
        %v725 = vpop.f32.mrf.mxu0
        %v726 = vadd.f32 0.0, %v725
        %v727 = vand.u32 %v635, 4294901760
        %v728 = vsub.f32 %v635, %v727
        %v729 = vand.u32 %v728, 4294901760
        %v730 = vsub.f32 %v728, %v729
        %v731 = vand.u32 %v730, 4294901760
        %732 = vmatmul.f32.gmra.mxu0 %v731
        %v733 = vpop.f32.mrf.mxu0
        %v734 = vadd.f32 0.0, %v733
        %v735 = vand.u32 %v636, 4294901760
        %v736 = vsub.f32 %v636, %v735
        %v737 = vand.u32 %v736, 4294901760
        %v738 = vsub.f32 %v736, %v737
        %v739 = vand.u32 %v738, 4294901760
        %740 = vmatmul.f32.gmra.mxu0 %v739
        %v741 = vpop.f32.mrf.mxu0
        %v742 = vadd.f32 0.0, %v741
        %v743 = vand.u32 %v637, 4294901760
        %v744 = vsub.f32 %v637, %v743
        %v745 = vand.u32 %v744, 4294901760
        %v746 = vsub.f32 %v744, %v745
        %v747 = vand.u32 %v746, 4294901760
        %748 = vmatmul.f32.gmra.mxu0 %v747
        %v749 = vpop.f32.mrf.mxu0
        %v750 = vadd.f32 0.0, %v749
        %v751 = vand.u32 %v638, 4294901760
        %v752 = vsub.f32 %v638, %v751
        %v753 = vand.u32 %v752, 4294901760
        %v754 = vsub.f32 %v752, %v753
        %v755 = vand.u32 %v754, 4294901760
        %756 = vmatmul.f32.gmra.mxu0 %v755
        %v757 = vpop.f32.mrf.mxu0
        %v758 = vadd.f32 0.0, %v757
        %v759 = vand.u32 %v639, 4294901760
        %v760 = vsub.f32 %v639, %v759
        %v761 = vand.u32 %v760, 4294901760
        %v762 = vsub.f32 %v760, %v761
        %v763 = vand.u32 %v762, 4294901760
        %764 = vmatmul.f32.gmra.mxu0 %v763
        %v765 = vpop.f32.mrf.mxu0
        %v766 = vadd.f32 0.0, %v765
        %v767 = vand.u32 %v640, 4294901760
        %v768 = vsub.f32 %v640, %v767
        %v769 = vand.u32 %v768, 4294901760
        %v770 = vsub.f32 %v768, %v769
        %v771 = vand.u32 %v770, 4294901760
        %772 = vmatmul.f32.gmra.mxu0 %v771
        %v773 = vpop.f32.mrf.mxu0
        %v774 = vadd.f32 0.0, %v773
        %v775 = vand.u32 %v641, 4294901760
        %v776 = vsub.f32 %v641, %v775
        %v777 = vand.u32 %v776, 4294901760
        %v778 = vsub.f32 %v776, %v777
        %v779 = vand.u32 %v778, 4294901760
        %780 = vmatmul.f32.gmra.mxu0 %v779
        %v781 = vpop.f32.mrf.mxu0
        %v782 = vadd.f32 0.0, %v781
        %v783 = vand.u32 %v642, 4294901760
        %v784 = vsub.f32 %v642, %v783
        %v785 = vand.u32 %v784, 4294901760
        %v786 = vsub.f32 %v784, %v785
        %v787 = vand.u32 %v786, 4294901760
        %788 = vmatmul.f32.gmra.mxu0 %v787
        %v789 = vpop.f32.mrf.mxu0
        %v790 = vadd.f32 0.0, %v789
        %v791 = vand.u32 %v643, 4294901760
        %v792 = vsub.f32 %v643, %v791
        %v793 = vand.u32 %v792, 4294901760
        %v794 = vsub.f32 %v792, %v793
        %v795 = vand.u32 %v794, 4294901760
        %796 = vmatmul.f32.gmra.mxu0 %v795
        %v797 = vpop.f32.mrf.mxu0
        %v798 = vadd.f32 0.0, %v797
        %v799 = vand.u32 %v644, 4294901760
        %v800 = vsub.f32 %v644, %v799
        %v801 = vand.u32 %v800, 4294901760
        %v802 = vsub.f32 %v800, %v801
        %v803 = vand.u32 %v802, 4294901760
        %804 = vmatmul.f32.gmra.mxu0 %v803
        %v805 = vpop.f32.mrf.mxu0
        %v806 = vadd.f32 0.0, %v805
        %v807 = vand.u32 %v645, 4294901760
        %v808 = vsub.f32 %v645, %v807
        %v809 = vand.u32 %v808, 4294901760
        %v810 = vsub.f32 %v808, %v809
        %v811 = vand.u32 %v810, 4294901760
        %812 = vmatmul.f32.gmra.mxu0 %v811
        %v813 = vpop.f32.mrf.mxu0
        %v814 = vadd.f32 0.0, %v813
        %v815 = vand.u32 %v646, 4294901760
        %v816 = vsub.f32 %v646, %v815
        %v817 = vand.u32 %v816, 4294901760
        %v818 = vsub.f32 %v816, %v817
        %v819 = vand.u32 %v818, 4294901760
        %820 = vmatmul.f32.gmra.mxu0 %v819
        %v821 = vpop.f32.mrf.mxu0
        %v822 = vadd.f32 0.0, %v821
        %v823 = vand.u32 %v647, 4294901760
        %v824 = vsub.f32 %v647, %v823
        %v825 = vand.u32 %v824, 4294901760
        %v826 = vsub.f32 %v824, %v825
        %v827 = vand.u32 %v826, 4294901760
        %828 = vmatmul.f32.gmra.mxu0 %v827
        %v829 = vpop.f32.mrf.mxu0
        %v830 = vadd.f32 0.0, %v829
        %v831 = vand.u32 %v648, 4294901760
        %v832 = vsub.f32 %v648, %v831
        %v833 = vand.u32 %v832, 4294901760
        %v834 = vsub.f32 %v832, %v833
        %v835 = vand.u32 %v834, 4294901760
        %836 = vmatmul.f32.gmra.mxu0 %v835
        %v837 = vpop.f32.mrf.mxu0
        %v838 = vadd.f32 0.0, %v837
        %v839 = vand.u32 %v649, 4294901760
        %v840 = vsub.f32 %v649, %v839
        %v841 = vand.u32 %v840, 4294901760
        %v842 = vsub.f32 %v840, %v841
        %v843 = vand.u32 %v842, 4294901760
        %844 = vmatmul.f32.gmra.mxu0 %v843
        %v845 = vpop.f32.mrf.mxu0
        %v846 = vadd.f32 0.0, %v845
        %v847 = vand.u32 %v650, 4294901760
        %v848 = vsub.f32 %v650, %v847
        %v849 = vand.u32 %v848, 4294901760
        %v850 = vsub.f32 %v848, %v849
        %v851 = vand.u32 %v850, 4294901760
        %852 = vmatmul.f32.gmra.mxu0 %v851
        %v853 = vpop.f32.mrf.mxu0
        %v854 = vadd.f32 0.0, %v853
        %v855 = vand.u32 %v651, 4294901760
        %v856 = vsub.f32 %v651, %v855
        %v857 = vand.u32 %v856, 4294901760
        %v858 = vsub.f32 %v856, %v857
        %v859 = vand.u32 %v858, 4294901760
        %860 = vmatmul.f32.gmra.mxu0 %v859
        %v861 = vpop.f32.mrf.mxu0
        %v862 = vadd.f32 0.0, %v861
        %v863 = vand.u32 %v652, 4294901760
        %v864 = vsub.f32 %v652, %v863
        %v865 = vand.u32 %v864, 4294901760
        %v866 = vsub.f32 %v864, %v865
        %v867 = vand.u32 %v866, 4294901760
        %868 = vmatmul.f32.gmra.mxu0 %v867
        %v869 = vpop.f32.mrf.mxu0
        %v870 = vadd.f32 0.0, %v869
        %v871 = vand.u32 %v653, 4294901760
        %v872 = vsub.f32 %v653, %v871
        %v873 = vand.u32 %v872, 4294901760
        %v874 = vsub.f32 %v872, %v873
        %v875 = vand.u32 %v874, 4294901760
        %876 = vmatmul.f32.gmra.mxu0 %v875
        %v877 = vpop.f32.mrf.mxu0
        %v878 = vadd.f32 0.0, %v877
        %v879 = vand.u32 %v654, 4294901760
        %v880 = vsub.f32 %v654, %v879
        %v881 = vand.u32 %v880, 4294901760
        %v882 = vsub.f32 %v880, %v881
        %v883 = vand.u32 %v882, 4294901760
        %884 = vmatmul.f32.gmra.mxu0 %v883
        %v885 = vpop.f32.mrf.mxu0
        %v886 = vadd.f32 0.0, %v885
        %v887 = vand.u32 %v655, 4294901760
        %v888 = vsub.f32 %v655, %v887
        %v889 = vand.u32 %v888, 4294901760
        %v890 = vsub.f32 %v888, %v889
        %v891 = vand.u32 %v890, 4294901760
        %892 = vmatmul.f32.gmra.mxu0 %v891
        %v893 = vpop.f32.mrf.mxu0
        %v894 = vadd.f32 0.0, %v893
        %v895 = vand.u32 %v656, 4294901760
        %v896 = vsub.f32 %v656, %v895
        %v897 = vand.u32 %v896, 4294901760
        %v898 = vsub.f32 %v896, %v897
        %v899 = vand.u32 %v898, 4294901760
        %900 = vmatmul.f32.gmra.mxu0 %v899
        %v901 = vpop.f32.mrf.mxu0
        %v902 = vadd.f32 0.0, %v901
        %v903 = vand.u32 %v657, 4294901760
        %v904 = vsub.f32 %v657, %v903
        %v905 = vand.u32 %v904, 4294901760
        %v906 = vsub.f32 %v904, %v905
        %v907 = vand.u32 %v906, 4294901760
        %908 = vmatmul.f32.gmra.mxu0 %v907
        %v909 = vpop.f32.mrf.mxu0
        %v910 = vadd.f32 0.0, %v909
        %v911 = vand.u32 %v658, 4294901760
        %v912 = vsub.f32 %v658, %v911
        %v913 = vand.u32 %v912, 4294901760
        %v914 = vsub.f32 %v912, %v913
        %v915 = vand.u32 %v914, 4294901760
        %916 = vmatmul.f32.gmra.mxu0 %v915
        %v917 = vpop.f32.mrf.mxu0
        %v918 = vadd.f32 0.0, %v917
        %v919 = vand.u32 %v659, 4294901760
        %v920 = vsub.f32 %v659, %v919
        %v921 = vand.u32 %v920, 4294901760
        %v922 = vsub.f32 %v920, %v921
        %v923 = vand.u32 %v922, 4294901760
        %924 = vmatmul.f32.gmra.mxu0 %v923
        %v925 = vpop.f32.mrf.mxu0
        %v926 = vadd.f32 0.0, %v925
        %v927 = vand.u32 %v660, 4294901760
        %v928 = vsub.f32 %v660, %v927
        %v929 = vand.u32 %v928, 4294901760
        %v930 = vsub.f32 %v928, %v929
        %v931 = vand.u32 %v930, 4294901760
        %932 = vmatmul.f32.gmra.mxu0 %v931
        %v933 = vpop.f32.mrf.mxu0
        %v934 = vadd.f32 0.0, %v933
        %v935 = vand.u32 %v661, 4294901760
        %v936 = vsub.f32 %v661, %v935
        %v937 = vand.u32 %v936, 4294901760
        %v938 = vsub.f32 %v936, %v937
        %v939 = vand.u32 %v938, 4294901760
        %940 = vmatmul.f32.gmra.mxu0 %v939
        %v941 = vpop.f32.mrf.mxu0
        %v942 = vadd.f32 0.0, %v941
        %v943 = vand.u32 %v662, 4294901760
        %v944 = vsub.f32 %v662, %v943
        %v945 = vand.u32 %v944, 4294901760
        %v946 = vsub.f32 %v944, %v945
        %v947 = vand.u32 %v946, 4294901760
        %948 = vmatmul.f32.gmra.mxu0 %v947
        %v949 = vpop.f32.mrf.mxu0
        %v950 = vadd.f32 0.0, %v949
        %951 = vdwg.mxu0
        %v952 = vand.u32 %v465, 4294901760
        %v953 = vsub.f32 %v465, %v952
        %v954 = vand.u32 %v953, 4294901760
        %v955 = vsub.f32 %v953, %v954
        %v956 = vand.u32 %v955, 4294901760
        %957 = vmatpush.msra.mxu0 %v956
        %v958 = vand.u32 %v464, 4294901760
        %v959 = vsub.f32 %v464, %v958
        %v960 = vand.u32 %v959, 4294901760
        %v961 = vsub.f32 %v959, %v960
        %v962 = vand.u32 %v961, 4294901760
        %963 = vmatpush.msra.mxu0 %v962
        %v964 = vand.u32 %v463, 4294901760
        %v965 = vsub.f32 %v463, %v964
        %v966 = vand.u32 %v965, 4294901760
        %v967 = vsub.f32 %v965, %v966
        %v968 = vand.u32 %v967, 4294901760
        %969 = vmatpush.msra.mxu0 %v968
        %v970 = vand.u32 %v462, 4294901760
        %v971 = vsub.f32 %v462, %v970
        %v972 = vand.u32 %v971, 4294901760
        %v973 = vsub.f32 %v971, %v972
        %v974 = vand.u32 %v973, 4294901760
        %975 = vmatpush.msra.mxu0 %v974
        %v976 = vand.u32 %v461, 4294901760
        %v977 = vsub.f32 %v461, %v976
        %v978 = vand.u32 %v977, 4294901760
        %v979 = vsub.f32 %v977, %v978
        %v980 = vand.u32 %v979, 4294901760
        %981 = vmatpush.msra.mxu0 %v980
        %v982 = vand.u32 %v460, 4294901760
        %v983 = vsub.f32 %v460, %v982
        %v984 = vand.u32 %v983, 4294901760
        %v985 = vsub.f32 %v983, %v984
        %v986 = vand.u32 %v985, 4294901760
        %987 = vmatpush.msra.mxu0 %v986
        %v988 = vand.u32 %v459, 4294901760
        %v989 = vsub.f32 %v459, %v988
        %v990 = vand.u32 %v989, 4294901760
        %v991 = vsub.f32 %v989, %v990
        %v992 = vand.u32 %v991, 4294901760
        %993 = vmatpush.msra.mxu0 %v992
        %v994 = vand.u32 %v458, 4294901760
        %v995 = vsub.f32 %v458, %v994
        %v996 = vand.u32 %v995, 4294901760
        %v997 = vsub.f32 %v995, %v996
        %v998 = vand.u32 %v997, 4294901760
        %999 = vmatpush.msra.mxu0 %v998
        %v1000 = vand.u32 %v457, 4294901760
        %v1001 = vsub.f32 %v457, %v1000
        %v1002 = vand.u32 %v1001, 4294901760
        %v1003 = vsub.f32 %v1001, %v1002
        %v1004 = vand.u32 %v1003, 4294901760
        %1005 = vmatpush.msra.mxu0 %v1004
        %v1006 = vand.u32 %v456, 4294901760
        %v1007 = vsub.f32 %v456, %v1006
        %v1008 = vand.u32 %v1007, 4294901760
        %v1009 = vsub.f32 %v1007, %v1008
        %v1010 = vand.u32 %v1009, 4294901760
        %1011 = vmatpush.msra.mxu0 %v1010
        %v1012 = vand.u32 %v455, 4294901760
        %v1013 = vsub.f32 %v455, %v1012
        %v1014 = vand.u32 %v1013, 4294901760
        %v1015 = vsub.f32 %v1013, %v1014
        %v1016 = vand.u32 %v1015, 4294901760
        %1017 = vmatpush.msra.mxu0 %v1016
        %v1018 = vand.u32 %v454, 4294901760
        %v1019 = vsub.f32 %v454, %v1018
        %v1020 = vand.u32 %v1019, 4294901760
        %v1021 = vsub.f32 %v1019, %v1020
        %v1022 = vand.u32 %v1021, 4294901760
        %1023 = vmatpush.msra.mxu0 %v1022
        %v1024 = vand.u32 %v453, 4294901760
        %v1025 = vsub.f32 %v453, %v1024
        %v1026 = vand.u32 %v1025, 4294901760
        %v1027 = vsub.f32 %v1025, %v1026
        %v1028 = vand.u32 %v1027, 4294901760
        %1029 = vmatpush.msra.mxu0 %v1028
        %v1030 = vand.u32 %v452, 4294901760
        %v1031 = vsub.f32 %v452, %v1030
        %v1032 = vand.u32 %v1031, 4294901760
        %v1033 = vsub.f32 %v1031, %v1032
        %v1034 = vand.u32 %v1033, 4294901760
        %1035 = vmatpush.msra.mxu0 %v1034
        %v1036 = vand.u32 %v451, 4294901760
        %v1037 = vsub.f32 %v451, %v1036
        %v1038 = vand.u32 %v1037, 4294901760
        %v1039 = vsub.f32 %v1037, %v1038
        %v1040 = vand.u32 %v1039, 4294901760
        %1041 = vmatpush.msra.mxu0 %v1040
        %v1042 = vand.u32 %v450, 4294901760
        %v1043 = vsub.f32 %v450, %v1042
        %v1044 = vand.u32 %v1043, 4294901760
        %v1045 = vsub.f32 %v1043, %v1044
        %v1046 = vand.u32 %v1045, 4294901760
        %1047 = vmatpush.msra.mxu0 %v1046
        %v1048 = vand.u32 %v631, 4294901760
        %1049 = vmatmul.f32.gmra.mxu0 %v1048
        %v1050 = vpop.f32.mrf.mxu0
        %v1051 = vadd.f32 %v702, %v1050
        %v1052 = vand.u32 %v632, 4294901760
        %1053 = vmatmul.f32.gmra.mxu0 %v1052
        %v1054 = vpop.f32.mrf.mxu0
        %v1055 = vadd.f32 %v710, %v1054
        %v1056 = vand.u32 %v633, 4294901760
        %1057 = vmatmul.f32.gmra.mxu0 %v1056
        %v1058 = vpop.f32.mrf.mxu0
        %v1059 = vadd.f32 %v718, %v1058
        %v1060 = vand.u32 %v634, 4294901760
        %1061 = vmatmul.f32.gmra.mxu0 %v1060
        %v1062 = vpop.f32.mrf.mxu0
        %v1063 = vadd.f32 %v726, %v1062
        %v1064 = vand.u32 %v635, 4294901760
        %1065 = vmatmul.f32.gmra.mxu0 %v1064
        %v1066 = vpop.f32.mrf.mxu0
        %v1067 = vadd.f32 %v734, %v1066
        %v1068 = vand.u32 %v636, 4294901760
        %1069 = vmatmul.f32.gmra.mxu0 %v1068
        %v1070 = vpop.f32.mrf.mxu0
        %v1071 = vadd.f32 %v742, %v1070
        %v1072 = vand.u32 %v637, 4294901760
        %1073 = vmatmul.f32.gmra.mxu0 %v1072
        %v1074 = vpop.f32.mrf.mxu0
        %v1075 = vadd.f32 %v750, %v1074
        %v1076 = vand.u32 %v638, 4294901760
        %1077 = vmatmul.f32.gmra.mxu0 %v1076
        %v1078 = vpop.f32.mrf.mxu0
        %v1079 = vadd.f32 %v758, %v1078
        %v1080 = vand.u32 %v639, 4294901760
        %1081 = vmatmul.f32.gmra.mxu0 %v1080
        %v1082 = vpop.f32.mrf.mxu0
        %v1083 = vadd.f32 %v766, %v1082
        %v1084 = vand.u32 %v640, 4294901760
        %1085 = vmatmul.f32.gmra.mxu0 %v1084
        %v1086 = vpop.f32.mrf.mxu0
        %v1087 = vadd.f32 %v774, %v1086
        %v1088 = vand.u32 %v641, 4294901760
        %1089 = vmatmul.f32.gmra.mxu0 %v1088
        %v1090 = vpop.f32.mrf.mxu0
        %v1091 = vadd.f32 %v782, %v1090
        %v1092 = vand.u32 %v642, 4294901760
        %1093 = vmatmul.f32.gmra.mxu0 %v1092
        %v1094 = vpop.f32.mrf.mxu0
        %v1095 = vadd.f32 %v790, %v1094
        %v1096 = vand.u32 %v643, 4294901760
        %1097 = vmatmul.f32.gmra.mxu0 %v1096
        %v1098 = vpop.f32.mrf.mxu0
        %v1099 = vadd.f32 %v798, %v1098
        %v1100 = vand.u32 %v644, 4294901760
        %1101 = vmatmul.f32.gmra.mxu0 %v1100
        %v1102 = vpop.f32.mrf.mxu0
        %v1103 = vadd.f32 %v806, %v1102
        %v1104 = vand.u32 %v645, 4294901760
        %1105 = vmatmul.f32.gmra.mxu0 %v1104
        %v1106 = vpop.f32.mrf.mxu0
        %v1107 = vadd.f32 %v814, %v1106
        %v1108 = vand.u32 %v646, 4294901760
        %1109 = vmatmul.f32.gmra.mxu0 %v1108
        %v1110 = vpop.f32.mrf.mxu0
        %v1111 = vadd.f32 %v822, %v1110
        %v1112 = vand.u32 %v647, 4294901760
        %1113 = vmatmul.f32.gmra.mxu0 %v1112
        %v1114 = vpop.f32.mrf.mxu0
        %v1115 = vadd.f32 %v830, %v1114
        %v1116 = vand.u32 %v648, 4294901760
        %1117 = vmatmul.f32.gmra.mxu0 %v1116
        %v1118 = vpop.f32.mrf.mxu0
        %v1119 = vadd.f32 %v838, %v1118
        %v1120 = vand.u32 %v649, 4294901760
        %1121 = vmatmul.f32.gmra.mxu0 %v1120
        %v1122 = vpop.f32.mrf.mxu0
        %v1123 = vadd.f32 %v846, %v1122
        %v1124 = vand.u32 %v650, 4294901760
        %1125 = vmatmul.f32.gmra.mxu0 %v1124
        %v1126 = vpop.f32.mrf.mxu0
        %v1127 = vadd.f32 %v854, %v1126
        %v1128 = vand.u32 %v651, 4294901760
        %1129 = vmatmul.f32.gmra.mxu0 %v1128
        %v1130 = vpop.f32.mrf.mxu0
        %v1131 = vadd.f32 %v862, %v1130
        %v1132 = vand.u32 %v652, 4294901760
        %1133 = vmatmul.f32.gmra.mxu0 %v1132
        %v1134 = vpop.f32.mrf.mxu0
        %v1135 = vadd.f32 %v870, %v1134
        %v1136 = vand.u32 %v653, 4294901760
        %1137 = vmatmul.f32.gmra.mxu0 %v1136
        %v1138 = vpop.f32.mrf.mxu0
        %v1139 = vadd.f32 %v878, %v1138
        %v1140 = vand.u32 %v654, 4294901760
        %1141 = vmatmul.f32.gmra.mxu0 %v1140
        %v1142 = vpop.f32.mrf.mxu0
        %v1143 = vadd.f32 %v886, %v1142
        %v1144 = vand.u32 %v655, 4294901760
        %1145 = vmatmul.f32.gmra.mxu0 %v1144
        %v1146 = vpop.f32.mrf.mxu0
        %v1147 = vadd.f32 %v894, %v1146
        %v1148 = vand.u32 %v656, 4294901760
        %1149 = vmatmul.f32.gmra.mxu0 %v1148
        %v1150 = vpop.f32.mrf.mxu0
        %v1151 = vadd.f32 %v902, %v1150
        %v1152 = vand.u32 %v657, 4294901760
        %1153 = vmatmul.f32.gmra.mxu0 %v1152
        %v1154 = vpop.f32.mrf.mxu0
        %v1155 = vadd.f32 %v910, %v1154
        %v1156 = vand.u32 %v658, 4294901760
        %1157 = vmatmul.f32.gmra.mxu0 %v1156
        %v1158 = vpop.f32.mrf.mxu0
        %v1159 = vadd.f32 %v918, %v1158
        %v1160 = vand.u32 %v659, 4294901760
        %1161 = vmatmul.f32.gmra.mxu0 %v1160
        %v1162 = vpop.f32.mrf.mxu0
        %v1163 = vadd.f32 %v926, %v1162
        %v1164 = vand.u32 %v660, 4294901760
        %1165 = vmatmul.f32.gmra.mxu0 %v1164
        %v1166 = vpop.f32.mrf.mxu0
        %v1167 = vadd.f32 %v934, %v1166
        %v1168 = vand.u32 %v661, 4294901760
        %1169 = vmatmul.f32.gmra.mxu0 %v1168
        %v1170 = vpop.f32.mrf.mxu0
        %v1171 = vadd.f32 %v942, %v1170
        %v1172 = vand.u32 %v662, 4294901760
        %1173 = vmatmul.f32.gmra.mxu0 %v1172
        %v1174 = vpop.f32.mrf.mxu0
        %v1175 = vadd.f32 %v950, %v1174
        %1176 = vdwg.mxu0
        %v1177 = vand.u32 %v465, 4294901760
        %v1178 = vsub.f32 %v465, %v1177
        %1179 = vmatpush.msra.mxu0 %v1178
        %v1180 = vand.u32 %v464, 4294901760
        %v1181 = vsub.f32 %v464, %v1180
        %1182 = vmatpush.msra.mxu0 %v1181
        %v1183 = vand.u32 %v463, 4294901760
        %v1184 = vsub.f32 %v463, %v1183
        %1185 = vmatpush.msra.mxu0 %v1184
        %v1186 = vand.u32 %v462, 4294901760
        %v1187 = vsub.f32 %v462, %v1186
        %1188 = vmatpush.msra.mxu0 %v1187
        %v1189 = vand.u32 %v461, 4294901760
        %v1190 = vsub.f32 %v461, %v1189
        %1191 = vmatpush.msra.mxu0 %v1190
        %v1192 = vand.u32 %v460, 4294901760
        %v1193 = vsub.f32 %v460, %v1192
        %1194 = vmatpush.msra.mxu0 %v1193
        %v1195 = vand.u32 %v459, 4294901760
        %v1196 = vsub.f32 %v459, %v1195
        %1197 = vmatpush.msra.mxu0 %v1196
        %v1198 = vand.u32 %v458, 4294901760
        %v1199 = vsub.f32 %v458, %v1198
        %1200 = vmatpush.msra.mxu0 %v1199
        %v1201 = vand.u32 %v457, 4294901760
        %v1202 = vsub.f32 %v457, %v1201
        %1203 = vmatpush.msra.mxu0 %v1202
        %v1204 = vand.u32 %v456, 4294901760
        %v1205 = vsub.f32 %v456, %v1204
        %1206 = vmatpush.msra.mxu0 %v1205
        %v1207 = vand.u32 %v455, 4294901760
        %v1208 = vsub.f32 %v455, %v1207
        %1209 = vmatpush.msra.mxu0 %v1208
        %v1210 = vand.u32 %v454, 4294901760
        %v1211 = vsub.f32 %v454, %v1210
        %1212 = vmatpush.msra.mxu0 %v1211
        %v1213 = vand.u32 %v453, 4294901760
        %v1214 = vsub.f32 %v453, %v1213
        %1215 = vmatpush.msra.mxu0 %v1214
        %v1216 = vand.u32 %v452, 4294901760
        %v1217 = vsub.f32 %v452, %v1216
        %1218 = vmatpush.msra.mxu0 %v1217
        %v1219 = vand.u32 %v451, 4294901760
        %v1220 = vsub.f32 %v451, %v1219
        %1221 = vmatpush.msra.mxu0 %v1220
        %v1222 = vand.u32 %v450, 4294901760
        %v1223 = vsub.f32 %v450, %v1222
        %1224 = vmatpush.msra.mxu0 %v1223
        %v1225 = vand.u32 %v631, 4294901760
        %v1226 = vsub.f32 %v631, %v1225
        %1227 = vmatmul.f32.gmra.mxu0 %v1226
        %v1228 = vpop.f32.mrf.mxu0
        %v1229 = vadd.f32 %v1051, %v1228
        %v1230 = vand.u32 %v632, 4294901760
        %v1231 = vsub.f32 %v632, %v1230
        %1232 = vmatmul.f32.gmra.mxu0 %v1231
        %v1233 = vpop.f32.mrf.mxu0
        %v1234 = vadd.f32 %v1055, %v1233
        %v1235 = vand.u32 %v633, 4294901760
        %v1236 = vsub.f32 %v633, %v1235
        %1237 = vmatmul.f32.gmra.mxu0 %v1236
        %v1238 = vpop.f32.mrf.mxu0
        %v1239 = vadd.f32 %v1059, %v1238
        %v1240 = vand.u32 %v634, 4294901760
        %v1241 = vsub.f32 %v634, %v1240
        %1242 = vmatmul.f32.gmra.mxu0 %v1241
        %v1243 = vpop.f32.mrf.mxu0
        %v1244 = vadd.f32 %v1063, %v1243
        %v1245 = vand.u32 %v635, 4294901760
        %v1246 = vsub.f32 %v635, %v1245
        %1247 = vmatmul.f32.gmra.mxu0 %v1246
        %v1248 = vpop.f32.mrf.mxu0
        %v1249 = vadd.f32 %v1067, %v1248
        %v1250 = vand.u32 %v636, 4294901760
        %v1251 = vsub.f32 %v636, %v1250
        %1252 = vmatmul.f32.gmra.mxu0 %v1251
        %v1253 = vpop.f32.mrf.mxu0
        %v1254 = vadd.f32 %v1071, %v1253
        %v1255 = vand.u32 %v637, 4294901760
        %v1256 = vsub.f32 %v637, %v1255
        %1257 = vmatmul.f32.gmra.mxu0 %v1256
        %v1258 = vpop.f32.mrf.mxu0
        %v1259 = vadd.f32 %v1075, %v1258
        %v1260 = vand.u32 %v638, 4294901760
        %v1261 = vsub.f32 %v638, %v1260
        %1262 = vmatmul.f32.gmra.mxu0 %v1261
        %v1263 = vpop.f32.mrf.mxu0
        %v1264 = vadd.f32 %v1079, %v1263
        %v1265 = vand.u32 %v639, 4294901760
        %v1266 = vsub.f32 %v639, %v1265
        %1267 = vmatmul.f32.gmra.mxu0 %v1266
        %v1268 = vpop.f32.mrf.mxu0
        %v1269 = vadd.f32 %v1083, %v1268
        %v1270 = vand.u32 %v640, 4294901760
        %v1271 = vsub.f32 %v640, %v1270
        %1272 = vmatmul.f32.gmra.mxu0 %v1271
        %v1273 = vpop.f32.mrf.mxu0
        %v1274 = vadd.f32 %v1087, %v1273
        %v1275 = vand.u32 %v641, 4294901760
        %v1276 = vsub.f32 %v641, %v1275
        %1277 = vmatmul.f32.gmra.mxu0 %v1276
        %v1278 = vpop.f32.mrf.mxu0
        %v1279 = vadd.f32 %v1091, %v1278
        %v1280 = vand.u32 %v642, 4294901760
        %v1281 = vsub.f32 %v642, %v1280
        %1282 = vmatmul.f32.gmra.mxu0 %v1281
        %v1283 = vpop.f32.mrf.mxu0
        %v1284 = vadd.f32 %v1095, %v1283
        %v1285 = vand.u32 %v643, 4294901760
        %v1286 = vsub.f32 %v643, %v1285
        %1287 = vmatmul.f32.gmra.mxu0 %v1286
        %v1288 = vpop.f32.mrf.mxu0
        %v1289 = vadd.f32 %v1099, %v1288
        %v1290 = vand.u32 %v644, 4294901760
        %v1291 = vsub.f32 %v644, %v1290
        %1292 = vmatmul.f32.gmra.mxu0 %v1291
        %v1293 = vpop.f32.mrf.mxu0
        %v1294 = vadd.f32 %v1103, %v1293
        %v1295 = vand.u32 %v645, 4294901760
        %v1296 = vsub.f32 %v645, %v1295
        %1297 = vmatmul.f32.gmra.mxu0 %v1296
        %v1298 = vpop.f32.mrf.mxu0
        %v1299 = vadd.f32 %v1107, %v1298
        %v1300 = vand.u32 %v646, 4294901760
        %v1301 = vsub.f32 %v646, %v1300
        %1302 = vmatmul.f32.gmra.mxu0 %v1301
        %v1303 = vpop.f32.mrf.mxu0
        %v1304 = vadd.f32 %v1111, %v1303
        %v1305 = vand.u32 %v647, 4294901760
        %v1306 = vsub.f32 %v647, %v1305
        %1307 = vmatmul.f32.gmra.mxu0 %v1306
        %v1308 = vpop.f32.mrf.mxu0
        %v1309 = vadd.f32 %v1115, %v1308
        %v1310 = vand.u32 %v648, 4294901760
        %v1311 = vsub.f32 %v648, %v1310
        %1312 = vmatmul.f32.gmra.mxu0 %v1311
        %v1313 = vpop.f32.mrf.mxu0
        %v1314 = vadd.f32 %v1119, %v1313
        %v1315 = vand.u32 %v649, 4294901760
        %v1316 = vsub.f32 %v649, %v1315
        %1317 = vmatmul.f32.gmra.mxu0 %v1316
        %v1318 = vpop.f32.mrf.mxu0
        %v1319 = vadd.f32 %v1123, %v1318
        %v1320 = vand.u32 %v650, 4294901760
        %v1321 = vsub.f32 %v650, %v1320
        %1322 = vmatmul.f32.gmra.mxu0 %v1321
        %v1323 = vpop.f32.mrf.mxu0
        %v1324 = vadd.f32 %v1127, %v1323
        %v1325 = vand.u32 %v651, 4294901760
        %v1326 = vsub.f32 %v651, %v1325
        %1327 = vmatmul.f32.gmra.mxu0 %v1326
        %v1328 = vpop.f32.mrf.mxu0
        %v1329 = vadd.f32 %v1131, %v1328
        %v1330 = vand.u32 %v652, 4294901760
        %v1331 = vsub.f32 %v652, %v1330
        %1332 = vmatmul.f32.gmra.mxu0 %v1331
        %v1333 = vpop.f32.mrf.mxu0
        %v1334 = vadd.f32 %v1135, %v1333
        %v1335 = vand.u32 %v653, 4294901760
        %v1336 = vsub.f32 %v653, %v1335
        %1337 = vmatmul.f32.gmra.mxu0 %v1336
        %v1338 = vpop.f32.mrf.mxu0
        %v1339 = vadd.f32 %v1139, %v1338
        %v1340 = vand.u32 %v654, 4294901760
        %v1341 = vsub.f32 %v654, %v1340
        %1342 = vmatmul.f32.gmra.mxu0 %v1341
        %v1343 = vpop.f32.mrf.mxu0
        %v1344 = vadd.f32 %v1143, %v1343
        %v1345 = vand.u32 %v655, 4294901760
        %v1346 = vsub.f32 %v655, %v1345
        %1347 = vmatmul.f32.gmra.mxu0 %v1346
        %v1348 = vpop.f32.mrf.mxu0
        %v1349 = vadd.f32 %v1147, %v1348
        %v1350 = vand.u32 %v656, 4294901760
        %v1351 = vsub.f32 %v656, %v1350
        %1352 = vmatmul.f32.gmra.mxu0 %v1351
        %v1353 = vpop.f32.mrf.mxu0
        %v1354 = vadd.f32 %v1151, %v1353
        %v1355 = vand.u32 %v657, 4294901760
        %v1356 = vsub.f32 %v657, %v1355
        %1357 = vmatmul.f32.gmra.mxu0 %v1356
        %v1358 = vpop.f32.mrf.mxu0
        %v1359 = vadd.f32 %v1155, %v1358
        %v1360 = vand.u32 %v658, 4294901760
        %v1361 = vsub.f32 %v658, %v1360
        %1362 = vmatmul.f32.gmra.mxu0 %v1361
        %v1363 = vpop.f32.mrf.mxu0
        %v1364 = vadd.f32 %v1159, %v1363
        %v1365 = vand.u32 %v659, 4294901760
        %v1366 = vsub.f32 %v659, %v1365
        %1367 = vmatmul.f32.gmra.mxu0 %v1366
        %v1368 = vpop.f32.mrf.mxu0
        %v1369 = vadd.f32 %v1163, %v1368
        %v1370 = vand.u32 %v660, 4294901760
        %v1371 = vsub.f32 %v660, %v1370
        %1372 = vmatmul.f32.gmra.mxu0 %v1371
        %v1373 = vpop.f32.mrf.mxu0
        %v1374 = vadd.f32 %v1167, %v1373
        %v1375 = vand.u32 %v661, 4294901760
        %v1376 = vsub.f32 %v661, %v1375
        %1377 = vmatmul.f32.gmra.mxu0 %v1376
        %v1378 = vpop.f32.mrf.mxu0
        %v1379 = vadd.f32 %v1171, %v1378
        %v1380 = vand.u32 %v662, 4294901760
        %v1381 = vsub.f32 %v662, %v1380
        %1382 = vmatmul.f32.gmra.mxu0 %v1381
        %v1383 = vpop.f32.mrf.mxu0
        %v1384 = vadd.f32 %v1175, %v1383
        %1385 = vdwg.mxu0
        %v1386 = vand.u32 %v465, 4294901760
        %1387 = vmatpush.msra.mxu0 %v1386
        %v1388 = vand.u32 %v464, 4294901760
        %1389 = vmatpush.msra.mxu0 %v1388
        %v1390 = vand.u32 %v463, 4294901760
        %1391 = vmatpush.msra.mxu0 %v1390
        %v1392 = vand.u32 %v462, 4294901760
        %1393 = vmatpush.msra.mxu0 %v1392
        %v1394 = vand.u32 %v461, 4294901760
        %1395 = vmatpush.msra.mxu0 %v1394
        %v1396 = vand.u32 %v460, 4294901760
        %1397 = vmatpush.msra.mxu0 %v1396
        %v1398 = vand.u32 %v459, 4294901760
        %1399 = vmatpush.msra.mxu0 %v1398
        %v1400 = vand.u32 %v458, 4294901760
        %1401 = vmatpush.msra.mxu0 %v1400
        %v1402 = vand.u32 %v457, 4294901760
        %1403 = vmatpush.msra.mxu0 %v1402
        %v1404 = vand.u32 %v456, 4294901760
        %1405 = vmatpush.msra.mxu0 %v1404
        %v1406 = vand.u32 %v455, 4294901760
        %1407 = vmatpush.msra.mxu0 %v1406
        %v1408 = vand.u32 %v454, 4294901760
        %1409 = vmatpush.msra.mxu0 %v1408
        %v1410 = vand.u32 %v453, 4294901760
        %1411 = vmatpush.msra.mxu0 %v1410
        %v1412 = vand.u32 %v452, 4294901760
        %1413 = vmatpush.msra.mxu0 %v1412
        %v1414 = vand.u32 %v451, 4294901760
        %1415 = vmatpush.msra.mxu0 %v1414
        %v1416 = vand.u32 %v450, 4294901760
        %1417 = vmatpush.msra.mxu0 %v1416
        %v1418 = vand.u32 %v631, 4294901760
        %v1419 = vsub.f32 %v631, %v1418
        %v1420 = vand.u32 %v1419, 4294901760
        %1421 = vmatmul.f32.gmra.mxu0 %v1420
        %v1422 = vpop.f32.mrf.mxu0
        %v1423 = vadd.f32 %v1229, %v1422
        %v1424 = vand.u32 %v632, 4294901760
        %v1425 = vsub.f32 %v632, %v1424
        %v1426 = vand.u32 %v1425, 4294901760
        %1427 = vmatmul.f32.gmra.mxu0 %v1426
        %v1428 = vpop.f32.mrf.mxu0
        %v1429 = vadd.f32 %v1234, %v1428
        %v1430 = vand.u32 %v633, 4294901760
        %v1431 = vsub.f32 %v633, %v1430
        %v1432 = vand.u32 %v1431, 4294901760
        %1433 = vmatmul.f32.gmra.mxu0 %v1432
        %v1434 = vpop.f32.mrf.mxu0
        %v1435 = vadd.f32 %v1239, %v1434
        %v1436 = vand.u32 %v634, 4294901760
        %v1437 = vsub.f32 %v634, %v1436
        %v1438 = vand.u32 %v1437, 4294901760
        %1439 = vmatmul.f32.gmra.mxu0 %v1438
        %v1440 = vpop.f32.mrf.mxu0
        %v1441 = vadd.f32 %v1244, %v1440
        %v1442 = vand.u32 %v635, 4294901760
        %v1443 = vsub.f32 %v635, %v1442
        %v1444 = vand.u32 %v1443, 4294901760
        %1445 = vmatmul.f32.gmra.mxu0 %v1444
        %v1446 = vpop.f32.mrf.mxu0
        %v1447 = vadd.f32 %v1249, %v1446
        %v1448 = vand.u32 %v636, 4294901760
        %v1449 = vsub.f32 %v636, %v1448
        %v1450 = vand.u32 %v1449, 4294901760
        %1451 = vmatmul.f32.gmra.mxu0 %v1450
        %v1452 = vpop.f32.mrf.mxu0
        %v1453 = vadd.f32 %v1254, %v1452
        %v1454 = vand.u32 %v637, 4294901760
        %v1455 = vsub.f32 %v637, %v1454
        %v1456 = vand.u32 %v1455, 4294901760
        %1457 = vmatmul.f32.gmra.mxu0 %v1456
        %v1458 = vpop.f32.mrf.mxu0
        %v1459 = vadd.f32 %v1259, %v1458
        %v1460 = vand.u32 %v638, 4294901760
        %v1461 = vsub.f32 %v638, %v1460
        %v1462 = vand.u32 %v1461, 4294901760
        %1463 = vmatmul.f32.gmra.mxu0 %v1462
        %v1464 = vpop.f32.mrf.mxu0
        %v1465 = vadd.f32 %v1264, %v1464
        %v1466 = vand.u32 %v639, 4294901760
        %v1467 = vsub.f32 %v639, %v1466
        %v1468 = vand.u32 %v1467, 4294901760
        %1469 = vmatmul.f32.gmra.mxu0 %v1468
        %v1470 = vpop.f32.mrf.mxu0
        %v1471 = vadd.f32 %v1269, %v1470
        %v1472 = vand.u32 %v640, 4294901760
        %v1473 = vsub.f32 %v640, %v1472
        %v1474 = vand.u32 %v1473, 4294901760
        %1475 = vmatmul.f32.gmra.mxu0 %v1474
        %v1476 = vpop.f32.mrf.mxu0
        %v1477 = vadd.f32 %v1274, %v1476
        %v1478 = vand.u32 %v641, 4294901760
        %v1479 = vsub.f32 %v641, %v1478
        %v1480 = vand.u32 %v1479, 4294901760
        %1481 = vmatmul.f32.gmra.mxu0 %v1480
        %v1482 = vpop.f32.mrf.mxu0
        %v1483 = vadd.f32 %v1279, %v1482
        %v1484 = vand.u32 %v642, 4294901760
        %v1485 = vsub.f32 %v642, %v1484
        %v1486 = vand.u32 %v1485, 4294901760
        %1487 = vmatmul.f32.gmra.mxu0 %v1486
        %v1488 = vpop.f32.mrf.mxu0
        %v1489 = vadd.f32 %v1284, %v1488
        %v1490 = vand.u32 %v643, 4294901760
        %v1491 = vsub.f32 %v643, %v1490
        %v1492 = vand.u32 %v1491, 4294901760
        %1493 = vmatmul.f32.gmra.mxu0 %v1492
        %v1494 = vpop.f32.mrf.mxu0
        %v1495 = vadd.f32 %v1289, %v1494
        %v1496 = vand.u32 %v644, 4294901760
        %v1497 = vsub.f32 %v644, %v1496
        %v1498 = vand.u32 %v1497, 4294901760
        %1499 = vmatmul.f32.gmra.mxu0 %v1498
        %v1500 = vpop.f32.mrf.mxu0
        %v1501 = vadd.f32 %v1294, %v1500
        %v1502 = vand.u32 %v645, 4294901760
        %v1503 = vsub.f32 %v645, %v1502
        %v1504 = vand.u32 %v1503, 4294901760
        %1505 = vmatmul.f32.gmra.mxu0 %v1504
        %v1506 = vpop.f32.mrf.mxu0
        %v1507 = vadd.f32 %v1299, %v1506
        %v1508 = vand.u32 %v646, 4294901760
        %v1509 = vsub.f32 %v646, %v1508
        %v1510 = vand.u32 %v1509, 4294901760
        %1511 = vmatmul.f32.gmra.mxu0 %v1510
        %v1512 = vpop.f32.mrf.mxu0
        %v1513 = vadd.f32 %v1304, %v1512
        %v1514 = vand.u32 %v647, 4294901760
        %v1515 = vsub.f32 %v647, %v1514
        %v1516 = vand.u32 %v1515, 4294901760
        %1517 = vmatmul.f32.gmra.mxu0 %v1516
        %v1518 = vpop.f32.mrf.mxu0
        %v1519 = vadd.f32 %v1309, %v1518
        %v1520 = vand.u32 %v648, 4294901760
        %v1521 = vsub.f32 %v648, %v1520
        %v1522 = vand.u32 %v1521, 4294901760
        %1523 = vmatmul.f32.gmra.mxu0 %v1522
        %v1524 = vpop.f32.mrf.mxu0
        %v1525 = vadd.f32 %v1314, %v1524
        %v1526 = vand.u32 %v649, 4294901760
        %v1527 = vsub.f32 %v649, %v1526
        %v1528 = vand.u32 %v1527, 4294901760
        %1529 = vmatmul.f32.gmra.mxu0 %v1528
        %v1530 = vpop.f32.mrf.mxu0
        %v1531 = vadd.f32 %v1319, %v1530
        %v1532 = vand.u32 %v650, 4294901760
        %v1533 = vsub.f32 %v650, %v1532
        %v1534 = vand.u32 %v1533, 4294901760
        %1535 = vmatmul.f32.gmra.mxu0 %v1534
        %v1536 = vpop.f32.mrf.mxu0
        %v1537 = vadd.f32 %v1324, %v1536
        %v1538 = vand.u32 %v651, 4294901760
        %v1539 = vsub.f32 %v651, %v1538
        %v1540 = vand.u32 %v1539, 4294901760
        %1541 = vmatmul.f32.gmra.mxu0 %v1540
        %v1542 = vpop.f32.mrf.mxu0
        %v1543 = vadd.f32 %v1329, %v1542
        %v1544 = vand.u32 %v652, 4294901760
        %v1545 = vsub.f32 %v652, %v1544
        %v1546 = vand.u32 %v1545, 4294901760
        %1547 = vmatmul.f32.gmra.mxu0 %v1546
        %v1548 = vpop.f32.mrf.mxu0
        %v1549 = vadd.f32 %v1334, %v1548
        %v1550 = vand.u32 %v653, 4294901760
        %v1551 = vsub.f32 %v653, %v1550
        %v1552 = vand.u32 %v1551, 4294901760
        %1553 = vmatmul.f32.gmra.mxu0 %v1552
        %v1554 = vpop.f32.mrf.mxu0
        %v1555 = vadd.f32 %v1339, %v1554
        %v1556 = vand.u32 %v654, 4294901760
        %v1557 = vsub.f32 %v654, %v1556
        %v1558 = vand.u32 %v1557, 4294901760
        %1559 = vmatmul.f32.gmra.mxu0 %v1558
        %v1560 = vpop.f32.mrf.mxu0
        %v1561 = vadd.f32 %v1344, %v1560
        %v1562 = vand.u32 %v655, 4294901760
        %v1563 = vsub.f32 %v655, %v1562
        %v1564 = vand.u32 %v1563, 4294901760
        %1565 = vmatmul.f32.gmra.mxu0 %v1564
        %v1566 = vpop.f32.mrf.mxu0
        %v1567 = vadd.f32 %v1349, %v1566
        %v1568 = vand.u32 %v656, 4294901760
        %v1569 = vsub.f32 %v656, %v1568
        %v1570 = vand.u32 %v1569, 4294901760
        %1571 = vmatmul.f32.gmra.mxu0 %v1570
        %v1572 = vpop.f32.mrf.mxu0
        %v1573 = vadd.f32 %v1354, %v1572
        %v1574 = vand.u32 %v657, 4294901760
        %v1575 = vsub.f32 %v657, %v1574
        %v1576 = vand.u32 %v1575, 4294901760
        %1577 = vmatmul.f32.gmra.mxu0 %v1576
        %v1578 = vpop.f32.mrf.mxu0
        %v1579 = vadd.f32 %v1359, %v1578
        %v1580 = vand.u32 %v658, 4294901760
        %v1581 = vsub.f32 %v658, %v1580
        %v1582 = vand.u32 %v1581, 4294901760
        %1583 = vmatmul.f32.gmra.mxu0 %v1582
        %v1584 = vpop.f32.mrf.mxu0
        %v1585 = vadd.f32 %v1364, %v1584
        %v1586 = vand.u32 %v659, 4294901760
        %v1587 = vsub.f32 %v659, %v1586
        %v1588 = vand.u32 %v1587, 4294901760
        %1589 = vmatmul.f32.gmra.mxu0 %v1588
        %v1590 = vpop.f32.mrf.mxu0
        %v1591 = vadd.f32 %v1369, %v1590
        %v1592 = vand.u32 %v660, 4294901760
        %v1593 = vsub.f32 %v660, %v1592
        %v1594 = vand.u32 %v1593, 4294901760
        %1595 = vmatmul.f32.gmra.mxu0 %v1594
        %v1596 = vpop.f32.mrf.mxu0
        %v1597 = vadd.f32 %v1374, %v1596
        %v1598 = vand.u32 %v661, 4294901760
        %v1599 = vsub.f32 %v661, %v1598
        %v1600 = vand.u32 %v1599, 4294901760
        %1601 = vmatmul.f32.gmra.mxu0 %v1600
        %v1602 = vpop.f32.mrf.mxu0
        %v1603 = vadd.f32 %v1379, %v1602
        %v1604 = vand.u32 %v662, 4294901760
        %v1605 = vsub.f32 %v662, %v1604
        %v1606 = vand.u32 %v1605, 4294901760
        %1607 = vmatmul.f32.gmra.mxu0 %v1606
        %v1608 = vpop.f32.mrf.mxu0
        %v1609 = vadd.f32 %v1384, %v1608
        %1610 = vdwg.mxu0
        %v1611 = vand.u32 %v465, 4294901760
        %v1612 = vsub.f32 %v465, %v1611
        %v1613 = vand.u32 %v1612, 4294901760
        %1614 = vmatpush.msra.mxu0 %v1613
        %v1615 = vand.u32 %v464, 4294901760
        %v1616 = vsub.f32 %v464, %v1615
        %v1617 = vand.u32 %v1616, 4294901760
        %1618 = vmatpush.msra.mxu0 %v1617
        %v1619 = vand.u32 %v463, 4294901760
        %v1620 = vsub.f32 %v463, %v1619
        %v1621 = vand.u32 %v1620, 4294901760
        %1622 = vmatpush.msra.mxu0 %v1621
        %v1623 = vand.u32 %v462, 4294901760
        %v1624 = vsub.f32 %v462, %v1623
        %v1625 = vand.u32 %v1624, 4294901760
        %1626 = vmatpush.msra.mxu0 %v1625
        %v1627 = vand.u32 %v461, 4294901760
        %v1628 = vsub.f32 %v461, %v1627
        %v1629 = vand.u32 %v1628, 4294901760
        %1630 = vmatpush.msra.mxu0 %v1629
        %v1631 = vand.u32 %v460, 4294901760
        %v1632 = vsub.f32 %v460, %v1631
        %v1633 = vand.u32 %v1632, 4294901760
        %1634 = vmatpush.msra.mxu0 %v1633
        %v1635 = vand.u32 %v459, 4294901760
        %v1636 = vsub.f32 %v459, %v1635
        %v1637 = vand.u32 %v1636, 4294901760
        %1638 = vmatpush.msra.mxu0 %v1637
        %v1639 = vand.u32 %v458, 4294901760
        %v1640 = vsub.f32 %v458, %v1639
        %v1641 = vand.u32 %v1640, 4294901760
        %1642 = vmatpush.msra.mxu0 %v1641
        %v1643 = vand.u32 %v457, 4294901760
        %v1644 = vsub.f32 %v457, %v1643
        %v1645 = vand.u32 %v1644, 4294901760
        %1646 = vmatpush.msra.mxu0 %v1645
        %v1647 = vand.u32 %v456, 4294901760
        %v1648 = vsub.f32 %v456, %v1647
        %v1649 = vand.u32 %v1648, 4294901760
        %1650 = vmatpush.msra.mxu0 %v1649
        %v1651 = vand.u32 %v455, 4294901760
        %v1652 = vsub.f32 %v455, %v1651
        %v1653 = vand.u32 %v1652, 4294901760
        %1654 = vmatpush.msra.mxu0 %v1653
        %v1655 = vand.u32 %v454, 4294901760
        %v1656 = vsub.f32 %v454, %v1655
        %v1657 = vand.u32 %v1656, 4294901760
        %1658 = vmatpush.msra.mxu0 %v1657
        %v1659 = vand.u32 %v453, 4294901760
        %v1660 = vsub.f32 %v453, %v1659
        %v1661 = vand.u32 %v1660, 4294901760
        %1662 = vmatpush.msra.mxu0 %v1661
        %v1663 = vand.u32 %v452, 4294901760
        %v1664 = vsub.f32 %v452, %v1663
        %v1665 = vand.u32 %v1664, 4294901760
        %1666 = vmatpush.msra.mxu0 %v1665
        %v1667 = vand.u32 %v451, 4294901760
        %v1668 = vsub.f32 %v451, %v1667
        %v1669 = vand.u32 %v1668, 4294901760
        %1670 = vmatpush.msra.mxu0 %v1669
        %v1671 = vand.u32 %v450, 4294901760
        %v1672 = vsub.f32 %v450, %v1671
        %v1673 = vand.u32 %v1672, 4294901760
        %1674 = vmatpush.msra.mxu0 %v1673
        %v1675 = vand.u32 %v631, 4294901760
        %1676 = vmatmul.f32.gmra.mxu0 %v1675
        %v1677 = vpop.f32.mrf.mxu0
        %v1678 = vadd.f32 %v1423, %v1677
        %v1679 = vand.u32 %v632, 4294901760
        %1680 = vmatmul.f32.gmra.mxu0 %v1679
        %v1681 = vpop.f32.mrf.mxu0
        %v1682 = vadd.f32 %v1429, %v1681
        %v1683 = vand.u32 %v633, 4294901760
        %1684 = vmatmul.f32.gmra.mxu0 %v1683
        %v1685 = vpop.f32.mrf.mxu0
        %v1686 = vadd.f32 %v1435, %v1685
        %v1687 = vand.u32 %v634, 4294901760
        %1688 = vmatmul.f32.gmra.mxu0 %v1687
        %v1689 = vpop.f32.mrf.mxu0
        %v1690 = vadd.f32 %v1441, %v1689
        %v1691 = vand.u32 %v635, 4294901760
        %1692 = vmatmul.f32.gmra.mxu0 %v1691
        %v1693 = vpop.f32.mrf.mxu0
        %v1694 = vadd.f32 %v1447, %v1693
        %v1695 = vand.u32 %v636, 4294901760
        %1696 = vmatmul.f32.gmra.mxu0 %v1695
        %v1697 = vpop.f32.mrf.mxu0
        %v1698 = vadd.f32 %v1453, %v1697
        %v1699 = vand.u32 %v637, 4294901760
        %1700 = vmatmul.f32.gmra.mxu0 %v1699
        %v1701 = vpop.f32.mrf.mxu0
        %v1702 = vadd.f32 %v1459, %v1701
        %v1703 = vand.u32 %v638, 4294901760
        %1704 = vmatmul.f32.gmra.mxu0 %v1703
        %v1705 = vpop.f32.mrf.mxu0
        %v1706 = vadd.f32 %v1465, %v1705
        %v1707 = vand.u32 %v639, 4294901760
        %1708 = vmatmul.f32.gmra.mxu0 %v1707
        %v1709 = vpop.f32.mrf.mxu0
        %v1710 = vadd.f32 %v1471, %v1709
        %v1711 = vand.u32 %v640, 4294901760
        %1712 = vmatmul.f32.gmra.mxu0 %v1711
        %v1713 = vpop.f32.mrf.mxu0
        %v1714 = vadd.f32 %v1477, %v1713
        %v1715 = vand.u32 %v641, 4294901760
        %1716 = vmatmul.f32.gmra.mxu0 %v1715
        %v1717 = vpop.f32.mrf.mxu0
        %v1718 = vadd.f32 %v1483, %v1717
        %v1719 = vand.u32 %v642, 4294901760
        %1720 = vmatmul.f32.gmra.mxu0 %v1719
        %v1721 = vpop.f32.mrf.mxu0
        %v1722 = vadd.f32 %v1489, %v1721
        %v1723 = vand.u32 %v643, 4294901760
        %1724 = vmatmul.f32.gmra.mxu0 %v1723
        %v1725 = vpop.f32.mrf.mxu0
        %v1726 = vadd.f32 %v1495, %v1725
        %v1727 = vand.u32 %v644, 4294901760
        %1728 = vmatmul.f32.gmra.mxu0 %v1727
        %v1729 = vpop.f32.mrf.mxu0
        %v1730 = vadd.f32 %v1501, %v1729
        %v1731 = vand.u32 %v645, 4294901760
        %1732 = vmatmul.f32.gmra.mxu0 %v1731
        %v1733 = vpop.f32.mrf.mxu0
        %v1734 = vadd.f32 %v1507, %v1733
        %v1735 = vand.u32 %v646, 4294901760
        %1736 = vmatmul.f32.gmra.mxu0 %v1735
        %v1737 = vpop.f32.mrf.mxu0
        %v1738 = vadd.f32 %v1513, %v1737
        %v1739 = vand.u32 %v647, 4294901760
        %1740 = vmatmul.f32.gmra.mxu0 %v1739
        %v1741 = vpop.f32.mrf.mxu0
        %v1742 = vadd.f32 %v1519, %v1741
        %v1743 = vand.u32 %v648, 4294901760
        %1744 = vmatmul.f32.gmra.mxu0 %v1743
        %v1745 = vpop.f32.mrf.mxu0
        %v1746 = vadd.f32 %v1525, %v1745
        %v1747 = vand.u32 %v649, 4294901760
        %1748 = vmatmul.f32.gmra.mxu0 %v1747
        %v1749 = vpop.f32.mrf.mxu0
        %v1750 = vadd.f32 %v1531, %v1749
        %v1751 = vand.u32 %v650, 4294901760
        %1752 = vmatmul.f32.gmra.mxu0 %v1751
        %v1753 = vpop.f32.mrf.mxu0
        %v1754 = vadd.f32 %v1537, %v1753
        %v1755 = vand.u32 %v651, 4294901760
        %1756 = vmatmul.f32.gmra.mxu0 %v1755
        %v1757 = vpop.f32.mrf.mxu0
        %v1758 = vadd.f32 %v1543, %v1757
        %v1759 = vand.u32 %v652, 4294901760
        %1760 = vmatmul.f32.gmra.mxu0 %v1759
        %v1761 = vpop.f32.mrf.mxu0
        %v1762 = vadd.f32 %v1549, %v1761
        %v1763 = vand.u32 %v653, 4294901760
        %1764 = vmatmul.f32.gmra.mxu0 %v1763
        %v1765 = vpop.f32.mrf.mxu0
        %v1766 = vadd.f32 %v1555, %v1765
        %v1767 = vand.u32 %v654, 4294901760
        %1768 = vmatmul.f32.gmra.mxu0 %v1767
        %v1769 = vpop.f32.mrf.mxu0
        %v1770 = vadd.f32 %v1561, %v1769
        %v1771 = vand.u32 %v655, 4294901760
        %1772 = vmatmul.f32.gmra.mxu0 %v1771
        %v1773 = vpop.f32.mrf.mxu0
        %v1774 = vadd.f32 %v1567, %v1773
        %v1775 = vand.u32 %v656, 4294901760
        %1776 = vmatmul.f32.gmra.mxu0 %v1775
        %v1777 = vpop.f32.mrf.mxu0
        %v1778 = vadd.f32 %v1573, %v1777
        %v1779 = vand.u32 %v657, 4294901760
        %1780 = vmatmul.f32.gmra.mxu0 %v1779
        %v1781 = vpop.f32.mrf.mxu0
        %v1782 = vadd.f32 %v1579, %v1781
        %v1783 = vand.u32 %v658, 4294901760
        %1784 = vmatmul.f32.gmra.mxu0 %v1783
        %v1785 = vpop.f32.mrf.mxu0
        %v1786 = vadd.f32 %v1585, %v1785
        %v1787 = vand.u32 %v659, 4294901760
        %1788 = vmatmul.f32.gmra.mxu0 %v1787
        %v1789 = vpop.f32.mrf.mxu0
        %v1790 = vadd.f32 %v1591, %v1789
        %v1791 = vand.u32 %v660, 4294901760
        %1792 = vmatmul.f32.gmra.mxu0 %v1791
        %v1793 = vpop.f32.mrf.mxu0
        %v1794 = vadd.f32 %v1597, %v1793
        %v1795 = vand.u32 %v661, 4294901760
        %1796 = vmatmul.f32.gmra.mxu0 %v1795
        %v1797 = vpop.f32.mrf.mxu0
        %v1798 = vadd.f32 %v1603, %v1797
        %v1799 = vand.u32 %v662, 4294901760
        %1800 = vmatmul.f32.gmra.mxu0 %v1799
        %v1801 = vpop.f32.mrf.mxu0
        %v1802 = vadd.f32 %v1609, %v1801
        %1803 = vdwg.mxu0
        %v1804 = vand.u32 %v465, 4294901760
        %1805 = vmatpush.msra.mxu0 %v1804
        %v1806 = vand.u32 %v464, 4294901760
        %1807 = vmatpush.msra.mxu0 %v1806
        %v1808 = vand.u32 %v463, 4294901760
        %1809 = vmatpush.msra.mxu0 %v1808
        %v1810 = vand.u32 %v462, 4294901760
        %1811 = vmatpush.msra.mxu0 %v1810
        %v1812 = vand.u32 %v461, 4294901760
        %1813 = vmatpush.msra.mxu0 %v1812
        %v1814 = vand.u32 %v460, 4294901760
        %1815 = vmatpush.msra.mxu0 %v1814
        %v1816 = vand.u32 %v459, 4294901760
        %1817 = vmatpush.msra.mxu0 %v1816
        %v1818 = vand.u32 %v458, 4294901760
        %1819 = vmatpush.msra.mxu0 %v1818
        %v1820 = vand.u32 %v457, 4294901760
        %1821 = vmatpush.msra.mxu0 %v1820
        %v1822 = vand.u32 %v456, 4294901760
        %1823 = vmatpush.msra.mxu0 %v1822
        %v1824 = vand.u32 %v455, 4294901760
        %1825 = vmatpush.msra.mxu0 %v1824
        %v1826 = vand.u32 %v454, 4294901760
        %1827 = vmatpush.msra.mxu0 %v1826
        %v1828 = vand.u32 %v453, 4294901760
        %1829 = vmatpush.msra.mxu0 %v1828
        %v1830 = vand.u32 %v452, 4294901760
        %1831 = vmatpush.msra.mxu0 %v1830
        %v1832 = vand.u32 %v451, 4294901760
        %1833 = vmatpush.msra.mxu0 %v1832
        %v1834 = vand.u32 %v450, 4294901760
        %1835 = vmatpush.msra.mxu0 %v1834
        %v1836 = vand.u32 %v631, 4294901760
        %1837 = vmatmul.f32.gmra.mxu0 %v1836
        %v1838 = vpop.f32.mrf.mxu0
        %v1839 = vadd.f32 %v1678, %v1838
        %v1840 = vand.u32 %v632, 4294901760
        %1841 = vmatmul.f32.gmra.mxu0 %v1840
        %v1842 = vpop.f32.mrf.mxu0
        %v1843 = vadd.f32 %v1682, %v1842
        %v1844 = vand.u32 %v633, 4294901760
        %1845 = vmatmul.f32.gmra.mxu0 %v1844
        %v1846 = vpop.f32.mrf.mxu0
        %v1847 = vadd.f32 %v1686, %v1846
        %v1848 = vand.u32 %v634, 4294901760
        %1849 = vmatmul.f32.gmra.mxu0 %v1848
        %v1850 = vpop.f32.mrf.mxu0
        %v1851 = vadd.f32 %v1690, %v1850
        %v1852 = vand.u32 %v635, 4294901760
        %1853 = vmatmul.f32.gmra.mxu0 %v1852
        %v1854 = vpop.f32.mrf.mxu0
        %v1855 = vadd.f32 %v1694, %v1854
        %v1856 = vand.u32 %v636, 4294901760
        %1857 = vmatmul.f32.gmra.mxu0 %v1856
        %v1858 = vpop.f32.mrf.mxu0
        %v1859 = vadd.f32 %v1698, %v1858
        %v1860 = vand.u32 %v637, 4294901760
        %1861 = vmatmul.f32.gmra.mxu0 %v1860
        %v1862 = vpop.f32.mrf.mxu0
        %v1863 = vadd.f32 %v1702, %v1862
        %v1864 = vand.u32 %v638, 4294901760
        %1865 = vmatmul.f32.gmra.mxu0 %v1864
        %v1866 = vpop.f32.mrf.mxu0
        %v1867 = vadd.f32 %v1706, %v1866
        %v1868 = vand.u32 %v639, 4294901760
        %1869 = vmatmul.f32.gmra.mxu0 %v1868
        %v1870 = vpop.f32.mrf.mxu0
        %v1871 = vadd.f32 %v1710, %v1870
        %v1872 = vand.u32 %v640, 4294901760
        %1873 = vmatmul.f32.gmra.mxu0 %v1872
        %v1874 = vpop.f32.mrf.mxu0
        %v1875 = vadd.f32 %v1714, %v1874
        %v1876 = vand.u32 %v641, 4294901760
        %1877 = vmatmul.f32.gmra.mxu0 %v1876
        %v1878 = vpop.f32.mrf.mxu0
        %v1879 = vadd.f32 %v1718, %v1878
        %v1880 = vand.u32 %v642, 4294901760
        %1881 = vmatmul.f32.gmra.mxu0 %v1880
        %v1882 = vpop.f32.mrf.mxu0
        %v1883 = vadd.f32 %v1722, %v1882
        %v1884 = vand.u32 %v643, 4294901760
        %1885 = vmatmul.f32.gmra.mxu0 %v1884
        %v1886 = vpop.f32.mrf.mxu0
        %v1887 = vadd.f32 %v1726, %v1886
        %v1888 = vand.u32 %v644, 4294901760
        %1889 = vmatmul.f32.gmra.mxu0 %v1888
        %v1890 = vpop.f32.mrf.mxu0
        %v1891 = vadd.f32 %v1730, %v1890
        %v1892 = vand.u32 %v645, 4294901760
        %1893 = vmatmul.f32.gmra.mxu0 %v1892
        %v1894 = vpop.f32.mrf.mxu0
        %v1895 = vadd.f32 %v1734, %v1894
        %v1896 = vand.u32 %v646, 4294901760
        %1897 = vmatmul.f32.gmra.mxu0 %v1896
        %v1898 = vpop.f32.mrf.mxu0
        %v1899 = vadd.f32 %v1738, %v1898
        %v1900 = vand.u32 %v647, 4294901760
        %1901 = vmatmul.f32.gmra.mxu0 %v1900
        %v1902 = vpop.f32.mrf.mxu0
        %v1903 = vadd.f32 %v1742, %v1902
        %v1904 = vand.u32 %v648, 4294901760
        %1905 = vmatmul.f32.gmra.mxu0 %v1904
        %v1906 = vpop.f32.mrf.mxu0
        %v1907 = vadd.f32 %v1746, %v1906
        %v1908 = vand.u32 %v649, 4294901760
        %1909 = vmatmul.f32.gmra.mxu0 %v1908
        %v1910 = vpop.f32.mrf.mxu0
        %v1911 = vadd.f32 %v1750, %v1910
        %v1912 = vand.u32 %v650, 4294901760
        %1913 = vmatmul.f32.gmra.mxu0 %v1912
        %v1914 = vpop.f32.mrf.mxu0
        %v1915 = vadd.f32 %v1754, %v1914
        %v1916 = vand.u32 %v651, 4294901760
        %1917 = vmatmul.f32.gmra.mxu0 %v1916
        %v1918 = vpop.f32.mrf.mxu0
        %v1919 = vadd.f32 %v1758, %v1918
        %v1920 = vand.u32 %v652, 4294901760
        %1921 = vmatmul.f32.gmra.mxu0 %v1920
        %v1922 = vpop.f32.mrf.mxu0
        %v1923 = vadd.f32 %v1762, %v1922
        %v1924 = vand.u32 %v653, 4294901760
        %1925 = vmatmul.f32.gmra.mxu0 %v1924
        %v1926 = vpop.f32.mrf.mxu0
        %v1927 = vadd.f32 %v1766, %v1926
        %v1928 = vand.u32 %v654, 4294901760
        %1929 = vmatmul.f32.gmra.mxu0 %v1928
        %v1930 = vpop.f32.mrf.mxu0
        %v1931 = vadd.f32 %v1770, %v1930
        %v1932 = vand.u32 %v655, 4294901760
        %1933 = vmatmul.f32.gmra.mxu0 %v1932
        %v1934 = vpop.f32.mrf.mxu0
        %v1935 = vadd.f32 %v1774, %v1934
        %v1936 = vand.u32 %v656, 4294901760
        %1937 = vmatmul.f32.gmra.mxu0 %v1936
        %v1938 = vpop.f32.mrf.mxu0
        %v1939 = vadd.f32 %v1778, %v1938
        %v1940 = vand.u32 %v657, 4294901760
        %1941 = vmatmul.f32.gmra.mxu0 %v1940
        %v1942 = vpop.f32.mrf.mxu0
        %v1943 = vadd.f32 %v1782, %v1942
        %v1944 = vand.u32 %v658, 4294901760
        %1945 = vmatmul.f32.gmra.mxu0 %v1944
        %v1946 = vpop.f32.mrf.mxu0
        %v1947 = vadd.f32 %v1786, %v1946
        %v1948 = vand.u32 %v659, 4294901760
        %1949 = vmatmul.f32.gmra.mxu0 %v1948
        %v1950 = vpop.f32.mrf.mxu0
        %v1951 = vadd.f32 %v1790, %v1950
        %v1952 = vand.u32 %v660, 4294901760
        %1953 = vmatmul.f32.gmra.mxu0 %v1952
        %v1954 = vpop.f32.mrf.mxu0
        %v1955 = vadd.f32 %v1794, %v1954
        %v1956 = vand.u32 %v661, 4294901760
        %1957 = vmatmul.f32.gmra.mxu0 %v1956
        %v1958 = vpop.f32.mrf.mxu0
        %v1959 = vadd.f32 %v1798, %v1958
        %v1960 = vand.u32 %v662, 4294901760
        %1961 = vmatmul.f32.gmra.mxu0 %v1960
        %v1962 = vpop.f32.mrf.mxu0
        %v1963 = vadd.f32 %v1802, %v1962
        %1964 = vdwg.mxu0
        %v1965 = vsub.f32 0.0, %v1839
        %v1966 = vsub.f32 0.0, %v1843
        %v1967 = vsub.f32 0.0, %v1847
        %v1968 = vsub.f32 0.0, %v1851
        %v1969 = vsub.f32 0.0, %v1855
        %v1970 = vsub.f32 0.0, %v1859
        %v1971 = vsub.f32 0.0, %v1863
        %v1972 = vsub.f32 0.0, %v1867
        %v1973 = vsub.f32 0.0, %v1871
        %v1974 = vsub.f32 0.0, %v1875
        %v1975 = vsub.f32 0.0, %v1879
        %v1976 = vsub.f32 0.0, %v1883
        %v1977 = vsub.f32 0.0, %v1887
        %v1978 = vsub.f32 0.0, %v1891
        %v1979 = vsub.f32 0.0, %v1895
        %v1980 = vsub.f32 0.0, %v1899
        %v1981 = vsub.f32 0.0, %v1903
        %v1982 = vsub.f32 0.0, %v1907
        %v1983 = vsub.f32 0.0, %v1911
        %v1984 = vsub.f32 0.0, %v1915
        %v1985 = vsub.f32 0.0, %v1919
        %v1986 = vsub.f32 0.0, %v1923
        %v1987 = vsub.f32 0.0, %v1927
        %v1988 = vsub.f32 0.0, %v1931
        %v1989 = vsub.f32 0.0, %v1935
        %v1990 = vsub.f32 0.0, %v1939
        %v1991 = vsub.f32 0.0, %v1943
        %v1992 = vsub.f32 0.0, %v1947
        %v1993 = vsub.f32 0.0, %v1951
        %v1994 = vsub.f32 0.0, %v1955
        %v1995 = vsub.f32 0.0, %v1959
        %v1996 = vsub.f32 0.0, %v1963
        %v1997 = vmul.f32 %v1965, 1.442695
        %v1998 = vpow.pop %v1997
        %v1999 = vmul.f32 %v1966, 1.442695
        %v2000 = vpow.pop %v1999
        %v2001 = vmul.f32 %v1967, 1.442695
        %v2002 = vpow.pop %v2001
        %v2003 = vmul.f32 %v1968, 1.442695
        %v2004 = vpow.pop %v2003
        %v2005 = vmul.f32 %v1969, 1.442695
        %v2006 = vpow.pop %v2005
        %v2007 = vmul.f32 %v1970, 1.442695
        %v2008 = vpow.pop %v2007
        %v2009 = vmul.f32 %v1971, 1.442695
        %v2010 = vpow.pop %v2009
        %v2011 = vmul.f32 %v1972, 1.442695
        %v2012 = vpow.pop %v2011
        %v2013 = vmul.f32 %v1973, 1.442695
        %v2014 = vpow.pop %v2013
        %v2015 = vmul.f32 %v1974, 1.442695
        %v2016 = vpow.pop %v2015
        %v2017 = vmul.f32 %v1975, 1.442695
        %v2018 = vpow.pop %v2017
        %v2019 = vmul.f32 %v1976, 1.442695
        %v2020 = vpow.pop %v2019
        %v2021 = vmul.f32 %v1977, 1.442695
        %v2022 = vpow.pop %v2021
        %v2023 = vmul.f32 %v1978, 1.442695
        %v2024 = vpow.pop %v2023
        %v2025 = vmul.f32 %v1979, 1.442695
        %v2026 = vpow.pop %v2025
        %v2027 = vmul.f32 %v1980, 1.442695
        %v2028 = vpow.pop %v2027
        %v2029 = vmul.f32 %v1981, 1.442695
        %v2030 = vpow.pop %v2029
        %v2031 = vmul.f32 %v1982, 1.442695
        %v2032 = vpow.pop %v2031
        %v2033 = vmul.f32 %v1983, 1.442695
        %v2034 = vpow.pop %v2033
        %v2035 = vmul.f32 %v1984, 1.442695
        %v2036 = vpow.pop %v2035
        %v2037 = vmul.f32 %v1985, 1.442695
        %v2038 = vpow.pop %v2037
        %v2039 = vmul.f32 %v1986, 1.442695
        %v2040 = vpow.pop %v2039
        %v2041 = vmul.f32 %v1987, 1.442695
        %v2042 = vpow.pop %v2041
        %v2043 = vmul.f32 %v1988, 1.442695
        %v2044 = vpow.pop %v2043
        %v2045 = vmul.f32 %v1989, 1.442695
        %v2046 = vpow.pop %v2045
        %v2047 = vmul.f32 %v1990, 1.442695
        %v2048 = vpow.pop %v2047
        %v2049 = vmul.f32 %v1991, 1.442695
        %v2050 = vpow.pop %v2049
        %v2051 = vmul.f32 %v1992, 1.442695
        %v2052 = vpow.pop %v2051
        %v2053 = vmul.f32 %v1993, 1.442695
        %v2054 = vpow.pop %v2053
        %v2055 = vmul.f32 %v1994, 1.442695
        %v2056 = vpow.pop %v2055
        %v2057 = vmul.f32 %v1995, 1.442695
        %v2058 = vpow.pop %v2057
        %v2059 = vmul.f32 %v1996, 1.442695
        %v2060 = vpow.pop %v2059
        %v2061 = vsub.f32 1.0, %v1998
        %v2062 = vsub.f32 1.0, %v2000
        %v2063 = vsub.f32 1.0, %v2002
        %v2064 = vsub.f32 1.0, %v2004
        %v2065 = vsub.f32 1.0, %v2006
        %v2066 = vsub.f32 1.0, %v2008
        %v2067 = vsub.f32 1.0, %v2010
        %v2068 = vsub.f32 1.0, %v2012
        %v2069 = vsub.f32 1.0, %v2014
        %v2070 = vsub.f32 1.0, %v2016
        %v2071 = vsub.f32 1.0, %v2018
        %v2072 = vsub.f32 1.0, %v2020
        %v2073 = vsub.f32 1.0, %v2022
        %v2074 = vsub.f32 1.0, %v2024
        %v2075 = vsub.f32 1.0, %v2026
        %v2076 = vsub.f32 1.0, %v2028
        %v2077 = vsub.f32 1.0, %v2030
        %v2078 = vsub.f32 1.0, %v2032
        %v2079 = vsub.f32 1.0, %v2034
        %v2080 = vsub.f32 1.0, %v2036
        %v2081 = vsub.f32 1.0, %v2038
        %v2082 = vsub.f32 1.0, %v2040
        %v2083 = vsub.f32 1.0, %v2042
        %v2084 = vsub.f32 1.0, %v2044
        %v2085 = vsub.f32 1.0, %v2046
        %v2086 = vsub.f32 1.0, %v2048
        %v2087 = vsub.f32 1.0, %v2050
        %v2088 = vsub.f32 1.0, %v2052
        %v2089 = vsub.f32 1.0, %v2054
        %v2090 = vsub.f32 1.0, %v2056
        %v2091 = vsub.f32 1.0, %v2058
        %v2092 = vsub.f32 1.0, %v2060
        %vm2093 = vcmp.lt.s32.totalorder %v467, 1
        %2094 = vrot.lane.b32.xlu0 %v1998, 1
        %v2095 = vpop.permute.xlu0 %2094
        %2096 = vrot.lane.b32.xlu0 %v2000, 1
        %v2097 = vpop.permute.xlu0 %2096
        %2098 = vrot.lane.b32.xlu0 %v2002, 1
        %v2099 = vpop.permute.xlu0 %2098
        %2100 = vrot.lane.b32.xlu0 %v2004, 1
        %v2101 = vpop.permute.xlu0 %2100
        %2102 = vrot.lane.b32.xlu0 %v2006, 1
        %v2103 = vpop.permute.xlu0 %2102
        %2104 = vrot.lane.b32.xlu0 %v2008, 1
        %v2105 = vpop.permute.xlu0 %2104
        %2106 = vrot.lane.b32.xlu0 %v2010, 1
        %v2107 = vpop.permute.xlu0 %2106
        %2108 = vrot.lane.b32.xlu0 %v2012, 1
        %v2109 = vpop.permute.xlu0 %2108
        %2110 = vrot.lane.b32.xlu0 %v2014, 1
        %v2111 = vpop.permute.xlu0 %2110
        %2112 = vrot.lane.b32.xlu0 %v2016, 1
        %v2113 = vpop.permute.xlu0 %2112
        %2114 = vrot.lane.b32.xlu0 %v2018, 1
        %v2115 = vpop.permute.xlu0 %2114
        %2116 = vrot.lane.b32.xlu0 %v2020, 1
        %v2117 = vpop.permute.xlu0 %2116
        %2118 = vrot.lane.b32.xlu0 %v2022, 1
        %v2119 = vpop.permute.xlu0 %2118
        %2120 = vrot.lane.b32.xlu0 %v2024, 1
        %v2121 = vpop.permute.xlu0 %2120
        %2122 = vrot.lane.b32.xlu0 %v2026, 1
        %v2123 = vpop.permute.xlu0 %2122
        %2124 = vrot.lane.b32.xlu0 %v2028, 1
        %v2125 = vpop.permute.xlu0 %2124
        %2126 = vrot.lane.b32.xlu0 %v2030, 1
        %v2127 = vpop.permute.xlu0 %2126
        %2128 = vrot.lane.b32.xlu0 %v2032, 1
        %v2129 = vpop.permute.xlu0 %2128
        %2130 = vrot.lane.b32.xlu0 %v2034, 1
        %v2131 = vpop.permute.xlu0 %2130
        %2132 = vrot.lane.b32.xlu0 %v2036, 1
        %v2133 = vpop.permute.xlu0 %2132
        %2134 = vrot.lane.b32.xlu0 %v2038, 1
        %v2135 = vpop.permute.xlu0 %2134
        %2136 = vrot.lane.b32.xlu0 %v2040, 1
        %v2137 = vpop.permute.xlu0 %2136
        %2138 = vrot.lane.b32.xlu0 %v2042, 1
        %v2139 = vpop.permute.xlu0 %2138
        %2140 = vrot.lane.b32.xlu0 %v2044, 1
        %v2141 = vpop.permute.xlu0 %2140
        %2142 = vrot.lane.b32.xlu0 %v2046, 1
        %v2143 = vpop.permute.xlu0 %2142
        %2144 = vrot.lane.b32.xlu0 %v2048, 1
        %v2145 = vpop.permute.xlu0 %2144
        %2146 = vrot.lane.b32.xlu0 %v2050, 1
        %v2147 = vpop.permute.xlu0 %2146
        %2148 = vrot.lane.b32.xlu0 %v2052, 1
        %v2149 = vpop.permute.xlu0 %2148
        %2150 = vrot.lane.b32.xlu0 %v2054, 1
        %v2151 = vpop.permute.xlu0 %2150
        %2152 = vrot.lane.b32.xlu0 %v2056, 1
        %v2153 = vpop.permute.xlu0 %2152
        %2154 = vrot.lane.b32.xlu0 %v2058, 1
        %v2155 = vpop.permute.xlu0 %2154
        %2156 = vrot.lane.b32.xlu0 %v2060, 1
        %v2157 = vpop.permute.xlu0 %2156
        %v2158 = vsel %vm2093, 1, 0
        %vm2159 = vcmp.eq.s32.totalorder %v2158, 1
        %v2160 = vsel %vm2159, 1.0, %v2095
        %v2161 = vsel %vm2159, 1.0, %v2097
        %v2162 = vsel %vm2159, 1.0, %v2099
        %v2163 = vsel %vm2159, 1.0, %v2101
        %v2164 = vsel %vm2159, 1.0, %v2103
        %v2165 = vsel %vm2159, 1.0, %v2105
        %v2166 = vsel %vm2159, 1.0, %v2107
        %v2167 = vsel %vm2159, 1.0, %v2109
        %v2168 = vsel %vm2159, 1.0, %v2111
        %v2169 = vsel %vm2159, 1.0, %v2113
        %v2170 = vsel %vm2159, 1.0, %v2115
        %v2171 = vsel %vm2159, 1.0, %v2117
        %v2172 = vsel %vm2159, 1.0, %v2119
        %v2173 = vsel %vm2159, 1.0, %v2121
        %v2174 = vsel %vm2159, 1.0, %v2123
        %v2175 = vsel %vm2159, 1.0, %v2125
        %v2176 = vsel %vm2159, 1.0, %v2127
        %v2177 = vsel %vm2159, 1.0, %v2129
        %v2178 = vsel %vm2159, 1.0, %v2131
        %v2179 = vsel %vm2159, 1.0, %v2133
        %v2180 = vsel %vm2159, 1.0, %v2135
        %v2181 = vsel %vm2159, 1.0, %v2137
        %v2182 = vsel %vm2159, 1.0, %v2139
        %v2183 = vsel %vm2159, 1.0, %v2141
        %v2184 = vsel %vm2159, 1.0, %v2143
        %v2185 = vsel %vm2159, 1.0, %v2145
        %v2186 = vsel %vm2159, 1.0, %v2147
        %v2187 = vsel %vm2159, 1.0, %v2149
        %v2188 = vsel %vm2159, 1.0, %v2151
        %v2189 = vsel %vm2159, 1.0, %v2153
        %v2190 = vsel %vm2159, 1.0, %v2155
        %v2191 = vsel %vm2159, 1.0, %v2157
        %v2192 = vsub.f32 %v2160, %v1998
        %v2193 = vsub.f32 %v2161, %v2000
        %v2194 = vsub.f32 %v2162, %v2002
        %v2195 = vsub.f32 %v2163, %v2004
        %v2196 = vsub.f32 %v2164, %v2006
        %v2197 = vsub.f32 %v2165, %v2008
        %v2198 = vsub.f32 %v2166, %v2010
        %v2199 = vsub.f32 %v2167, %v2012
        %v2200 = vsub.f32 %v2168, %v2014
        %v2201 = vsub.f32 %v2169, %v2016
        %v2202 = vsub.f32 %v2170, %v2018
        %v2203 = vsub.f32 %v2171, %v2020
        %v2204 = vsub.f32 %v2172, %v2022
        %v2205 = vsub.f32 %v2173, %v2024
        %v2206 = vsub.f32 %v2174, %v2026
        %v2207 = vsub.f32 %v2175, %v2028
        %v2208 = vsub.f32 %v2176, %v2030
        %v2209 = vsub.f32 %v2177, %v2032
        %v2210 = vsub.f32 %v2178, %v2034
        %v2211 = vsub.f32 %v2179, %v2036
        %v2212 = vsub.f32 %v2180, %v2038
        %v2213 = vsub.f32 %v2181, %v2040
        %v2214 = vsub.f32 %v2182, %v2042
        %v2215 = vsub.f32 %v2183, %v2044
        %v2216 = vsub.f32 %v2184, %v2046
        %v2217 = vsub.f32 %v2185, %v2048
        %v2218 = vsub.f32 %v2186, %v2050
        %v2219 = vsub.f32 %v2187, %v2052
        %v2220 = vsub.f32 %v2188, %v2054
        %v2221 = vsub.f32 %v2189, %v2056
        %v2222 = vsub.f32 %v2190, %v2058
        %v2223 = vsub.f32 %v2191, %v2060
        %v2224 = vmul.f32 %v2192, %v418
        %v2225 = vmul.f32 %v2193, %v419
        %v2226 = vmul.f32 %v2194, %v420
        %v2227 = vmul.f32 %v2195, %v421
        %v2228 = vmul.f32 %v2196, %v422
        %v2229 = vmul.f32 %v2197, %v423
        %v2230 = vmul.f32 %v2198, %v424
        %v2231 = vmul.f32 %v2199, %v425
        %v2232 = vmul.f32 %v2200, %v426
        %v2233 = vmul.f32 %v2201, %v427
        %v2234 = vmul.f32 %v2202, %v428
        %v2235 = vmul.f32 %v2203, %v429
        %v2236 = vmul.f32 %v2204, %v430
        %v2237 = vmul.f32 %v2205, %v431
        %v2238 = vmul.f32 %v2206, %v432
        %v2239 = vmul.f32 %v2207, %v433
        %v2240 = vmul.f32 %v2208, %v434
        %v2241 = vmul.f32 %v2209, %v435
        %v2242 = vmul.f32 %v2210, %v436
        %v2243 = vmul.f32 %v2211, %v437
        %v2244 = vmul.f32 %v2212, %v438
        %v2245 = vmul.f32 %v2213, %v439
        %v2246 = vmul.f32 %v2214, %v440
        %v2247 = vmul.f32 %v2215, %v441
        %v2248 = vmul.f32 %v2216, %v442
        %v2249 = vmul.f32 %v2217, %v443
        %v2250 = vmul.f32 %v2218, %v444
        %v2251 = vmul.f32 %v2219, %v445
        %v2252 = vmul.f32 %v2220, %v446
        %v2253 = vmul.f32 %v2221, %v447
        %v2254 = vmul.f32 %v2222, %v448
        %v2255 = vmul.f32 %v2223, %v449
        %2256 = vadd.xlane.f32.xlu0 %v2224
        %v2257 = vpop.xlane.xlu0 %2256
        %2258 = vadd.xlane.f32.xlu0 %v2225
        %v2259 = vpop.xlane.xlu0 %2258
        %2260 = vadd.xlane.f32.xlu0 %v2226
        %v2261 = vpop.xlane.xlu0 %2260
        %2262 = vadd.xlane.f32.xlu0 %v2227
        %v2263 = vpop.xlane.xlu0 %2262
        %2264 = vadd.xlane.f32.xlu0 %v2228
        %v2265 = vpop.xlane.xlu0 %2264
        %2266 = vadd.xlane.f32.xlu0 %v2229
        %v2267 = vpop.xlane.xlu0 %2266
        %2268 = vadd.xlane.f32.xlu0 %v2230
        %v2269 = vpop.xlane.xlu0 %2268
        %2270 = vadd.xlane.f32.xlu0 %v2231
        %v2271 = vpop.xlane.xlu0 %2270
        %2272 = vadd.xlane.f32.xlu0 %v2232
        %v2273 = vpop.xlane.xlu0 %2272
        %2274 = vadd.xlane.f32.xlu0 %v2233
        %v2275 = vpop.xlane.xlu0 %2274
        %2276 = vadd.xlane.f32.xlu0 %v2234
        %v2277 = vpop.xlane.xlu0 %2276
        %2278 = vadd.xlane.f32.xlu0 %v2235
        %v2279 = vpop.xlane.xlu0 %2278
        %2280 = vadd.xlane.f32.xlu0 %v2236
        %v2281 = vpop.xlane.xlu0 %2280
        %2282 = vadd.xlane.f32.xlu0 %v2237
        %v2283 = vpop.xlane.xlu0 %2282
        %2284 = vadd.xlane.f32.xlu0 %v2238
        %v2285 = vpop.xlane.xlu0 %2284
        %2286 = vadd.xlane.f32.xlu0 %v2239
        %v2287 = vpop.xlane.xlu0 %2286
        %2288 = vadd.xlane.f32.xlu0 %v2240
        %v2289 = vpop.xlane.xlu0 %2288
        %2290 = vadd.xlane.f32.xlu0 %v2241
        %v2291 = vpop.xlane.xlu0 %2290
        %2292 = vadd.xlane.f32.xlu0 %v2242
        %v2293 = vpop.xlane.xlu0 %2292
        %2294 = vadd.xlane.f32.xlu0 %v2243
        %v2295 = vpop.xlane.xlu0 %2294
        %2296 = vadd.xlane.f32.xlu0 %v2244
        %v2297 = vpop.xlane.xlu0 %2296
        %2298 = vadd.xlane.f32.xlu0 %v2245
        %v2299 = vpop.xlane.xlu0 %2298
        %2300 = vadd.xlane.f32.xlu0 %v2246
        %v2301 = vpop.xlane.xlu0 %2300
        %2302 = vadd.xlane.f32.xlu0 %v2247
        %v2303 = vpop.xlane.xlu0 %2302
        %2304 = vadd.xlane.f32.xlu0 %v2248
        %v2305 = vpop.xlane.xlu0 %2304
        %2306 = vadd.xlane.f32.xlu0 %v2249
        %v2307 = vpop.xlane.xlu0 %2306
        %2308 = vadd.xlane.f32.xlu0 %v2250
        %v2309 = vpop.xlane.xlu0 %2308
        %2310 = vadd.xlane.f32.xlu0 %v2251
        %v2311 = vpop.xlane.xlu0 %2310
        %2312 = vadd.xlane.f32.xlu0 %v2252
        %v2313 = vpop.xlane.xlu0 %2312
        %2314 = vadd.xlane.f32.xlu0 %v2253
        %v2315 = vpop.xlane.xlu0 %2314
        %2316 = vadd.xlane.f32.xlu0 %v2254
        %v2317 = vpop.xlane.xlu0 %2316
        %2318 = vadd.xlane.f32.xlu0 %v2255
        %v2319 = vpop.xlane.xlu0 %2318
        %v2320 = vld [vmem:[%s318] sm:$0xff]
        %v2321 = vld [vmem:[%s318 + $0x8] sm:$0xff]
        %v2322 = vld [vmem:[%s318 + $0x10] sm:$0xff]
        %v2323 = vld [vmem:[%s318 + $0x18] sm:$0xff]
        %v2324 = vld [vmem:[%s318 + $0x20] sm:$0xff]
        %v2325 = vld [vmem:[%s318 + $0x28] sm:$0xff]
        %v2326 = vld [vmem:[%s318 + $0x30] sm:$0xff]
        %v2327 = vld [vmem:[%s318 + $0x38] sm:$0xff]
        %v2328 = vld [vmem:[%s318 + $0x40] sm:$0xff]
        %v2329 = vld [vmem:[%s318 + $0x48] sm:$0xff]
        %v2330 = vld [vmem:[%s318 + $0x50] sm:$0xff]
        %v2331 = vld [vmem:[%s318 + $0x58] sm:$0xff]
        %v2332 = vld [vmem:[%s318 + $0x60] sm:$0xff]
        %v2333 = vld [vmem:[%s318 + $0x68] sm:$0xff]
        %v2334 = vld [vmem:[%s318 + $0x70] sm:$0xff]
        %v2335 = vld [vmem:[%s318 + $0x78] sm:$0xff]
        %v2336 = vld [vmem:[%s318 + $0x80] sm:$0xff]
        %v2337 = vld [vmem:[%s318 + $0x88] sm:$0xff]
        %v2338 = vld [vmem:[%s318 + $0x90] sm:$0xff]
        %v2339 = vld [vmem:[%s318 + $0x98] sm:$0xff]
        %v2340 = vld [vmem:[%s318 + $0xa0] sm:$0xff]
        %v2341 = vld [vmem:[%s318 + $0xa8] sm:$0xff]
        %v2342 = vld [vmem:[%s318 + $0xb0] sm:$0xff]
        %v2343 = vld [vmem:[%s318 + $0xb8] sm:$0xff]
        %v2344 = vld [vmem:[%s318 + $0xc0] sm:$0xff]
        %v2345 = vld [vmem:[%s318 + $0xc8] sm:$0xff]
        %v2346 = vld [vmem:[%s318 + $0xd0] sm:$0xff]
        %v2347 = vld [vmem:[%s318 + $0xd8] sm:$0xff]
        %v2348 = vld [vmem:[%s318 + $0xe0] sm:$0xff]
        %v2349 = vld [vmem:[%s318 + $0xe8] sm:$0xff]
        %v2350 = vld [vmem:[%s318 + $0xf0] sm:$0xff]
        %v2351 = vld [vmem:[%s318 + $0xf8] sm:$0xff]
        %v2352 = vmul.f32 %v2192, %v2320
        %v2353 = vmul.f32 %v2193, %v2321
        %v2354 = vmul.f32 %v2194, %v2322
        %v2355 = vmul.f32 %v2195, %v2323
        %v2356 = vmul.f32 %v2196, %v2324
        %v2357 = vmul.f32 %v2197, %v2325
        %v2358 = vmul.f32 %v2198, %v2326
        %v2359 = vmul.f32 %v2199, %v2327
        %v2360 = vmul.f32 %v2200, %v2328
        %v2361 = vmul.f32 %v2201, %v2329
        %v2362 = vmul.f32 %v2202, %v2330
        %v2363 = vmul.f32 %v2203, %v2331
        %v2364 = vmul.f32 %v2204, %v2332
        %v2365 = vmul.f32 %v2205, %v2333
        %v2366 = vmul.f32 %v2206, %v2334
        %v2367 = vmul.f32 %v2207, %v2335
        %v2368 = vmul.f32 %v2208, %v2336
        %v2369 = vmul.f32 %v2209, %v2337
        %v2370 = vmul.f32 %v2210, %v2338
        %v2371 = vmul.f32 %v2211, %v2339
        %v2372 = vmul.f32 %v2212, %v2340
        %v2373 = vmul.f32 %v2213, %v2341
        %v2374 = vmul.f32 %v2214, %v2342
        %v2375 = vmul.f32 %v2215, %v2343
        %v2376 = vmul.f32 %v2216, %v2344
        %v2377 = vmul.f32 %v2217, %v2345
        %v2378 = vmul.f32 %v2218, %v2346
        %v2379 = vmul.f32 %v2219, %v2347
        %v2380 = vmul.f32 %v2220, %v2348
        %v2381 = vmul.f32 %v2221, %v2349
        %v2382 = vmul.f32 %v2222, %v2350
        %v2383 = vmul.f32 %v2223, %v2351
        %2384 = vadd.xlane.f32.xlu0 %v2352
        %v2385 = vpop.xlane.xlu0 %2384
        %2386 = vadd.xlane.f32.xlu0 %v2353
        %v2387 = vpop.xlane.xlu0 %2386
        %2388 = vadd.xlane.f32.xlu0 %v2354
        %v2389 = vpop.xlane.xlu0 %2388
        %2390 = vadd.xlane.f32.xlu0 %v2355
        %v2391 = vpop.xlane.xlu0 %2390
        %2392 = vadd.xlane.f32.xlu0 %v2356
        %v2393 = vpop.xlane.xlu0 %2392
        %2394 = vadd.xlane.f32.xlu0 %v2357
        %v2395 = vpop.xlane.xlu0 %2394
        %2396 = vadd.xlane.f32.xlu0 %v2358
        %v2397 = vpop.xlane.xlu0 %2396
        %2398 = vadd.xlane.f32.xlu0 %v2359
        %v2399 = vpop.xlane.xlu0 %2398
        %2400 = vadd.xlane.f32.xlu0 %v2360
        %v2401 = vpop.xlane.xlu0 %2400
        %2402 = vadd.xlane.f32.xlu0 %v2361
        %v2403 = vpop.xlane.xlu0 %2402
        %2404 = vadd.xlane.f32.xlu0 %v2362
        %v2405 = vpop.xlane.xlu0 %2404
        %2406 = vadd.xlane.f32.xlu0 %v2363
        %v2407 = vpop.xlane.xlu0 %2406
        %2408 = vadd.xlane.f32.xlu0 %v2364
        %v2409 = vpop.xlane.xlu0 %2408
        %2410 = vadd.xlane.f32.xlu0 %v2365
        %v2411 = vpop.xlane.xlu0 %2410
        %2412 = vadd.xlane.f32.xlu0 %v2366
        %v2413 = vpop.xlane.xlu0 %2412
        %2414 = vadd.xlane.f32.xlu0 %v2367
        %v2415 = vpop.xlane.xlu0 %2414
        %2416 = vadd.xlane.f32.xlu0 %v2368
        %v2417 = vpop.xlane.xlu0 %2416
        %2418 = vadd.xlane.f32.xlu0 %v2369
        %v2419 = vpop.xlane.xlu0 %2418
        %2420 = vadd.xlane.f32.xlu0 %v2370
        %v2421 = vpop.xlane.xlu0 %2420
        %2422 = vadd.xlane.f32.xlu0 %v2371
        %v2423 = vpop.xlane.xlu0 %2422
        %2424 = vadd.xlane.f32.xlu0 %v2372
        %v2425 = vpop.xlane.xlu0 %2424
        %2426 = vadd.xlane.f32.xlu0 %v2373
        %v2427 = vpop.xlane.xlu0 %2426
        %2428 = vadd.xlane.f32.xlu0 %v2374
        %v2429 = vpop.xlane.xlu0 %2428
        %2430 = vadd.xlane.f32.xlu0 %v2375
        %v2431 = vpop.xlane.xlu0 %2430
        %2432 = vadd.xlane.f32.xlu0 %v2376
        %v2433 = vpop.xlane.xlu0 %2432
        %2434 = vadd.xlane.f32.xlu0 %v2377
        %v2435 = vpop.xlane.xlu0 %2434
        %2436 = vadd.xlane.f32.xlu0 %v2378
        %v2437 = vpop.xlane.xlu0 %2436
        %2438 = vadd.xlane.f32.xlu0 %v2379
        %v2439 = vpop.xlane.xlu0 %2438
        %2440 = vadd.xlane.f32.xlu0 %v2380
        %v2441 = vpop.xlane.xlu0 %2440
        %2442 = vadd.xlane.f32.xlu0 %v2381
        %v2443 = vpop.xlane.xlu0 %2442
        %2444 = vadd.xlane.f32.xlu0 %v2382
        %v2445 = vpop.xlane.xlu0 %2444
        %2446 = vadd.xlane.f32.xlu0 %v2383
        %v2447 = vpop.xlane.xlu0 %2446
        %s2448 = scalar_lea.vmem %s318, 256 [#allocation5]
        %v2449 = vld [vmem:[%s2448] sm:$0xff]
        %v2450 = vld [vmem:[%s2448 + $0x8] sm:$0xff]
        %v2451 = vld [vmem:[%s2448 + $0x10] sm:$0xff]
        %v2452 = vld [vmem:[%s2448 + $0x18] sm:$0xff]
        %v2453 = vld [vmem:[%s2448 + $0x20] sm:$0xff]
        %v2454 = vld [vmem:[%s2448 + $0x28] sm:$0xff]
        %v2455 = vld [vmem:[%s2448 + $0x30] sm:$0xff]
        %v2456 = vld [vmem:[%s2448 + $0x38] sm:$0xff]
        %v2457 = vld [vmem:[%s2448 + $0x40] sm:$0xff]
        %v2458 = vld [vmem:[%s2448 + $0x48] sm:$0xff]
        %v2459 = vld [vmem:[%s2448 + $0x50] sm:$0xff]
        %v2460 = vld [vmem:[%s2448 + $0x58] sm:$0xff]
        %v2461 = vld [vmem:[%s2448 + $0x60] sm:$0xff]
        %v2462 = vld [vmem:[%s2448 + $0x68] sm:$0xff]
        %v2463 = vld [vmem:[%s2448 + $0x70] sm:$0xff]
        %v2464 = vld [vmem:[%s2448 + $0x78] sm:$0xff]
        %v2465 = vld [vmem:[%s2448 + $0x80] sm:$0xff]
        %v2466 = vld [vmem:[%s2448 + $0x88] sm:$0xff]
        %v2467 = vld [vmem:[%s2448 + $0x90] sm:$0xff]
        %v2468 = vld [vmem:[%s2448 + $0x98] sm:$0xff]
        %v2469 = vld [vmem:[%s2448 + $0xa0] sm:$0xff]
        %v2470 = vld [vmem:[%s2448 + $0xa8] sm:$0xff]
        %v2471 = vld [vmem:[%s2448 + $0xb0] sm:$0xff]
        %v2472 = vld [vmem:[%s2448 + $0xb8] sm:$0xff]
        %v2473 = vld [vmem:[%s2448 + $0xc0] sm:$0xff]
        %v2474 = vld [vmem:[%s2448 + $0xc8] sm:$0xff]
        %v2475 = vld [vmem:[%s2448 + $0xd0] sm:$0xff]
        %v2476 = vld [vmem:[%s2448 + $0xd8] sm:$0xff]
        %v2477 = vld [vmem:[%s2448 + $0xe0] sm:$0xff]
        %v2478 = vld [vmem:[%s2448 + $0xe8] sm:$0xff]
        %v2479 = vld [vmem:[%s2448 + $0xf0] sm:$0xff]
        %v2480 = vld [vmem:[%s2448 + $0xf8] sm:$0xff]
        %v2481 = vmul.f32 %v2192, %v2449
        %v2482 = vmul.f32 %v2193, %v2450
        %v2483 = vmul.f32 %v2194, %v2451
        %v2484 = vmul.f32 %v2195, %v2452
        %v2485 = vmul.f32 %v2196, %v2453
        %v2486 = vmul.f32 %v2197, %v2454
        %v2487 = vmul.f32 %v2198, %v2455
        %v2488 = vmul.f32 %v2199, %v2456
        %v2489 = vmul.f32 %v2200, %v2457
        %v2490 = vmul.f32 %v2201, %v2458
        %v2491 = vmul.f32 %v2202, %v2459
        %v2492 = vmul.f32 %v2203, %v2460
        %v2493 = vmul.f32 %v2204, %v2461
        %v2494 = vmul.f32 %v2205, %v2462
        %v2495 = vmul.f32 %v2206, %v2463
        %v2496 = vmul.f32 %v2207, %v2464
        %v2497 = vmul.f32 %v2208, %v2465
        %v2498 = vmul.f32 %v2209, %v2466
        %v2499 = vmul.f32 %v2210, %v2467
        %v2500 = vmul.f32 %v2211, %v2468
        %v2501 = vmul.f32 %v2212, %v2469
        %v2502 = vmul.f32 %v2213, %v2470
        %v2503 = vmul.f32 %v2214, %v2471
        %v2504 = vmul.f32 %v2215, %v2472
        %v2505 = vmul.f32 %v2216, %v2473
        %v2506 = vmul.f32 %v2217, %v2474
        %v2507 = vmul.f32 %v2218, %v2475
        %v2508 = vmul.f32 %v2219, %v2476
        %v2509 = vmul.f32 %v2220, %v2477
        %v2510 = vmul.f32 %v2221, %v2478
        %v2511 = vmul.f32 %v2222, %v2479
        %v2512 = vmul.f32 %v2223, %v2480
        %2513 = vadd.xlane.f32.xlu0 %v2481
        %v2514 = vpop.xlane.xlu0 %2513
        %2515 = vadd.xlane.f32.xlu0 %v2482
        %v2516 = vpop.xlane.xlu0 %2515
        %2517 = vadd.xlane.f32.xlu0 %v2483
        %v2518 = vpop.xlane.xlu0 %2517
        %2519 = vadd.xlane.f32.xlu0 %v2484
        %v2520 = vpop.xlane.xlu0 %2519
        %2521 = vadd.xlane.f32.xlu0 %v2485
        %v2522 = vpop.xlane.xlu0 %2521
        %2523 = vadd.xlane.f32.xlu0 %v2486
        %v2524 = vpop.xlane.xlu0 %2523
        %2525 = vadd.xlane.f32.xlu0 %v2487
        %v2526 = vpop.xlane.xlu0 %2525
        %2527 = vadd.xlane.f32.xlu0 %v2488
        %v2528 = vpop.xlane.xlu0 %2527
        %2529 = vadd.xlane.f32.xlu0 %v2489
        %v2530 = vpop.xlane.xlu0 %2529
        %2531 = vadd.xlane.f32.xlu0 %v2490
        %v2532 = vpop.xlane.xlu0 %2531
        %2533 = vadd.xlane.f32.xlu0 %v2491
        %v2534 = vpop.xlane.xlu0 %2533
        %2535 = vadd.xlane.f32.xlu0 %v2492
        %v2536 = vpop.xlane.xlu0 %2535
        %2537 = vadd.xlane.f32.xlu0 %v2493
        %v2538 = vpop.xlane.xlu0 %2537
        %2539 = vadd.xlane.f32.xlu0 %v2494
        %v2540 = vpop.xlane.xlu0 %2539
        %2541 = vadd.xlane.f32.xlu0 %v2495
        %v2542 = vpop.xlane.xlu0 %2541
        %2543 = vadd.xlane.f32.xlu0 %v2496
        %v2544 = vpop.xlane.xlu0 %2543
        %2545 = vadd.xlane.f32.xlu0 %v2497
        %v2546 = vpop.xlane.xlu0 %2545
        %2547 = vadd.xlane.f32.xlu0 %v2498
        %v2548 = vpop.xlane.xlu0 %2547
        %2549 = vadd.xlane.f32.xlu0 %v2499
        %v2550 = vpop.xlane.xlu0 %2549
        %2551 = vadd.xlane.f32.xlu0 %v2500
        %v2552 = vpop.xlane.xlu0 %2551
        %2553 = vadd.xlane.f32.xlu0 %v2501
        %v2554 = vpop.xlane.xlu0 %2553
        %2555 = vadd.xlane.f32.xlu0 %v2502
        %v2556 = vpop.xlane.xlu0 %2555
        %2557 = vadd.xlane.f32.xlu0 %v2503
        %v2558 = vpop.xlane.xlu0 %2557
        %2559 = vadd.xlane.f32.xlu0 %v2504
        %v2560 = vpop.xlane.xlu0 %2559
        %2561 = vadd.xlane.f32.xlu0 %v2505
        %v2562 = vpop.xlane.xlu0 %2561
        %2563 = vadd.xlane.f32.xlu0 %v2506
        %v2564 = vpop.xlane.xlu0 %2563
        %2565 = vadd.xlane.f32.xlu0 %v2507
        %v2566 = vpop.xlane.xlu0 %2565
        %2567 = vadd.xlane.f32.xlu0 %v2508
        %v2568 = vpop.xlane.xlu0 %2567
        %2569 = vadd.xlane.f32.xlu0 %v2509
        %v2570 = vpop.xlane.xlu0 %2569
        %2571 = vadd.xlane.f32.xlu0 %v2510
        %v2572 = vpop.xlane.xlu0 %2571
        %2573 = vadd.xlane.f32.xlu0 %v2511
        %v2574 = vpop.xlane.xlu0 %2573
        %2575 = vadd.xlane.f32.xlu0 %v2512
        %v2576 = vpop.xlane.xlu0 %2575
        %s2577 = scalar_lea.vmem %s318, 512 [#allocation5]
        %v2578 = vld [vmem:[%s2577] sm:$0xff]
        %v2579 = vld [vmem:[%s2577 + $0x8] sm:$0xff]
        %v2580 = vld [vmem:[%s2577 + $0x10] sm:$0xff]
        %v2581 = vld [vmem:[%s2577 + $0x18] sm:$0xff]
        %v2582 = vld [vmem:[%s2577 + $0x20] sm:$0xff]
        %v2583 = vld [vmem:[%s2577 + $0x28] sm:$0xff]
        %v2584 = vld [vmem:[%s2577 + $0x30] sm:$0xff]
        %v2585 = vld [vmem:[%s2577 + $0x38] sm:$0xff]
        %v2586 = vld [vmem:[%s2577 + $0x40] sm:$0xff]
        %v2587 = vld [vmem:[%s2577 + $0x48] sm:$0xff]
        %v2588 = vld [vmem:[%s2577 + $0x50] sm:$0xff]
        %v2589 = vld [vmem:[%s2577 + $0x58] sm:$0xff]
        %v2590 = vld [vmem:[%s2577 + $0x60] sm:$0xff]
        %v2591 = vld [vmem:[%s2577 + $0x68] sm:$0xff]
        %v2592 = vld [vmem:[%s2577 + $0x70] sm:$0xff]
        %v2593 = vld [vmem:[%s2577 + $0x78] sm:$0xff]
        %v2594 = vld [vmem:[%s2577 + $0x80] sm:$0xff]
        %v2595 = vld [vmem:[%s2577 + $0x88] sm:$0xff]
        %v2596 = vld [vmem:[%s2577 + $0x90] sm:$0xff]
        %v2597 = vld [vmem:[%s2577 + $0x98] sm:$0xff]
        %v2598 = vld [vmem:[%s2577 + $0xa0] sm:$0xff]
        %v2599 = vld [vmem:[%s2577 + $0xa8] sm:$0xff]
        %v2600 = vld [vmem:[%s2577 + $0xb0] sm:$0xff]
        %v2601 = vld [vmem:[%s2577 + $0xb8] sm:$0xff]
        %v2602 = vld [vmem:[%s2577 + $0xc0] sm:$0xff]
        %v2603 = vld [vmem:[%s2577 + $0xc8] sm:$0xff]
        %v2604 = vld [vmem:[%s2577 + $0xd0] sm:$0xff]
        %v2605 = vld [vmem:[%s2577 + $0xd8] sm:$0xff]
        %v2606 = vld [vmem:[%s2577 + $0xe0] sm:$0xff]
        %v2607 = vld [vmem:[%s2577 + $0xe8] sm:$0xff]
        %v2608 = vld [vmem:[%s2577 + $0xf0] sm:$0xff]
        %v2609 = vld [vmem:[%s2577 + $0xf8] sm:$0xff]
        %v2610 = vmul.f32 %v2192, %v2578
        %v2611 = vmul.f32 %v2193, %v2579
        %v2612 = vmul.f32 %v2194, %v2580
        %v2613 = vmul.f32 %v2195, %v2581
        %v2614 = vmul.f32 %v2196, %v2582
        %v2615 = vmul.f32 %v2197, %v2583
        %v2616 = vmul.f32 %v2198, %v2584
        %v2617 = vmul.f32 %v2199, %v2585
        %v2618 = vmul.f32 %v2200, %v2586
        %v2619 = vmul.f32 %v2201, %v2587
        %v2620 = vmul.f32 %v2202, %v2588
        %v2621 = vmul.f32 %v2203, %v2589
        %v2622 = vmul.f32 %v2204, %v2590
        %v2623 = vmul.f32 %v2205, %v2591
        %v2624 = vmul.f32 %v2206, %v2592
        %v2625 = vmul.f32 %v2207, %v2593
        %v2626 = vmul.f32 %v2208, %v2594
        %v2627 = vmul.f32 %v2209, %v2595
        %v2628 = vmul.f32 %v2210, %v2596
        %v2629 = vmul.f32 %v2211, %v2597
        %v2630 = vmul.f32 %v2212, %v2598
        %v2631 = vmul.f32 %v2213, %v2599
        %v2632 = vmul.f32 %v2214, %v2600
        %v2633 = vmul.f32 %v2215, %v2601
        %v2634 = vmul.f32 %v2216, %v2602
        %v2635 = vmul.f32 %v2217, %v2603
        %v2636 = vmul.f32 %v2218, %v2604
        %v2637 = vmul.f32 %v2219, %v2605
        %v2638 = vmul.f32 %v2220, %v2606
        %v2639 = vmul.f32 %v2221, %v2607
        %v2640 = vmul.f32 %v2222, %v2608
        %v2641 = vmul.f32 %v2223, %v2609
        %2642 = vadd.xlane.f32.xlu0 %v2610
        %v2643 = vpop.xlane.xlu0 %2642
        %2644 = vadd.xlane.f32.xlu0 %v2611
        %v2645 = vpop.xlane.xlu0 %2644
        %2646 = vadd.xlane.f32.xlu0 %v2612
        %v2647 = vpop.xlane.xlu0 %2646
        %2648 = vadd.xlane.f32.xlu0 %v2613
        %v2649 = vpop.xlane.xlu0 %2648
        %2650 = vadd.xlane.f32.xlu0 %v2614
        %v2651 = vpop.xlane.xlu0 %2650
        %2652 = vadd.xlane.f32.xlu0 %v2615
        %v2653 = vpop.xlane.xlu0 %2652
        %2654 = vadd.xlane.f32.xlu0 %v2616
        %v2655 = vpop.xlane.xlu0 %2654
        %2656 = vadd.xlane.f32.xlu0 %v2617
        %v2657 = vpop.xlane.xlu0 %2656
        %2658 = vadd.xlane.f32.xlu0 %v2618
        %v2659 = vpop.xlane.xlu0 %2658
        %2660 = vadd.xlane.f32.xlu0 %v2619
        %v2661 = vpop.xlane.xlu0 %2660
        %2662 = vadd.xlane.f32.xlu0 %v2620
        %v2663 = vpop.xlane.xlu0 %2662
        %2664 = vadd.xlane.f32.xlu0 %v2621
        %v2665 = vpop.xlane.xlu0 %2664
        %2666 = vadd.xlane.f32.xlu0 %v2622
        %v2667 = vpop.xlane.xlu0 %2666
        %2668 = vadd.xlane.f32.xlu0 %v2623
        %v2669 = vpop.xlane.xlu0 %2668
        %2670 = vadd.xlane.f32.xlu0 %v2624
        %v2671 = vpop.xlane.xlu0 %2670
        %2672 = vadd.xlane.f32.xlu0 %v2625
        %v2673 = vpop.xlane.xlu0 %2672
        %2674 = vadd.xlane.f32.xlu0 %v2626
        %v2675 = vpop.xlane.xlu0 %2674
        %2676 = vadd.xlane.f32.xlu0 %v2627
        %v2677 = vpop.xlane.xlu0 %2676
        %2678 = vadd.xlane.f32.xlu0 %v2628
        %v2679 = vpop.xlane.xlu0 %2678
        %2680 = vadd.xlane.f32.xlu0 %v2629
        %v2681 = vpop.xlane.xlu0 %2680
        %2682 = vadd.xlane.f32.xlu0 %v2630
        %v2683 = vpop.xlane.xlu0 %2682
        %2684 = vadd.xlane.f32.xlu0 %v2631
        %v2685 = vpop.xlane.xlu0 %2684
        %2686 = vadd.xlane.f32.xlu0 %v2632
        %v2687 = vpop.xlane.xlu0 %2686
        %2688 = vadd.xlane.f32.xlu0 %v2633
        %v2689 = vpop.xlane.xlu0 %2688
        %2690 = vadd.xlane.f32.xlu0 %v2634
        %v2691 = vpop.xlane.xlu0 %2690
        %2692 = vadd.xlane.f32.xlu0 %v2635
        %v2693 = vpop.xlane.xlu0 %2692
        %2694 = vadd.xlane.f32.xlu0 %v2636
        %v2695 = vpop.xlane.xlu0 %2694
        %2696 = vadd.xlane.f32.xlu0 %v2637
        %v2697 = vpop.xlane.xlu0 %2696
        %2698 = vadd.xlane.f32.xlu0 %v2638
        %v2699 = vpop.xlane.xlu0 %2698
        %2700 = vadd.xlane.f32.xlu0 %v2639
        %v2701 = vpop.xlane.xlu0 %2700
        %2702 = vadd.xlane.f32.xlu0 %v2640
        %v2703 = vpop.xlane.xlu0 %2702
        %2704 = vadd.xlane.f32.xlu0 %v2641
        %v2705 = vpop.xlane.xlu0 %2704
        %s2706 = scalar_lea.vmem %s318, 768 [#allocation5]
        %v2707 = vld [vmem:[%s2706] sm:$0xff]
        %v2708 = vld [vmem:[%s2706 + $0x8] sm:$0xff]
        %v2709 = vld [vmem:[%s2706 + $0x10] sm:$0xff]
        %v2710 = vld [vmem:[%s2706 + $0x18] sm:$0xff]
        %v2711 = vld [vmem:[%s2706 + $0x20] sm:$0xff]
        %v2712 = vld [vmem:[%s2706 + $0x28] sm:$0xff]
        %v2713 = vld [vmem:[%s2706 + $0x30] sm:$0xff]
        %v2714 = vld [vmem:[%s2706 + $0x38] sm:$0xff]
        %v2715 = vld [vmem:[%s2706 + $0x40] sm:$0xff]
        %v2716 = vld [vmem:[%s2706 + $0x48] sm:$0xff]
        %v2717 = vld [vmem:[%s2706 + $0x50] sm:$0xff]
        %v2718 = vld [vmem:[%s2706 + $0x58] sm:$0xff]
        %v2719 = vld [vmem:[%s2706 + $0x60] sm:$0xff]
        %v2720 = vld [vmem:[%s2706 + $0x68] sm:$0xff]
        %v2721 = vld [vmem:[%s2706 + $0x70] sm:$0xff]
        %v2722 = vld [vmem:[%s2706 + $0x78] sm:$0xff]
        %v2723 = vld [vmem:[%s2706 + $0x80] sm:$0xff]
        %v2724 = vld [vmem:[%s2706 + $0x88] sm:$0xff]
        %v2725 = vld [vmem:[%s2706 + $0x90] sm:$0xff]
        %v2726 = vld [vmem:[%s2706 + $0x98] sm:$0xff]
        %v2727 = vld [vmem:[%s2706 + $0xa0] sm:$0xff]
        %v2728 = vld [vmem:[%s2706 + $0xa8] sm:$0xff]
        %v2729 = vld [vmem:[%s2706 + $0xb0] sm:$0xff]
        %v2730 = vld [vmem:[%s2706 + $0xb8] sm:$0xff]
        %v2731 = vld [vmem:[%s2706 + $0xc0] sm:$0xff]
        %v2732 = vld [vmem:[%s2706 + $0xc8] sm:$0xff]
        %v2733 = vld [vmem:[%s2706 + $0xd0] sm:$0xff]
        %v2734 = vld [vmem:[%s2706 + $0xd8] sm:$0xff]
        %v2735 = vld [vmem:[%s2706 + $0xe0] sm:$0xff]
        %v2736 = vld [vmem:[%s2706 + $0xe8] sm:$0xff]
        %v2737 = vld [vmem:[%s2706 + $0xf0] sm:$0xff]
        %v2738 = vld [vmem:[%s2706 + $0xf8] sm:$0xff]
        %v2739 = vmul.f32 %v2192, %v2707
        %v2740 = vmul.f32 %v2193, %v2708
        %v2741 = vmul.f32 %v2194, %v2709
        %v2742 = vmul.f32 %v2195, %v2710
        %v2743 = vmul.f32 %v2196, %v2711
        %v2744 = vmul.f32 %v2197, %v2712
        %v2745 = vmul.f32 %v2198, %v2713
        %v2746 = vmul.f32 %v2199, %v2714
        %v2747 = vmul.f32 %v2200, %v2715
        %v2748 = vmul.f32 %v2201, %v2716
        %v2749 = vmul.f32 %v2202, %v2717
        %v2750 = vmul.f32 %v2203, %v2718
        %v2751 = vmul.f32 %v2204, %v2719
        %v2752 = vmul.f32 %v2205, %v2720
        %v2753 = vmul.f32 %v2206, %v2721
        %v2754 = vmul.f32 %v2207, %v2722
        %v2755 = vmul.f32 %v2208, %v2723
        %v2756 = vmul.f32 %v2209, %v2724
        %v2757 = vmul.f32 %v2210, %v2725
        %v2758 = vmul.f32 %v2211, %v2726
        %v2759 = vmul.f32 %v2212, %v2727
        %v2760 = vmul.f32 %v2213, %v2728
        %v2761 = vmul.f32 %v2214, %v2729
        %v2762 = vmul.f32 %v2215, %v2730
        %v2763 = vmul.f32 %v2216, %v2731
        %v2764 = vmul.f32 %v2217, %v2732
        %v2765 = vmul.f32 %v2218, %v2733
        %v2766 = vmul.f32 %v2219, %v2734
        %v2767 = vmul.f32 %v2220, %v2735
        %v2768 = vmul.f32 %v2221, %v2736
        %v2769 = vmul.f32 %v2222, %v2737
        %v2770 = vmul.f32 %v2223, %v2738
        %2771 = vadd.xlane.f32.xlu0 %v2739
        %v2772 = vpop.xlane.xlu0 %2771
        %2773 = vadd.xlane.f32.xlu0 %v2740
        %v2774 = vpop.xlane.xlu0 %2773
        %2775 = vadd.xlane.f32.xlu0 %v2741
        %v2776 = vpop.xlane.xlu0 %2775
        %2777 = vadd.xlane.f32.xlu0 %v2742
        %v2778 = vpop.xlane.xlu0 %2777
        %2779 = vadd.xlane.f32.xlu0 %v2743
        %v2780 = vpop.xlane.xlu0 %2779
        %2781 = vadd.xlane.f32.xlu0 %v2744
        %v2782 = vpop.xlane.xlu0 %2781
        %2783 = vadd.xlane.f32.xlu0 %v2745
        %v2784 = vpop.xlane.xlu0 %2783
        %2785 = vadd.xlane.f32.xlu0 %v2746
        %v2786 = vpop.xlane.xlu0 %2785
        %2787 = vadd.xlane.f32.xlu0 %v2747
        %v2788 = vpop.xlane.xlu0 %2787
        %2789 = vadd.xlane.f32.xlu0 %v2748
        %v2790 = vpop.xlane.xlu0 %2789
        %2791 = vadd.xlane.f32.xlu0 %v2749
        %v2792 = vpop.xlane.xlu0 %2791
        %2793 = vadd.xlane.f32.xlu0 %v2750
        %v2794 = vpop.xlane.xlu0 %2793
        %2795 = vadd.xlane.f32.xlu0 %v2751
        %v2796 = vpop.xlane.xlu0 %2795
        %2797 = vadd.xlane.f32.xlu0 %v2752
        %v2798 = vpop.xlane.xlu0 %2797
        %2799 = vadd.xlane.f32.xlu0 %v2753
        %v2800 = vpop.xlane.xlu0 %2799
        %2801 = vadd.xlane.f32.xlu0 %v2754
        %v2802 = vpop.xlane.xlu0 %2801
        %2803 = vadd.xlane.f32.xlu0 %v2755
        %v2804 = vpop.xlane.xlu0 %2803
        %2805 = vadd.xlane.f32.xlu0 %v2756
        %v2806 = vpop.xlane.xlu0 %2805
        %2807 = vadd.xlane.f32.xlu0 %v2757
        %v2808 = vpop.xlane.xlu0 %2807
        %2809 = vadd.xlane.f32.xlu0 %v2758
        %v2810 = vpop.xlane.xlu0 %2809
        %2811 = vadd.xlane.f32.xlu0 %v2759
        %v2812 = vpop.xlane.xlu0 %2811
        %2813 = vadd.xlane.f32.xlu0 %v2760
        %v2814 = vpop.xlane.xlu0 %2813
        %2815 = vadd.xlane.f32.xlu0 %v2761
        %v2816 = vpop.xlane.xlu0 %2815
        %2817 = vadd.xlane.f32.xlu0 %v2762
        %v2818 = vpop.xlane.xlu0 %2817
        %2819 = vadd.xlane.f32.xlu0 %v2763
        %v2820 = vpop.xlane.xlu0 %2819
        %2821 = vadd.xlane.f32.xlu0 %v2764
        %v2822 = vpop.xlane.xlu0 %2821
        %2823 = vadd.xlane.f32.xlu0 %v2765
        %v2824 = vpop.xlane.xlu0 %2823
        %2825 = vadd.xlane.f32.xlu0 %v2766
        %v2826 = vpop.xlane.xlu0 %2825
        %2827 = vadd.xlane.f32.xlu0 %v2767
        %v2828 = vpop.xlane.xlu0 %2827
        %2829 = vadd.xlane.f32.xlu0 %v2768
        %v2830 = vpop.xlane.xlu0 %2829
        %2831 = vadd.xlane.f32.xlu0 %v2769
        %v2832 = vpop.xlane.xlu0 %2831
        %2833 = vadd.xlane.f32.xlu0 %v2770
        %v2834 = vpop.xlane.xlu0 %2833
        %vm2835 = vcmask 7168
        %v2836 = vsel %vm2835, %v2385, %v2514
        %v2837 = vsel %vm2835, %v2387, %v2516
        %v2838 = vsel %vm2835, %v2389, %v2518
        %v2839 = vsel %vm2835, %v2391, %v2520
        %v2840 = vsel %vm2835, %v2393, %v2522
        %v2841 = vsel %vm2835, %v2395, %v2524
        %v2842 = vsel %vm2835, %v2397, %v2526
        %v2843 = vsel %vm2835, %v2399, %v2528
        %v2844 = vsel %vm2835, %v2401, %v2530
        %v2845 = vsel %vm2835, %v2403, %v2532
        %v2846 = vsel %vm2835, %v2405, %v2534
        %v2847 = vsel %vm2835, %v2407, %v2536
        %v2848 = vsel %vm2835, %v2409, %v2538
        %v2849 = vsel %vm2835, %v2411, %v2540
        %v2850 = vsel %vm2835, %v2413, %v2542
        %v2851 = vsel %vm2835, %v2415, %v2544
        %v2852 = vsel %vm2835, %v2417, %v2546
        %v2853 = vsel %vm2835, %v2419, %v2548
        %v2854 = vsel %vm2835, %v2421, %v2550
        %v2855 = vsel %vm2835, %v2423, %v2552
        %v2856 = vsel %vm2835, %v2425, %v2554
        %v2857 = vsel %vm2835, %v2427, %v2556
        %v2858 = vsel %vm2835, %v2429, %v2558
        %v2859 = vsel %vm2835, %v2431, %v2560
        %v2860 = vsel %vm2835, %v2433, %v2562
        %v2861 = vsel %vm2835, %v2435, %v2564
        %v2862 = vsel %vm2835, %v2437, %v2566
        %v2863 = vsel %vm2835, %v2439, %v2568
        %v2864 = vsel %vm2835, %v2441, %v2570
        %v2865 = vsel %vm2835, %v2443, %v2572
        %v2866 = vsel %vm2835, %v2445, %v2574
        %v2867 = vsel %vm2835, %v2447, %v2576
        %vm2868 = vcmask 15360
        %v2869 = vsel %vm2868, %v2836, %v2643
        %v2870 = vsel %vm2868, %v2837, %v2645
        %v2871 = vsel %vm2868, %v2838, %v2647
        %v2872 = vsel %vm2868, %v2839, %v2649
        %v2873 = vsel %vm2868, %v2840, %v2651
        %v2874 = vsel %vm2868, %v2841, %v2653
        %v2875 = vsel %vm2868, %v2842, %v2655
        %v2876 = vsel %vm2868, %v2843, %v2657
        %v2877 = vsel %vm2868, %v2844, %v2659
        %v2878 = vsel %vm2868, %v2845, %v2661
        %v2879 = vsel %vm2868, %v2846, %v2663
        %v2880 = vsel %vm2868, %v2847, %v2665
        %v2881 = vsel %vm2868, %v2848, %v2667
        %v2882 = vsel %vm2868, %v2849, %v2669
        %v2883 = vsel %vm2868, %v2850, %v2671
        %v2884 = vsel %vm2868, %v2851, %v2673
        %v2885 = vsel %vm2868, %v2852, %v2675
        %v2886 = vsel %vm2868, %v2853, %v2677
        %v2887 = vsel %vm2868, %v2854, %v2679
        %v2888 = vsel %vm2868, %v2855, %v2681
        %v2889 = vsel %vm2868, %v2856, %v2683
        %v2890 = vsel %vm2868, %v2857, %v2685
        %v2891 = vsel %vm2868, %v2858, %v2687
        %v2892 = vsel %vm2868, %v2859, %v2689
        %v2893 = vsel %vm2868, %v2860, %v2691
        %v2894 = vsel %vm2868, %v2861, %v2693
        %v2895 = vsel %vm2868, %v2862, %v2695
        %v2896 = vsel %vm2868, %v2863, %v2697
        %v2897 = vsel %vm2868, %v2864, %v2699
        %v2898 = vsel %vm2868, %v2865, %v2701
        %v2899 = vsel %vm2868, %v2866, %v2703
        %v2900 = vsel %vm2868, %v2867, %v2705
        %vm2901 = vcmask 23552
        %v2902 = vsel %vm2901, %v2869, %v2772
        %v2903 = vsel %vm2901, %v2870, %v2774
        %v2904 = vsel %vm2901, %v2871, %v2776
        %v2905 = vsel %vm2901, %v2872, %v2778
        %v2906 = vsel %vm2901, %v2873, %v2780
        %v2907 = vsel %vm2901, %v2874, %v2782
        %v2908 = vsel %vm2901, %v2875, %v2784
        %v2909 = vsel %vm2901, %v2876, %v2786
        %v2910 = vsel %vm2901, %v2877, %v2788
        %v2911 = vsel %vm2901, %v2878, %v2790
        %v2912 = vsel %vm2901, %v2879, %v2792
        %v2913 = vsel %vm2901, %v2880, %v2794
        %v2914 = vsel %vm2901, %v2881, %v2796
        %v2915 = vsel %vm2901, %v2882, %v2798
        %v2916 = vsel %vm2901, %v2883, %v2800
        %v2917 = vsel %vm2901, %v2884, %v2802
        %v2918 = vsel %vm2901, %v2885, %v2804
        %v2919 = vsel %vm2901, %v2886, %v2806
        %v2920 = vsel %vm2901, %v2887, %v2808
        %v2921 = vsel %vm2901, %v2888, %v2810
        %v2922 = vsel %vm2901, %v2889, %v2812
        %v2923 = vsel %vm2901, %v2890, %v2814
        %v2924 = vsel %vm2901, %v2891, %v2816
        %v2925 = vsel %vm2901, %v2892, %v2818
        %v2926 = vsel %vm2901, %v2893, %v2820
        %v2927 = vsel %vm2901, %v2894, %v2822
        %v2928 = vsel %vm2901, %v2895, %v2824
        %v2929 = vsel %vm2901, %v2896, %v2826
        %v2930 = vsel %vm2901, %v2897, %v2828
        %v2931 = vsel %vm2901, %v2898, %v2830
        %v2932 = vsel %vm2901, %v2899, %v2832
        %v2933 = vsel %vm2901, %v2900, %v2834
        %v2934 = vsub.f32 1.0, %v2061
        %v2935 = vsub.f32 1.0, %v2062
        %v2936 = vsub.f32 1.0, %v2063
        %v2937 = vsub.f32 1.0, %v2064
        %v2938 = vsub.f32 1.0, %v2065
        %v2939 = vsub.f32 1.0, %v2066
        %v2940 = vsub.f32 1.0, %v2067
        %v2941 = vsub.f32 1.0, %v2068
        %v2942 = vsub.f32 1.0, %v2069
        %v2943 = vsub.f32 1.0, %v2070
        %v2944 = vsub.f32 1.0, %v2071
        %v2945 = vsub.f32 1.0, %v2072
        %v2946 = vsub.f32 1.0, %v2073
        %v2947 = vsub.f32 1.0, %v2074
        %v2948 = vsub.f32 1.0, %v2075
        %v2949 = vsub.f32 1.0, %v2076
        %v2950 = vsub.f32 1.0, %v2077
        %v2951 = vsub.f32 1.0, %v2078
        %v2952 = vsub.f32 1.0, %v2079
        %v2953 = vsub.f32 1.0, %v2080
        %v2954 = vsub.f32 1.0, %v2081
        %v2955 = vsub.f32 1.0, %v2082
        %v2956 = vsub.f32 1.0, %v2083
        %v2957 = vsub.f32 1.0, %v2084
        %v2958 = vsub.f32 1.0, %v2085
        %v2959 = vsub.f32 1.0, %v2086
        %v2960 = vsub.f32 1.0, %v2087
        %v2961 = vsub.f32 1.0, %v2088
        %v2962 = vsub.f32 1.0, %v2089
        %v2963 = vsub.f32 1.0, %v2090
        %v2964 = vsub.f32 1.0, %v2091
        %v2965 = vsub.f32 1.0, %v2092
        %v2966 = vmul.f32 %v2934, 0.0
        %v2967 = vmul.f32 %v2935, 0.0
        %v2968 = vmul.f32 %v2936, 0.0
        %v2969 = vmul.f32 %v2937, 0.0
        %v2970 = vmul.f32 %v2938, 0.0
        %v2971 = vmul.f32 %v2939, 0.0
        %v2972 = vmul.f32 %v2940, 0.0
        %v2973 = vmul.f32 %v2941, 0.0
        %v2974 = vmul.f32 %v2942, 0.0
        %v2975 = vmul.f32 %v2943, 0.0
        %v2976 = vmul.f32 %v2944, 0.0
        %v2977 = vmul.f32 %v2945, 0.0
        %v2978 = vmul.f32 %v2946, 0.0
        %v2979 = vmul.f32 %v2947, 0.0
        %v2980 = vmul.f32 %v2948, 0.0
        %v2981 = vmul.f32 %v2949, 0.0
        %v2982 = vmul.f32 %v2950, 0.0
        %v2983 = vmul.f32 %v2951, 0.0
        %v2984 = vmul.f32 %v2952, 0.0
        %v2985 = vmul.f32 %v2953, 0.0
        %v2986 = vmul.f32 %v2954, 0.0
        %v2987 = vmul.f32 %v2955, 0.0
        %v2988 = vmul.f32 %v2956, 0.0
        %v2989 = vmul.f32 %v2957, 0.0
        %v2990 = vmul.f32 %v2958, 0.0
        %v2991 = vmul.f32 %v2959, 0.0
        %v2992 = vmul.f32 %v2960, 0.0
        %v2993 = vmul.f32 %v2961, 0.0
        %v2994 = vmul.f32 %v2962, 0.0
        %v2995 = vmul.f32 %v2963, 0.0
        %v2996 = vmul.f32 %v2964, 0.0
        %v2997 = vmul.f32 %v2965, 0.0
        %2999 = vset.pattern.permute.xlu0 127
        %3000 = vperm.xlu0 %2999, %v2966
        %v3001 = vpop.permute.xlu0 %3000
        %3004 = vset.pattern.permute.xlu0 127
        %3005 = vperm.xlu0 %3004, %v2967
        %v3006 = vpop.permute.xlu0 %3005
        %3009 = vset.pattern.permute.xlu0 127
        %3010 = vperm.xlu0 %3009, %v2968
        %v3011 = vpop.permute.xlu0 %3010
        %3014 = vset.pattern.permute.xlu0 127
        %3015 = vperm.xlu0 %3014, %v2969
        %v3016 = vpop.permute.xlu0 %3015
        %3019 = vset.pattern.permute.xlu0 127
        %3020 = vperm.xlu0 %3019, %v2970
        %v3021 = vpop.permute.xlu0 %3020
        %3024 = vset.pattern.permute.xlu0 127
        %3025 = vperm.xlu0 %3024, %v2971
        %v3026 = vpop.permute.xlu0 %3025
        %3029 = vset.pattern.permute.xlu0 127
        %3030 = vperm.xlu0 %3029, %v2972
        %v3031 = vpop.permute.xlu0 %3030
        %3034 = vset.pattern.permute.xlu0 127
        %3035 = vperm.xlu0 %3034, %v2973
        %v3036 = vpop.permute.xlu0 %3035
        %3039 = vset.pattern.permute.xlu0 127
        %3040 = vperm.xlu0 %3039, %v2974
        %v3041 = vpop.permute.xlu0 %3040
        %3044 = vset.pattern.permute.xlu0 127
        %3045 = vperm.xlu0 %3044, %v2975
        %v3046 = vpop.permute.xlu0 %3045
        %3049 = vset.pattern.permute.xlu0 127
        %3050 = vperm.xlu0 %3049, %v2976
        %v3051 = vpop.permute.xlu0 %3050
        %3054 = vset.pattern.permute.xlu0 127
        %3055 = vperm.xlu0 %3054, %v2977
        %v3056 = vpop.permute.xlu0 %3055
        %3059 = vset.pattern.permute.xlu0 127
        %3060 = vperm.xlu0 %3059, %v2978
        %v3061 = vpop.permute.xlu0 %3060
        %3064 = vset.pattern.permute.xlu0 127
        %3065 = vperm.xlu0 %3064, %v2979
        %v3066 = vpop.permute.xlu0 %3065
        %3069 = vset.pattern.permute.xlu0 127
        %3070 = vperm.xlu0 %3069, %v2980
        %v3071 = vpop.permute.xlu0 %3070
        %3074 = vset.pattern.permute.xlu0 127
        %3075 = vperm.xlu0 %3074, %v2981
        %v3076 = vpop.permute.xlu0 %3075
        %3079 = vset.pattern.permute.xlu0 127
        %3080 = vperm.xlu0 %3079, %v2982
        %v3081 = vpop.permute.xlu0 %3080
        %3084 = vset.pattern.permute.xlu0 127
        %3085 = vperm.xlu0 %3084, %v2983
        %v3086 = vpop.permute.xlu0 %3085
        %3089 = vset.pattern.permute.xlu0 127
        %3090 = vperm.xlu0 %3089, %v2984
        %v3091 = vpop.permute.xlu0 %3090
        %3094 = vset.pattern.permute.xlu0 127
        %3095 = vperm.xlu0 %3094, %v2985
        %v3096 = vpop.permute.xlu0 %3095
        %3099 = vset.pattern.permute.xlu0 127
        %3100 = vperm.xlu0 %3099, %v2986
        %v3101 = vpop.permute.xlu0 %3100
        %3104 = vset.pattern.permute.xlu0 127
        %3105 = vperm.xlu0 %3104, %v2987
        %v3106 = vpop.permute.xlu0 %3105
        %3109 = vset.pattern.permute.xlu0 127
        %3110 = vperm.xlu0 %3109, %v2988
        %v3111 = vpop.permute.xlu0 %3110
        %3114 = vset.pattern.permute.xlu0 127
        %3115 = vperm.xlu0 %3114, %v2989
        %v3116 = vpop.permute.xlu0 %3115
        %3119 = vset.pattern.permute.xlu0 127
        %3120 = vperm.xlu0 %3119, %v2990
        %v3121 = vpop.permute.xlu0 %3120
        %3124 = vset.pattern.permute.xlu0 127
        %3125 = vperm.xlu0 %3124, %v2991
        %v3126 = vpop.permute.xlu0 %3125
        %3129 = vset.pattern.permute.xlu0 127
        %3130 = vperm.xlu0 %3129, %v2992
        %v3131 = vpop.permute.xlu0 %3130
        %3134 = vset.pattern.permute.xlu0 127
        %3135 = vperm.xlu0 %3134, %v2993
        %v3136 = vpop.permute.xlu0 %3135
        %3139 = vset.pattern.permute.xlu0 127
        %3140 = vperm.xlu0 %3139, %v2994
        %v3141 = vpop.permute.xlu0 %3140
        %3144 = vset.pattern.permute.xlu0 127
        %3145 = vperm.xlu0 %3144, %v2995
        %v3146 = vpop.permute.xlu0 %3145
        %3149 = vset.pattern.permute.xlu0 127
        %3150 = vperm.xlu0 %3149, %v2996
        %v3151 = vpop.permute.xlu0 %3150
        %3154 = vset.pattern.permute.xlu0 127
        %3155 = vperm.xlu0 %3154, %v2997
        %v3156 = vpop.permute.xlu0 %3155
        %v3158 = vadd.f32 %v2902, %v3001
        %v3159 = vadd.f32 %v2903, %v3006
        %v3160 = vadd.f32 %v2904, %v3011
        %v3161 = vadd.f32 %v2905, %v3016
        %v3162 = vadd.f32 %v2906, %v3021
        %v3163 = vadd.f32 %v2907, %v3026
        %v3164 = vadd.f32 %v2908, %v3031
        %v3165 = vadd.f32 %v2909, %v3036
        %v3166 = vadd.f32 %v2910, %v3041
        %v3167 = vadd.f32 %v2911, %v3046
        %v3168 = vadd.f32 %v2912, %v3051
        %v3169 = vadd.f32 %v2913, %v3056
        %v3170 = vadd.f32 %v2914, %v3061
        %v3171 = vadd.f32 %v2915, %v3066
        %v3172 = vadd.f32 %v2916, %v3071
        %v3173 = vadd.f32 %v2917, %v3076
        %v3174 = vadd.f32 %v2918, %v3081
        %v3175 = vadd.f32 %v2919, %v3086
        %v3176 = vadd.f32 %v2920, %v3091
        %v3177 = vadd.f32 %v2921, %v3096
        %v3178 = vadd.f32 %v2922, %v3101
        %v3179 = vadd.f32 %v2923, %v3106
        %v3180 = vadd.f32 %v2924, %v3111
        %v3181 = vadd.f32 %v2925, %v3116
        %v3182 = vadd.f32 %v2926, %v3121
        %v3183 = vadd.f32 %v2927, %v3126
        %v3184 = vadd.f32 %v2928, %v3131
        %v3185 = vadd.f32 %v2929, %v3136
        %v3186 = vadd.f32 %v2930, %v3141
        %v3187 = vadd.f32 %v2931, %v3146
        %v3188 = vadd.f32 %v2932, %v3151
        %v3189 = vadd.f32 %v2933, %v3156
        %3190 = vst [vmem:[%s375] sm:$0xff] %v2192
        %3191 = vst [vmem:[%s375 + $0x8] sm:$0xff] %v2193
        %3192 = vst [vmem:[%s375 + $0x10] sm:$0xff] %v2194
        %3193 = vst [vmem:[%s375 + $0x18] sm:$0xff] %v2195
        %3194 = vst [vmem:[%s375 + $0x20] sm:$0xff] %v2196
        %3195 = vst [vmem:[%s375 + $0x28] sm:$0xff] %v2197
        %3196 = vst [vmem:[%s375 + $0x30] sm:$0xff] %v2198
        %3197 = vst [vmem:[%s375 + $0x38] sm:$0xff] %v2199
        %3198 = vst [vmem:[%s375 + $0x40] sm:$0xff] %v2200
        %3199 = vst [vmem:[%s375 + $0x48] sm:$0xff] %v2201
        %3200 = vst [vmem:[%s375 + $0x50] sm:$0xff] %v2202
        %3201 = vst [vmem:[%s375 + $0x58] sm:$0xff] %v2203
        %3202 = vst [vmem:[%s375 + $0x60] sm:$0xff] %v2204
        %3203 = vst [vmem:[%s375 + $0x68] sm:$0xff] %v2205
        %3204 = vst [vmem:[%s375 + $0x70] sm:$0xff] %v2206
        %3205 = vst [vmem:[%s375 + $0x78] sm:$0xff] %v2207
        %3206 = vst [vmem:[%s375 + $0x80] sm:$0xff] %v2208
        %3207 = vst [vmem:[%s375 + $0x88] sm:$0xff] %v2209
        %3208 = vst [vmem:[%s375 + $0x90] sm:$0xff] %v2210
        %3209 = vst [vmem:[%s375 + $0x98] sm:$0xff] %v2211
        %3210 = vst [vmem:[%s375 + $0xa0] sm:$0xff] %v2212
        %3211 = vst [vmem:[%s375 + $0xa8] sm:$0xff] %v2213
        %3212 = vst [vmem:[%s375 + $0xb0] sm:$0xff] %v2214
        %3213 = vst [vmem:[%s375 + $0xb8] sm:$0xff] %v2215
        %3214 = vst [vmem:[%s375 + $0xc0] sm:$0xff] %v2216
        %3215 = vst [vmem:[%s375 + $0xc8] sm:$0xff] %v2217
        %3216 = vst [vmem:[%s375 + $0xd0] sm:$0xff] %v2218
        %3217 = vst [vmem:[%s375 + $0xd8] sm:$0xff] %v2219
        %3218 = vst [vmem:[%s375 + $0xe0] sm:$0xff] %v2220
        %3219 = vst [vmem:[%s375 + $0xe8] sm:$0xff] %v2221
        %3220 = vst [vmem:[%s375 + $0xf0] sm:$0xff] %v2222
        %3221 = vst [vmem:[%s375 + $0xf8] sm:$0xff] %v2223
        %3254 = vrot.lane.b32.xlu0 %v2061, 6
        %v3255 = vpop.permute.xlu0 %3254
        %3256 = vrot.lane.b32.xlu0 %v2062, 6
        %v3257 = vpop.permute.xlu0 %3256
        %3258 = vrot.lane.b32.xlu0 %v2063, 6
        %v3259 = vpop.permute.xlu0 %3258
        %3260 = vrot.lane.b32.xlu0 %v2064, 6
        %v3261 = vpop.permute.xlu0 %3260
        %3262 = vrot.lane.b32.xlu0 %v2065, 6
        %v3263 = vpop.permute.xlu0 %3262
        %3264 = vrot.lane.b32.xlu0 %v2066, 6
        %v3265 = vpop.permute.xlu0 %3264
        %3266 = vrot.lane.b32.xlu0 %v2067, 6
        %v3267 = vpop.permute.xlu0 %3266
        %3268 = vrot.lane.b32.xlu0 %v2068, 6
        %v3269 = vpop.permute.xlu0 %3268
        %3270 = vrot.lane.b32.xlu0 %v2069, 6
        %v3271 = vpop.permute.xlu0 %3270
        %3272 = vrot.lane.b32.xlu0 %v2070, 6
        %v3273 = vpop.permute.xlu0 %3272
        %3274 = vrot.lane.b32.xlu0 %v2071, 6
        %v3275 = vpop.permute.xlu0 %3274
        %3276 = vrot.lane.b32.xlu0 %v2072, 6
        %v3277 = vpop.permute.xlu0 %3276
        %3278 = vrot.lane.b32.xlu0 %v2073, 6
        %v3279 = vpop.permute.xlu0 %3278
        %3280 = vrot.lane.b32.xlu0 %v2074, 6
        %v3281 = vpop.permute.xlu0 %3280
        %3282 = vrot.lane.b32.xlu0 %v2075, 6
        %v3283 = vpop.permute.xlu0 %3282
        %3284 = vrot.lane.b32.xlu0 %v2076, 6
        %v3285 = vpop.permute.xlu0 %3284
        %3286 = vrot.lane.b32.xlu0 %v2077, 6
        %v3287 = vpop.permute.xlu0 %3286
        %3288 = vrot.lane.b32.xlu0 %v2078, 6
        %v3289 = vpop.permute.xlu0 %3288
        %3290 = vrot.lane.b32.xlu0 %v2079, 6
        %v3291 = vpop.permute.xlu0 %3290
        %3292 = vrot.lane.b32.xlu0 %v2080, 6
        %v3293 = vpop.permute.xlu0 %3292
        %3294 = vrot.lane.b32.xlu0 %v2081, 6
        %v3295 = vpop.permute.xlu0 %3294
        %3296 = vrot.lane.b32.xlu0 %v2082, 6
        %v3297 = vpop.permute.xlu0 %3296
        %3298 = vrot.lane.b32.xlu0 %v2083, 6
        %v3299 = vpop.permute.xlu0 %3298
        %3300 = vrot.lane.b32.xlu0 %v2084, 6
        %v3301 = vpop.permute.xlu0 %3300
        %3302 = vrot.lane.b32.xlu0 %v2085, 6
        %v3303 = vpop.permute.xlu0 %3302
        %3304 = vrot.lane.b32.xlu0 %v2086, 6
        %v3305 = vpop.permute.xlu0 %3304
        %3306 = vrot.lane.b32.xlu0 %v2087, 6
        %v3307 = vpop.permute.xlu0 %3306
        %3308 = vrot.lane.b32.xlu0 %v2088, 6
        %v3309 = vpop.permute.xlu0 %3308
        %3310 = vrot.lane.b32.xlu0 %v2089, 6
        %v3311 = vpop.permute.xlu0 %3310
        %3312 = vrot.lane.b32.xlu0 %v2090, 6
        %v3313 = vpop.permute.xlu0 %3312
        %3314 = vrot.lane.b32.xlu0 %v2091, 6
        %v3315 = vpop.permute.xlu0 %3314
        %3316 = vrot.lane.b32.xlu0 %v2092, 6
        %v3317 = vpop.permute.xlu0 %3316
        %vm3350 = vcmask 31744
        %v3351 = vsel %vm3350, %v3158, %v2257
        %v3352 = vsel %vm3350, %v3159, %v2259
        %v3353 = vsel %vm3350, %v3160, %v2261
        %v3354 = vsel %vm3350, %v3161, %v2263
        %v3355 = vsel %vm3350, %v3162, %v2265
        %v3356 = vsel %vm3350, %v3163, %v2267
        %v3357 = vsel %vm3350, %v3164, %v2269
        %v3358 = vsel %vm3350, %v3165, %v2271
        %v3359 = vsel %vm3350, %v3166, %v2273
        %v3360 = vsel %vm3350, %v3167, %v2275
        %v3361 = vsel %vm3350, %v3168, %v2277
        %v3362 = vsel %vm3350, %v3169, %v2279
        %v3363 = vsel %vm3350, %v3170, %v2281
        %v3364 = vsel %vm3350, %v3171, %v2283
        %v3365 = vsel %vm3350, %v3172, %v2285
        %v3366 = vsel %vm3350, %v3173, %v2287
        %v3367 = vsel %vm3350, %v3174, %v2289
        %v3368 = vsel %vm3350, %v3175, %v2291
        %v3369 = vsel %vm3350, %v3176, %v2293
        %v3370 = vsel %vm3350, %v3177, %v2295
        %v3371 = vsel %vm3350, %v3178, %v2297
        %v3372 = vsel %vm3350, %v3179, %v2299
        %v3373 = vsel %vm3350, %v3180, %v2301
        %v3374 = vsel %vm3350, %v3181, %v2303
        %v3375 = vsel %vm3350, %v3182, %v2305
        %v3376 = vsel %vm3350, %v3183, %v2307
        %v3377 = vsel %vm3350, %v3184, %v2309
        %v3378 = vsel %vm3350, %v3185, %v2311
        %v3379 = vsel %vm3350, %v3186, %v2313
        %v3380 = vsel %vm3350, %v3187, %v2315
        %v3381 = vsel %vm3350, %v3188, %v2317
        %v3382 = vsel %vm3350, %v3189, %v2319
        %vm3383 = vcmask 39936
        %v3384 = vsel %vm3383, %v3351, %v3255
        %v3385 = vsel %vm3383, %v3352, %v3257
        %v3386 = vsel %vm3383, %v3353, %v3259
        %v3387 = vsel %vm3383, %v3354, %v3261
        %v3388 = vsel %vm3383, %v3355, %v3263
        %v3389 = vsel %vm3383, %v3356, %v3265
        %v3390 = vsel %vm3383, %v3357, %v3267
        %v3391 = vsel %vm3383, %v3358, %v3269
        %v3392 = vsel %vm3383, %v3359, %v3271
        %v3393 = vsel %vm3383, %v3360, %v3273
        %v3394 = vsel %vm3383, %v3361, %v3275
        %v3395 = vsel %vm3383, %v3362, %v3277
        %v3396 = vsel %vm3383, %v3363, %v3279
        %v3397 = vsel %vm3383, %v3364, %v3281
        %v3398 = vsel %vm3383, %v3365, %v3283
        %v3399 = vsel %vm3383, %v3366, %v3285
        %v3400 = vsel %vm3383, %v3367, %v3287
        %v3401 = vsel %vm3383, %v3368, %v3289
        %v3402 = vsel %vm3383, %v3369, %v3291
        %v3403 = vsel %vm3383, %v3370, %v3293
        %v3404 = vsel %vm3383, %v3371, %v3295
        %v3405 = vsel %vm3383, %v3372, %v3297
        %v3406 = vsel %vm3383, %v3373, %v3299
        %v3407 = vsel %vm3383, %v3374, %v3301
        %v3408 = vsel %vm3383, %v3375, %v3303
        %v3409 = vsel %vm3383, %v3376, %v3305
        %v3410 = vsel %vm3383, %v3377, %v3307
        %v3411 = vsel %vm3383, %v3378, %v3309
        %v3412 = vsel %vm3383, %v3379, %v3311
        %v3413 = vsel %vm3383, %v3380, %v3313
        %v3414 = vsel %vm3383, %v3381, %v3315
        %v3415 = vsel %vm3383, %v3382, %v3317
        %vm3416 = vcmask 48128
        %3417 = vst.msk [vmem:[%s383] sm:$0xff] %vm3416, %v3384
        %3418 = vst.msk [vmem:[%s383 + $0x8] sm:$0xff] %vm3416, %v3385
        %3419 = vst.msk [vmem:[%s383 + $0x10] sm:$0xff] %vm3416, %v3386
        %3420 = vst.msk [vmem:[%s383 + $0x18] sm:$0xff] %vm3416, %v3387
        %3421 = vst.msk [vmem:[%s383 + $0x20] sm:$0xff] %vm3416, %v3388
        %3422 = vst.msk [vmem:[%s383 + $0x28] sm:$0xff] %vm3416, %v3389
        %3423 = vst.msk [vmem:[%s383 + $0x30] sm:$0xff] %vm3416, %v3390
        %3424 = vst.msk [vmem:[%s383 + $0x38] sm:$0xff] %vm3416, %v3391
        %3425 = vst.msk [vmem:[%s383 + $0x40] sm:$0xff] %vm3416, %v3392
        %3426 = vst.msk [vmem:[%s383 + $0x48] sm:$0xff] %vm3416, %v3393
        %3427 = vst.msk [vmem:[%s383 + $0x50] sm:$0xff] %vm3416, %v3394
        %3428 = vst.msk [vmem:[%s383 + $0x58] sm:$0xff] %vm3416, %v3395
        %3429 = vst.msk [vmem:[%s383 + $0x60] sm:$0xff] %vm3416, %v3396
        %3430 = vst.msk [vmem:[%s383 + $0x68] sm:$0xff] %vm3416, %v3397
        %3431 = vst.msk [vmem:[%s383 + $0x70] sm:$0xff] %vm3416, %v3398
        %3432 = vst.msk [vmem:[%s383 + $0x78] sm:$0xff] %vm3416, %v3399
        %3433 = vst.msk [vmem:[%s383 + $0x80] sm:$0xff] %vm3416, %v3400
        %3434 = vst.msk [vmem:[%s383 + $0x88] sm:$0xff] %vm3416, %v3401
        %3435 = vst.msk [vmem:[%s383 + $0x90] sm:$0xff] %vm3416, %v3402
        %3436 = vst.msk [vmem:[%s383 + $0x98] sm:$0xff] %vm3416, %v3403
        %3437 = vst.msk [vmem:[%s383 + $0xa0] sm:$0xff] %vm3416, %v3404
        %3438 = vst.msk [vmem:[%s383 + $0xa8] sm:$0xff] %vm3416, %v3405
        %3439 = vst.msk [vmem:[%s383 + $0xb0] sm:$0xff] %vm3416, %v3406
        %3440 = vst.msk [vmem:[%s383 + $0xb8] sm:$0xff] %vm3416, %v3407
        %3441 = vst.msk [vmem:[%s383 + $0xc0] sm:$0xff] %vm3416, %v3408
        %3442 = vst.msk [vmem:[%s383 + $0xc8] sm:$0xff] %vm3416, %v3409
        %3443 = vst.msk [vmem:[%s383 + $0xd0] sm:$0xff] %vm3416, %v3410
        %3444 = vst.msk [vmem:[%s383 + $0xd8] sm:$0xff] %vm3416, %v3411
        %3445 = vst.msk [vmem:[%s383 + $0xe0] sm:$0xff] %vm3416, %v3412
        %3446 = vst.msk [vmem:[%s383 + $0xe8] sm:$0xff] %vm3416, %v3413
        %3447 = vst.msk [vmem:[%s383 + $0xf0] sm:$0xff] %vm3416, %v3414
        %3448 = vst.msk [vmem:[%s383 + $0xf8] sm:$0xff] %vm3416, %v3415
        %s3449 = smul.u32 32, %s27
        %p3450 = scmp.lt.s32.totalorder %s3449, 63
        %s3451 = scalar_select %p3450, %s3449, 63
        %s3452 = smul.addr %s3451, 8
        %s3453 = scalar_lea.vmem %s4, %s3452
        %s3454 = sand.u32 %s160, 1
        %s3455 = scalar_lea.sflag [#allocation4], %s3454
        %s3456 = sand.u32 %s160, 1
        %s3457 = smul.addr %s3456, 256
        %s3458 = scalar_lea.vmem [#allocation10], %s3457
        // Predicated region
        $region53: #{tpu_custom_call.1} parent=35 // pred_check
          %p3459 = pneg %p144
        $region54: #{tpu_custom_call.1} parent=35 // pred_check_branch
          %3461 = sbr.rel (%p3459) target = $region56
        $region55: #{tpu_custom_call.1} parent=35 // pred_region
          %s3462 = smul.u32 32, %s27
        $region56: #{tpu_custom_call.1} parent=35 // pred_fallthru
          _
        // Predicated region
        $region57: #{tpu_custom_call.1} parent=35 // pred_check
          %p3463 = pneg %p170
        $region58: #{tpu_custom_call.1} parent=35 // pred_check_branch
          %3465 = sbr.rel (%p3463) target = $region60
        $region59: #{tpu_custom_call.1} parent=35 // pred_region
          %s3466 = smul.u32 32, %s27
          %3468 = vsyncadd %s3455, 0
          %s3469 = smul.addr %s3466, 8
          %s3470 = scalar_lea.hbm %s5, %s3469
          %s3471 = sshll.u32 %s3458, 4
          %s3472 = int_to_ptr.vmem [resolvable:$true] %s3471
          %s3473 = sshll.u32 %s3470, 4
          %s3474 = int_to_ptr.hbm [resolvable:$true] %s3473
          %3479 = dma.vmem_to_hbm [thread:$0]  %s3472, 4096, %s3474, %s3455, 128, 128, 8
        $region60: #{tpu_custom_call.1} parent=35 // pred_fallthru
          _
      $region36: #{tpu_custom_call.1} parent=5 // pred_fallthru
        _
      %p3480 = scmp.le.s32.totalorder 2, %s22
      // Predicated region
      $region61: #{tpu_custom_call.1} parent=5 // pred_check
        %p3481 = pneg %p3480
      $region62: #{tpu_custom_call.1} parent=5 // pred_check_branch
        %3483 = sbr.rel (%p3481) target = $region64
      $region63: #{tpu_custom_call.1} parent=5 // pred_region
        %s3484 = ssub.s32 %s22, 2
        // Predicated region
        $region65: #{tpu_custom_call.1} parent=63 // pred_check
          %p3485 = pneg %p150
        $region66: #{tpu_custom_call.1} parent=63 // pred_check_branch
          %3487 = sbr.rel (%p3485) target = $region68
        $region67: #{tpu_custom_call.1} parent=63 // pred_region
          %s3488 = smul.u32 32, %s28
          %p3489 = scmp.lt.s32.totalorder %s3488, 63
          %s3490 = scalar_select %p3489, %s3488, 63
          %s3491 = smul.addr %s3490, 8
          %s3492 = scalar_lea.vmem %s4, %s3491
        $region68: #{tpu_custom_call.1} parent=63 // pred_fallthru
          _
        // Predicated region
        $region69: #{tpu_custom_call.1} parent=63 // pred_check
          %p3493 = pneg %p176
        $region70: #{tpu_custom_call.1} parent=63 // pred_check_branch
          %3495 = sbr.rel (%p3493) target = $region72
        $region71: #{tpu_custom_call.1} parent=63 // pred_region
          %s3496 = sand.u32 %s161, 1
          %s3497 = scalar_lea.sflag [#allocation4], %s3496
          %s3498 = sand.u32 %s161, 1
          %s3499 = smul.addr %s3498, 256
          %s3500 = scalar_lea.vmem [#allocation10], %s3499
          %3502 = dma.done %s3497, 4096
        $region72: #{tpu_custom_call.1} parent=63 // pred_fallthru
          _
      $region64: #{tpu_custom_call.1} parent=5 // pred_fallthru
        _
    $region6: #{tpu_custom_call.1} parent=1 // loop_footer
      %s26 = sadd.s32 1, %s22
    $region7: #{tpu_custom_call.1} parent=1 // loop_footer_branch
      %21 = sbr.rel target = $region3
    $region8: #{tpu_custom_call.1} parent=1 // loop_exit
      _
    %3503 = vsyncpa [#allocation3], 1
    %s3504 = scalar_lea.sflag [#allocation3], 1
    %3505 = vsyncpa %s3504, 1
    %3506 = vsyncpa [#allocation6], 1
    %s3507 = scalar_lea.sflag [#allocation6], 1
    %3508 = vsyncpa %s3507, 1
    %3509 = vsyncpa [#allocation9], 1
    %3510 = vsyncpa [#allocation4], 1
    %s3511 = scalar_lea.sflag [#allocation4], 1
    %3512 = vsyncpa %s3511, 1

</llo_original>
